<compile_context>
chip_gen: v6e
topology: v6e:2x2x1
jax: 0.10.0
libtpu: 0.0.40
codegen_flags: <defaults>
</compile_context>

<pallas_src>
import functools

import jax
import jax.numpy as jnp
import numpy as np
from jax import lax
from jax.experimental import pallas as pl
from jax.experimental.pallas import tpu as pltpu


def _round_up(x, m):
    return -(-x // m) * m


# ----------------------------------------------------------------------------
# Fused whole-stack kernel: one sample per grid step.
# ----------------------------------------------------------------------------
def _stack_kernel(x_ref, m_ref, *rest, layer_meta, dpad, l_out, ltile):
    """Refs, in order:
       x_ref   : [1, C0p, Lh]  bf16  padded-flat input slab (zero halo)
       m_ref   : [1, L]        f32   interior mask (1 on real voxels)
       per layer i: w_i [Co_i, ntaps_i*Cinp_i] bf16, b_i [Co_i, 1] f32
       o_ref   : [1, C_out, L] f32
       slab_a, slab_b : [Cmax, Lh]  bf16 VMEM ping-pong activation slabs
       stack   : [Kmax, Ltile] bf16 VMEM stacked (fold-K) matmul operand
    """
    n_layers = len(layer_meta)
    w_refs = rest[0:2 * n_layers:2]
    b_refs = rest[1:2 * n_layers:2]
    o_ref = rest[2 * n_layers]
    slab_a = rest[2 * n_layers + 1]
    slab_b = rest[2 * n_layers + 2]
    stack = rest[2 * n_layers + 3]

    # Halo / gap lanes of the ping-pong slabs must be genuine zeros: they act as the
    # "same" zero padding of every intermediate conv layer.
    slab_a[...] = jnp.zeros_like(slab_a)
    slab_b[...] = jnp.zeros_like(slab_b)

    n_tiles = l_out // ltile
    slabs = (slab_a, slab_b)

    for li, (offs, cin_p, cout, relu) in enumerate(layer_meta):
        last = li == n_layers - 1
        k = len(offs) * cin_p
        w2 = w_refs[li][...]                       # [cout, k] bf16, resident
        bias = b_refs[li][...]                     # [cout, 1] f32
        if li == 0:
            src, src_is_x = x_ref, True
        else:
            src, src_is_x = slabs[(li - 1) % 2], False
        dst = o_ref if last else slabs[li % 2]

        def tile_body(base, _offs=offs, _cin_p=cin_p, _co=cout, _k=k, _w2=w2,
                      _b=bias, _relu=relu, _last=last, _src=src,
                      _src_is_x=src_is_x, _dst=dst):
            # Stack every tap's shifted slice along the contraction dim (fold-K).
            # Temporal taps (multiples of Sp, 128-aligned) are aligned loads;
            # spatial taps are small lane shifts.
            for ti, d in enumerate(_offs):
                start = dpad + base + d
                if _src_is_x:
                    piece = _src[0, pl.ds(0, _cin_p), pl.ds(start, ltile)]
                else:
                    piece = _src[pl.ds(0, _cin_p), pl.ds(start, ltile)]
                stack[pl.ds(ti * _cin_p, _cin_p), :] = piece
            # One MXU matmul per tile: [co, k] x [k, ltile] -> f32.
            acc = jnp.dot(_w2, stack[pl.ds(0, _k), :],
                          preferred_element_type=jnp.float32)
            # Fused epilogue on the live tile: bias + ReLU + interior mask + cast.
            y = acc + _b
            if _relu:
                y = jnp.maximum(y, 0.0)
            y = y * m_ref[:, pl.ds(base, ltile)]
            if _last:
                _dst[0, pl.ds(0, _co), pl.ds(base, ltile)] = y.astype(_dst.dtype)
            else:
                _dst[pl.ds(0, _co), pl.ds(dpad + base, ltile)] = y.astype(_dst.dtype)

        if n_tiles <= 8:                 # small L: fully unrolled, static offsets
            for t in range(n_tiles):
                tile_body(t * ltile)
        else:                            # large L: rolled in-kernel loop
            @pl.loop(0, n_tiles)
            def _(t):
                tile_body(pl.multiple_of(t * ltile, 128))


def _fused_forward_pallas(x_slab, mask, weights, biases, layer_meta, *,
                          dpad, l_out, lh, ltile, c_out):
    n, c0p, _ = x_slab.shape
    n_layers = len(layer_meta)
    cmax = max(max(m[1] for m in layer_meta),
               max((m[2] for m in layer_meta[:-1]), default=1))
    kmax = max(len(m[0]) * m[1] for m in layer_meta)

    in_specs = [
        pl.BlockSpec((1, c0p, lh), lambda i: (i, 0, 0)),   # per-sample input slab
        pl.BlockSpec((1, l_out), lambda i: (0, 0)),        # interior mask (resident)
    ]
    args = [x_slab, mask]
    for w2, b in zip(weights, biases):
        in_specs.append(pl.BlockSpec(w2.shape, lambda i: (0, 0)))   # resident
        in_specs.append(pl.BlockSpec(b.shape, lambda i: (0, 0)))    # resident
        args += [w2, b]

    flops = 2 * n * l_out * sum(m[2] * len(m[0]) * m[1] for m in layer_meta)
    bytes_accessed = (x_slab.size * 2 + mask.size * 4 + n * c_out * l_out * 4
                      + sum(w.size * 2 for w in weights)
                      + sum(b.size * 4 for b in biases))

    # VMEM budget: double-buffered in/out blocks + resident mask/weights +
    # ping-pong slabs + the stacked fold-K operand + accumulator tile.
    est = (2 * c0p * lh * 2 + 2 * c_out * l_out * 4 + l_out * 4
           + sum(w.size * 2 for w in weights) + sum(b.size * 4 for b in biases)
           + 2 * cmax * lh * 2 + kmax * ltile * 2 + cmax * ltile * 4)
    cp = dict(dimension_semantics=("parallel",))
    if est > 12 * 1024 * 1024:           # only override when defaults would be tight
        cp["vmem_limit_bytes"] = int(min(100 * 1024 * 1024, est + 16 * 1024 * 1024))

    kernel = functools.partial(_stack_kernel, layer_meta=layer_meta,
                               dpad=dpad, l_out=l_out, ltile=ltile)
    return pl.pallas_call(
        kernel,
        out_shape=jax.ShapeDtypeStruct((n, c_out, l_out), jnp.float32),
        grid=(n,),
        in_specs=in_specs,
        out_specs=pl.BlockSpec((1, c_out, l_out), lambda i: (i, 0, 0)),
        scratch_shapes=[pltpu.VMEM((cmax, lh), jnp.bfloat16),
                        pltpu.VMEM((cmax, lh), jnp.bfloat16),
                        pltpu.VMEM((kmax, ltile), jnp.bfloat16)],
        compiler_params=pltpu.CompilerParams(**cp),
        cost_estimate=pl.CostEstimate(flops=flops, transcendentals=0,
                                      bytes_accessed=bytes_accessed),
    )(*args)


# ----------------------------------------------------------------------------
# Parameter init (deterministic, synthetic — the blocks are injected in torch)
# ----------------------------------------------------------------------------
def init_params(key, in_channels, hidden_dim, kernel_size, num_layers):
    k = kernel_size
    params = {"spatial": [], "temporal": []}

    def _wb(key, shape):
        kw, kb = jax.random.split(key)
        w = 0.05 * jax.random.normal(kw, shape, dtype=jnp.float32)
        b = 0.05 * jax.random.normal(kb, (shape[0],), dtype=jnp.float32)
        return w, b

    keys = jax.random.split(key, 2 * num_layers + 1)
    ki = 0
    for i in range(num_layers):                       # spatial: (1, k, k)
        cin = in_channels if i == 0 else hidden_dim
        params["spatial"].append(_wb(keys[ki], (hidden_dim, cin, 1, k, k)))
        ki += 1
    for i in range(num_layers):                       # temporal: (k, 1, 1)
        params["temporal"].append(_wb(keys[ki], (hidden_dim, hidden_dim, k, 1, 1)))
        ki += 1
    params["final"] = _wb(keys[ki], (in_channels, hidden_dim, k, k, k))
    return params


# ----------------------------------------------------------------------------
# Forward pass: spatial block -> temporal block -> conv_final (single fused call)
# ----------------------------------------------------------------------------
def model_inverted_forward(params, x_ncdhw, kernel_size):
    assert kernel_size % 2 == 1, "even kernel sizes change the output extent"
    N, C, T, H, W = x_ncdhw.shape
    p = kernel_size // 2
    Tp, Hp, Wp = T + 2 * p, H + 2 * p, W + 2 * p
    Sp = _round_up(Hp * Wp, 128)             # lane-aligned plane stride
    L = Tp * Sp

    layer_ws = ([(w, b, True) for (w, b) in params["spatial"]]
                + [(w, b, True) for (w, b) in params["temporal"]]
                + [(params["final"][0], params["final"][1], False)])

    weights, biases, meta = [], [], []
    max_abs_d = 0
    for (w, b, relu) in layer_ws:
        Co, Ci, KT, KH, KW = w.shape
        cin_p = _round_up(Ci, 16)            # bf16 sublane-tile alignment
        pt, ph, pw = KT // 2, KH // 2, KW // 2
        offs = []
        for kt in range(KT):
            for kh in range(KH):
                for kw in range(KW):
                    offs.append((kt - pt) * Sp + (kh - ph) * Wp + (kw - pw))
        max_abs_d = max(max_abs_d, max(abs(d) for d in offs))
        # Fold (kt, kh, kw, ci) into the contraction dim; pad ci -> cin_p with zeros.
        w2 = jnp.transpose(w, (0, 2, 3, 4, 1))                       # [Co,KT,KH,KW,Ci]
        w2 = jnp.pad(w2, ((0, 0),) * 4 + ((0, cin_p - Ci),))
        w2 = w2.reshape(Co, KT * KH * KW * cin_p).astype(jnp.bfloat16)
        weights.append(w2)
        biases.append(b.reshape(-1, 1).astype(jnp.float32))
        meta.append((tuple(offs), cin_p, Co, relu))

    dpad = _round_up(max_abs_d, 128)         # lane halo so every shifted slice is in range
    Lh = L + 2 * dpad

    # Input slab: channels-first, zero spatio-temporal halo, 128-aligned plane stride,
    # Dpad lane halo, channels padded to C0p, bf16.
    C0p = meta[0][1]
    xp = jnp.pad(x_ncdhw, ((0, 0), (0, C0p - C), (p, p), (p, p), (p, p)))
    xp = xp.reshape(N, C0p, Tp, Hp * Wp)
    xp = jnp.pad(xp, ((0, 0), (0, 0), (0, 0), (0, Sp - Hp * Wp)))
    xp = jnp.pad(xp.reshape(N, C0p, L), ((0, 0), (0, 0), (dpad, dpad)))
    xp = xp.astype(jnp.bfloat16)

    # Interior mask: 1 on real voxels, 0 on halo + plane-gap lanes.
    m3 = jnp.pad(jnp.ones((T, H, W), jnp.float32), ((p, p), (p, p), (p, p)))
    mask = jnp.pad(m3.reshape(Tp, Hp * Wp), ((0, 0), (0, Sp - Hp * Wp))).reshape(1, L)

    # Largest lane tile (multiple of 128, <= 1024) that divides L (L % 128 == 0 always).
    ltile = 128
    for cand in range(1024, 127, -128):
        if L % cand == 0:
            ltile = cand
            break

    out = _fused_forward_pallas(xp, mask, weights, biases, tuple(meta),
                                dpad=dpad, l_out=L, lh=Lh, ltile=ltile, c_out=C)

    y = out.reshape(N, C, Tp, Sp)[:, :, :, :Hp * Wp].reshape(N, C, Tp, Hp, Wp)
    return y[:, :, p:p + T, p:p + H, p:p + W]          # drop halo -> NCDHW


# ----------------------------------------------------------------------------
# XLA references.  quantize=True mirrors the kernel's bf16-storage / f32-acc
# numerics (tight check); quantize=False is the pure-f32 model (loose check).
# ----------------------------------------------------------------------------
def _conv3d_ref(x, w, b, relu, *, quantize):
    pad = [(kd // 2, kd // 2) for kd in w.shape[2:]]
    lhs = x.astype(jnp.bfloat16) if quantize else x
    rhs = w.astype(jnp.bfloat16) if quantize else w
    y = lax.conv_general_dilated(
        lhs, rhs, window_strides=(1, 1, 1), padding=pad,
        dimension_numbers=("NCDHW", "OIDHW", "NCDHW"),
        preferred_element_type=jnp.float32)
    y = y + b.reshape(1, -1, 1, 1, 1)
    return jnp.maximum(y, 0.0) if relu else y


def model_inverted_ref(params, x, *, quantize):
    def q(v):
        return v.astype(jnp.bfloat16).astype(jnp.float32) if quantize else v

    h = x
    for w, b in params["spatial"]:
        h = q(_conv3d_ref(h, w, b, True, quantize=quantize))
    for w, b in params["temporal"]:
        h = q(_conv3d_ref(h, w, b, True, quantize=quantize))
    wf, bf = params["final"]
    return _conv3d_ref(h, wf, bf, False, quantize=quantize)


# ----------------------------------------------------------------------------
if __name__ == "__main__":
    # Small shapes consistent with the module: input_size = [N, C, T, H, W]
    N, C, T, H, W = 2, 2, 4, 8, 8
    hidden_dim = 16
    num_layers = 2
    kernel_size = 3

    key = jax.random.PRNGKey(0)
    k_x, k_p = jax.random.split(key)
    x = jax.random.normal(k_x, (N, C, T, H, W), dtype=jnp.float32)
    params = init_params(k_p, C, hidden_dim, kernel_size, num_layers)

    fwd = jax.jit(lambda p_, x_: model_inverted_forward(p_, x_, kernel_size))
    out = jax.block_until_ready(fwd(params, x))
    assert out.shape == (N, C, T, H, W), out.shape

    # Tight check against a matched-precision (bf16 inputs / f32 accumulate) ref.
    ref_q = jax.block_until_ready(model_inverted_ref(params, x, quantize=True))
    np.testing.assert_allclose(np.asarray(out), np.asarray(ref_q),
                               rtol=1e-3, atol=1e-3)

    # Loose semantic check against the pure-f32 reference model.
    ref_f = jax.block_until_ready(model_inverted_ref(params, x, quantize=False))
    np.testing.assert_allclose(np.asarray(out), np.asarray(ref_f),
                               rtol=5e-2, atol=5e-2)

    print("KERNEL_OK")
</pallas_src>

<mosaic_0001>
module attributes {stable_mosaic.version = 11 : i64} {
  func.func @_stack_kernel(%arg0: i32, %arg1: memref<1x16x1280xbf16, #tpu.memory_space<vmem>>, %arg2: memref<1x768xf32, #tpu.memory_space<vmem>>, %arg3: memref<16x144xbf16, #tpu.memory_space<vmem>>, %arg4: memref<16x1xf32, #tpu.memory_space<vmem>>, %arg5: memref<16x144xbf16, #tpu.memory_space<vmem>>, %arg6: memref<16x1xf32, #tpu.memory_space<vmem>>, %arg7: memref<16x48xbf16, #tpu.memory_space<vmem>>, %arg8: memref<16x1xf32, #tpu.memory_space<vmem>>, %arg9: memref<16x48xbf16, #tpu.memory_space<vmem>>, %arg10: memref<16x1xf32, #tpu.memory_space<vmem>>, %arg11: memref<2x432xbf16, #tpu.memory_space<vmem>>, %arg12: memref<2x1xf32, #tpu.memory_space<vmem>>, %arg13: memref<1x2x768xf32, #tpu.memory_space<vmem>>, %arg14: memref<16x1280xbf16, #tpu.memory_space<vmem>>, %arg15: memref<16x1280xbf16, #tpu.memory_space<vmem>>, %arg16: memref<432x768xbf16, #tpu.memory_space<vmem>>) attributes {dimension_semantics = [#tpu.dimension_semantics<parallel>], iteration_bounds = array<i64: 2>, scalar_prefetch = 0 : i64, scratch_operands = 3 : i64, tpu.core_type = #tpu.core_type<tc>, window_params = [{transform_indices = @transform_0, window_bounds = array<i64: 1, 16, 1280>}, {pipeline_mode = #tpu.pipeline_mode<synchronous>, transform_indices = @transform_1, window_bounds = array<i64: 1, 768>}, {pipeline_mode = #tpu.pipeline_mode<synchronous>, transform_indices = @transform_2, window_bounds = array<i64: 16, 144>}, {pipeline_mode = #tpu.pipeline_mode<synchronous>, transform_indices = @transform_3, window_bounds = array<i64: 16, 1>}, {pipeline_mode = #tpu.pipeline_mode<synchronous>, transform_indices = @transform_4, window_bounds = array<i64: 16, 144>}, {pipeline_mode = #tpu.pipeline_mode<synchronous>, transform_indices = @transform_5, window_bounds = array<i64: 16, 1>}, {pipeline_mode = #tpu.pipeline_mode<synchronous>, transform_indices = @transform_6, window_bounds = array<i64: 16, 48>}, {pipeline_mode = #tpu.pipeline_mode<synchronous>, transform_indices = @transform_7, window_bounds = array<i64: 16, 1>}, {pipeline_mode = #tpu.pipeline_mode<synchronous>, transform_indices = @transform_8, window_bounds = array<i64: 16, 48>}, {pipeline_mode = #tpu.pipeline_mode<synchronous>, transform_indices = @transform_9, window_bounds = array<i64: 16, 1>}, {pipeline_mode = #tpu.pipeline_mode<synchronous>, transform_indices = @transform_10, window_bounds = array<i64: 2, 432>}, {pipeline_mode = #tpu.pipeline_mode<synchronous>, transform_indices = @transform_11, window_bounds = array<i64: 2, 1>}, {transform_indices = @transform_12, window_bounds = array<i64: 1, 2, 768>}]} {
    %cst = arith.constant 0.000000e+00 : bf16
    %0 = vector.broadcast %cst : bf16 to vector<16x1280xbf16>
    %c0 = arith.constant 0 : index
    %c0_0 = arith.constant 0 : index
    %1 = vector.load %arg14[%c0, %c0_0] : memref<16x1280xbf16, #tpu.memory_space<vmem>>, vector<16x1280xbf16>
    tpu.vector_store %arg14[%c0, %c0_0], %0 {strides = array<i32>} : memref<16x1280xbf16, #tpu.memory_space<vmem>>, vector<16x1280xbf16>,
    %cst_1 = arith.constant 0.000000e+00 : bf16
    %2 = vector.broadcast %cst_1 : bf16 to vector<16x1280xbf16>
    %c0_2 = arith.constant 0 : index
    %c0_3 = arith.constant 0 : index
    %3 = vector.load %arg15[%c0_2, %c0_3] : memref<16x1280xbf16, #tpu.memory_space<vmem>>, vector<16x1280xbf16>
    tpu.vector_store %arg15[%c0_2, %c0_3], %2 {strides = array<i32>} : memref<16x1280xbf16, #tpu.memory_space<vmem>>, vector<16x1280xbf16>,
    %c0_4 = arith.constant 0 : index
    %c0_5 = arith.constant 0 : index
    %4 = vector.load %arg3[%c0_4, %c0_5] : memref<16x144xbf16, #tpu.memory_space<vmem>>, vector<16x144xbf16>
    %c0_6 = arith.constant 0 : index
    %c0_7 = arith.constant 0 : index
    %5 = vector.load %arg4[%c0_6, %c0_7] : memref<16x1xf32, #tpu.memory_space<vmem>>, vector<16x1xf32>
    %c0_8 = arith.constant 0 : index
    %c0_9 = arith.constant 0 : index
    %c245 = arith.constant 245 : index
    %6 = vector.load %arg1[%c0_8, %c0_9, %c245] : memref<1x16x1280xbf16, #tpu.memory_space<vmem>>, vector<1x16x768xbf16>
    %7 = vector.shape_cast %6 : vector<1x16x768xbf16> to vector<16x768xbf16>
    %c0_10 = arith.constant 0 : index
    %c0_11 = arith.constant 0 : index
    %8 = vector.load %arg16[%c0_10, %c0_11] : memref<432x768xbf16, #tpu.memory_space<vmem>>, vector<16x768xbf16>
    tpu.vector_store %arg16[%c0_10, %c0_11], %7 {strides = array<i32>} : memref<432x768xbf16, #tpu.memory_space<vmem>>, vector<16x768xbf16>,
    %c0_12 = arith.constant 0 : index
    %c0_13 = arith.constant 0 : index
    %c246 = arith.constant 246 : index
    %9 = vector.load %arg1[%c0_12, %c0_13, %c246] : memref<1x16x1280xbf16, #tpu.memory_space<vmem>>, vector<1x16x768xbf16>
    %10 = vector.shape_cast %9 : vector<1x16x768xbf16> to vector<16x768xbf16>
    %c16 = arith.constant 16 : index
    %c0_14 = arith.constant 0 : index
    %11 = vector.load %arg16[%c16, %c0_14] : memref<432x768xbf16, #tpu.memory_space<vmem>>, vector<16x768xbf16>
    tpu.vector_store %arg16[%c16, %c0_14], %10 {strides = array<i32>} : memref<432x768xbf16, #tpu.memory_space<vmem>>, vector<16x768xbf16>,
    %c0_15 = arith.constant 0 : index
    %c0_16 = arith.constant 0 : index
    %c247 = arith.constant 247 : index
    %12 = vector.load %arg1[%c0_15, %c0_16, %c247] : memref<1x16x1280xbf16, #tpu.memory_space<vmem>>, vector<1x16x768xbf16>
    %13 = vector.shape_cast %12 : vector<1x16x768xbf16> to vector<16x768xbf16>
    %c32 = arith.constant 32 : index
    %c0_17 = arith.constant 0 : index
    %14 = vector.load %arg16[%c32, %c0_17] : memref<432x768xbf16, #tpu.memory_space<vmem>>, vector<16x768xbf16>
    tpu.vector_store %arg16[%c32, %c0_17], %13 {strides = array<i32>} : memref<432x768xbf16, #tpu.memory_space<vmem>>, vector<16x768xbf16>,
    %c0_18 = arith.constant 0 : index
    %c0_19 = arith.constant 0 : index
    %c255 = arith.constant 255 : index
    %15 = vector.load %arg1[%c0_18, %c0_19, %c255] : memref<1x16x1280xbf16, #tpu.memory_space<vmem>>, vector<1x16x768xbf16>
    %16 = vector.shape_cast %15 : vector<1x16x768xbf16> to vector<16x768xbf16>
    %c48 = arith.constant 48 : index
    %c0_20 = arith.constant 0 : index
    %17 = vector.load %arg16[%c48, %c0_20] : memref<432x768xbf16, #tpu.memory_space<vmem>>, vector<16x768xbf16>
    tpu.vector_store %arg16[%c48, %c0_20], %16 {strides = array<i32>} : memref<432x768xbf16, #tpu.memory_space<vmem>>, vector<16x768xbf16>,
    %c0_21 = arith.constant 0 : index
    %c0_22 = arith.constant 0 : index
    %c256 = arith.constant 256 : index
    %18 = vector.load %arg1[%c0_21, %c0_22, %c256] : memref<1x16x1280xbf16, #tpu.memory_space<vmem>>, vector<1x16x768xbf16>
    %19 = vector.shape_cast %18 : vector<1x16x768xbf16> to vector<16x768xbf16>
    %c64 = arith.constant 64 : index
    %c0_23 = arith.constant 0 : index
    %20 = vector.load %arg16[%c64, %c0_23] : memref<432x768xbf16, #tpu.memory_space<vmem>>, vector<16x768xbf16>
    tpu.vector_store %arg16[%c64, %c0_23], %19 {strides = array<i32>} : memref<432x768xbf16, #tpu.memory_space<vmem>>, vector<16x768xbf16>,
    %c0_24 = arith.constant 0 : index
    %c0_25 = arith.constant 0 : index
    %c257 = arith.constant 257 : index
    %21 = vector.load %arg1[%c0_24, %c0_25, %c257] : memref<1x16x1280xbf16, #tpu.memory_space<vmem>>, vector<1x16x768xbf16>
    %22 = vector.shape_cast %21 : vector<1x16x768xbf16> to vector<16x768xbf16>
    %c80 = arith.constant 80 : index
    %c0_26 = arith.constant 0 : index
    %23 = vector.load %arg16[%c80, %c0_26] : memref<432x768xbf16, #tpu.memory_space<vmem>>, vector<16x768xbf16>
    tpu.vector_store %arg16[%c80, %c0_26], %22 {strides = array<i32>} : memref<432x768xbf16, #tpu.memory_space<vmem>>, vector<16x768xbf16>,
    %c0_27 = arith.constant 0 : index
    %c0_28 = arith.constant 0 : index
    %c265 = arith.constant 265 : index
    %24 = vector.load %arg1[%c0_27, %c0_28, %c265] : memref<1x16x1280xbf16, #tpu.memory_space<vmem>>, vector<1x16x768xbf16>
    %25 = vector.shape_cast %24 : vector<1x16x768xbf16> to vector<16x768xbf16>
    %c96 = arith.constant 96 : index
    %c0_29 = arith.constant 0 : index
    %26 = vector.load %arg16[%c96, %c0_29] : memref<432x768xbf16, #tpu.memory_space<vmem>>, vector<16x768xbf16>
    tpu.vector_store %arg16[%c96, %c0_29], %25 {strides = array<i32>} : memref<432x768xbf16, #tpu.memory_space<vmem>>, vector<16x768xbf16>,
    %c0_30 = arith.constant 0 : index
    %c0_31 = arith.constant 0 : index
    %c266 = arith.constant 266 : index
    %27 = vector.load %arg1[%c0_30, %c0_31, %c266] : memref<1x16x1280xbf16, #tpu.memory_space<vmem>>, vector<1x16x768xbf16>
    %28 = vector.shape_cast %27 : vector<1x16x768xbf16> to vector<16x768xbf16>
    %c112 = arith.constant 112 : index
    %c0_32 = arith.constant 0 : index
    %29 = vector.load %arg16[%c112, %c0_32] : memref<432x768xbf16, #tpu.memory_space<vmem>>, vector<16x768xbf16>
    tpu.vector_store %arg16[%c112, %c0_32], %28 {strides = array<i32>} : memref<432x768xbf16, #tpu.memory_space<vmem>>, vector<16x768xbf16>,
    %c0_33 = arith.constant 0 : index
    %c0_34 = arith.constant 0 : index
    %c267 = arith.constant 267 : index
    %30 = vector.load %arg1[%c0_33, %c0_34, %c267] : memref<1x16x1280xbf16, #tpu.memory_space<vmem>>, vector<1x16x768xbf16>
    %31 = vector.shape_cast %30 : vector<1x16x768xbf16> to vector<16x768xbf16>
    %c128 = arith.constant 128 : index
    %c0_35 = arith.constant 0 : index
    %32 = vector.load %arg16[%c128, %c0_35] : memref<432x768xbf16, #tpu.memory_space<vmem>>, vector<16x768xbf16>
    tpu.vector_store %arg16[%c128, %c0_35], %31 {strides = array<i32>} : memref<432x768xbf16, #tpu.memory_space<vmem>>, vector<16x768xbf16>,
    %c0_36 = arith.constant 0 : index
    %c0_37 = arith.constant 0 : index
    %33 = vector.load %arg16[%c0_36, %c0_37] : memref<432x768xbf16, #tpu.memory_space<vmem>>, vector<144x768xbf16>
    %cst_38 = arith.constant dense<0.000000e+00> : vector<16x768xf32>
    %34 = tpu.matmul %4, %33, %cst_38 {dimension_numbers = #tpu.dot_dimension_numbers<[1], [0], [0], [1], [0, 0, 1, 1], [], []>} : vector<16x144xbf16>, vector<144x768xbf16>, vector<16x768xf32> -> vector<16x768xf32>
    %35 = vector.broadcast %5 : vector<16x1xf32> to vector<16x768xf32>
    %36 = arith.addf %34, %35 : vector<16x768xf32>
    %cst_39 = arith.constant 0.000000e+00 : f32
    %37 = vector.broadcast %cst_39 : f32 to vector<16x768xf32>
    %38 = arith.maximumf %36, %37 : vector<16x768xf32>
    %c0_40 = arith.constant 0 : index
    %c0_41 = arith.constant 0 : index
    %39 = vector.load %arg2[%c0_40, %c0_41] : memref<1x768xf32, #tpu.memory_space<vmem>>, vector<1x768xf32>
    %40 = vector.broadcast %39 : vector<1x768xf32> to vector<16x768xf32>
    %41 = arith.mulf %38, %40 : vector<16x768xf32>
    %42 = arith.truncf %41 : vector<16x768xf32> to vector<16x768xbf16>
    %c0_42 = arith.constant 0 : index
    %c256_43 = arith.constant 256 : index
    %43 = vector.load %arg14[%c0_42, %c256_43] : memref<16x1280xbf16, #tpu.memory_space<vmem>>, vector<16x768xbf16>
    tpu.vector_store %arg14[%c0_42, %c256_43], %42 {strides = array<i32>} : memref<16x1280xbf16, #tpu.memory_space<vmem>>, vector<16x768xbf16>,
    %c0_44 = arith.constant 0 : index
    %c0_45 = arith.constant 0 : index
    %44 = vector.load %arg5[%c0_44, %c0_45] : memref<16x144xbf16, #tpu.memory_space<vmem>>, vector<16x144xbf16>
    %c0_46 = arith.constant 0 : index
    %c0_47 = arith.constant 0 : index
    %45 = vector.load %arg6[%c0_46, %c0_47] : memref<16x1xf32, #tpu.memory_space<vmem>>, vector<16x1xf32>
    %c0_48 = arith.constant 0 : index
    %c245_49 = arith.constant 245 : index
    %46 = vector.load %arg14[%c0_48, %c245_49] : memref<16x1280xbf16, #tpu.memory_space<vmem>>, vector<16x768xbf16>
    %c0_50 = arith.constant 0 : index
    %c0_51 = arith.constant 0 : index
    %47 = vector.load %arg16[%c0_50, %c0_51] : memref<432x768xbf16, #tpu.memory_space<vmem>>, vector<16x768xbf16>
    tpu.vector_store %arg16[%c0_50, %c0_51], %46 {strides = array<i32>} : memref<432x768xbf16, #tpu.memory_space<vmem>>, vector<16x768xbf16>,
    %c0_52 = arith.constant 0 : index
    %c246_53 = arith.constant 246 : index
    %48 = vector.load %arg14[%c0_52, %c246_53] : memref<16x1280xbf16, #tpu.memory_space<vmem>>, vector<16x768xbf16>
    %c16_54 = arith.constant 16 : index
    %c0_55 = arith.constant 0 : index
    %49 = vector.load %arg16[%c16_54, %c0_55] : memref<432x768xbf16, #tpu.memory_space<vmem>>, vector<16x768xbf16>
    tpu.vector_store %arg16[%c16_54, %c0_55], %48 {strides = array<i32>} : memref<432x768xbf16, #tpu.memory_space<vmem>>, vector<16x768xbf16>,
    %c0_56 = arith.constant 0 : index
    %c247_57 = arith.constant 247 : index
    %50 = vector.load %arg14[%c0_56, %c247_57] : memref<16x1280xbf16, #tpu.memory_space<vmem>>, vector<16x768xbf16>
    %c32_58 = arith.constant 32 : index
    %c0_59 = arith.constant 0 : index
    %51 = vector.load %arg16[%c32_58, %c0_59] : memref<432x768xbf16, #tpu.memory_space<vmem>>, vector<16x768xbf16>
    tpu.vector_store %arg16[%c32_58, %c0_59], %50 {strides = array<i32>} : memref<432x768xbf16, #tpu.memory_space<vmem>>, vector<16x768xbf16>,
    %c0_60 = arith.constant 0 : index
    %c255_61 = arith.constant 255 : index
    %52 = vector.load %arg14[%c0_60, %c255_61] : memref<16x1280xbf16, #tpu.memory_space<vmem>>, vector<16x768xbf16>
    %c48_62 = arith.constant 48 : index
    %c0_63 = arith.constant 0 : index
    %53 = vector.load %arg16[%c48_62, %c0_63] : memref<432x768xbf16, #tpu.memory_space<vmem>>, vector<16x768xbf16>
    tpu.vector_store %arg16[%c48_62, %c0_63], %52 {strides = array<i32>} : memref<432x768xbf16, #tpu.memory_space<vmem>>, vector<16x768xbf16>,
    %c0_64 = arith.constant 0 : index
    %c256_65 = arith.constant 256 : index
    %54 = vector.load %arg14[%c0_64, %c256_65] : memref<16x1280xbf16, #tpu.memory_space<vmem>>, vector<16x768xbf16>
    %c64_66 = arith.constant 64 : index
    %c0_67 = arith.constant 0 : index
    %55 = vector.load %arg16[%c64_66, %c0_67] : memref<432x768xbf16, #tpu.memory_space<vmem>>, vector<16x768xbf16>
    tpu.vector_store %arg16[%c64_66, %c0_67], %54 {strides = array<i32>} : memref<432x768xbf16, #tpu.memory_space<vmem>>, vector<16x768xbf16>,
    %c0_68 = arith.constant 0 : index
    %c257_69 = arith.constant 257 : index
    %56 = vector.load %arg14[%c0_68, %c257_69] : memref<16x1280xbf16, #tpu.memory_space<vmem>>, vector<16x768xbf16>
    %c80_70 = arith.constant 80 : index
    %c0_71 = arith.constant 0 : index
    %57 = vector.load %arg16[%c80_70, %c0_71] : memref<432x768xbf16, #tpu.memory_space<vmem>>, vector<16x768xbf16>
    tpu.vector_store %arg16[%c80_70, %c0_71], %56 {strides = array<i32>} : memref<432x768xbf16, #tpu.memory_space<vmem>>, vector<16x768xbf16>,
    %c0_72 = arith.constant 0 : index
    %c265_73 = arith.constant 265 : index
    %58 = vector.load %arg14[%c0_72, %c265_73] : memref<16x1280xbf16, #tpu.memory_space<vmem>>, vector<16x768xbf16>
    %c96_74 = arith.constant 96 : index
    %c0_75 = arith.constant 0 : index
    %59 = vector.load %arg16[%c96_74, %c0_75] : memref<432x768xbf16, #tpu.memory_space<vmem>>, vector<16x768xbf16>
    tpu.vector_store %arg16[%c96_74, %c0_75], %58 {strides = array<i32>} : memref<432x768xbf16, #tpu.memory_space<vmem>>, vector<16x768xbf16>,
    %c0_76 = arith.constant 0 : index
    %c266_77 = arith.constant 266 : index
    %60 = vector.load %arg14[%c0_76, %c266_77] : memref<16x1280xbf16, #tpu.memory_space<vmem>>, vector<16x768xbf16>
    %c112_78 = arith.constant 112 : index
    %c0_79 = arith.constant 0 : index
    %61 = vector.load %arg16[%c112_78, %c0_79] : memref<432x768xbf16, #tpu.memory_space<vmem>>, vector<16x768xbf16>
    tpu.vector_store %arg16[%c112_78, %c0_79], %60 {strides = array<i32>} : memref<432x768xbf16, #tpu.memory_space<vmem>>, vector<16x768xbf16>,
    %c0_80 = arith.constant 0 : index
    %c267_81 = arith.constant 267 : index
    %62 = vector.load %arg14[%c0_80, %c267_81] : memref<16x1280xbf16, #tpu.memory_space<vmem>>, vector<16x768xbf16>
    %c128_82 = arith.constant 128 : index
    %c0_83 = arith.constant 0 : index
    %63 = vector.load %arg16[%c128_82, %c0_83] : memref<432x768xbf16, #tpu.memory_space<vmem>>, vector<16x768xbf16>
    tpu.vector_store %arg16[%c128_82, %c0_83], %62 {strides = array<i32>} : memref<432x768xbf16, #tpu.memory_space<vmem>>, vector<16x768xbf16>,
    %c0_84 = arith.constant 0 : index
    %c0_85 = arith.constant 0 : index
    %64 = vector.load %arg16[%c0_84, %c0_85] : memref<432x768xbf16, #tpu.memory_space<vmem>>, vector<144x768xbf16>
    %cst_86 = arith.constant dense<0.000000e+00> : vector<16x768xf32>
    %65 = tpu.matmul %44, %64, %cst_86 {dimension_numbers = #tpu.dot_dimension_numbers<[1], [0], [0], [1], [0, 0, 1, 1], [], []>} : vector<16x144xbf16>, vector<144x768xbf16>, vector<16x768xf32> -> vector<16x768xf32>
    %66 = vector.broadcast %45 : vector<16x1xf32> to vector<16x768xf32>
    %67 = arith.addf %65, %66 : vector<16x768xf32>
    %cst_87 = arith.constant 0.000000e+00 : f32
    %68 = vector.broadcast %cst_87 : f32 to vector<16x768xf32>
    %69 = arith.maximumf %67, %68 : vector<16x768xf32>
    %c0_88 = arith.constant 0 : index
    %c0_89 = arith.constant 0 : index
    %70 = vector.load %arg2[%c0_88, %c0_89] : memref<1x768xf32, #tpu.memory_space<vmem>>, vector<1x768xf32>
    %71 = vector.broadcast %70 : vector<1x768xf32> to vector<16x768xf32>
    %72 = arith.mulf %69, %71 : vector<16x768xf32>
    %73 = arith.truncf %72 : vector<16x768xf32> to vector<16x768xbf16>
    %c0_90 = arith.constant 0 : index
    %c256_91 = arith.constant 256 : index
    %74 = vector.load %arg15[%c0_90, %c256_91] : memref<16x1280xbf16, #tpu.memory_space<vmem>>, vector<16x768xbf16>
    tpu.vector_store %arg15[%c0_90, %c256_91], %73 {strides = array<i32>} : memref<16x1280xbf16, #tpu.memory_space<vmem>>, vector<16x768xbf16>,
    %c0_92 = arith.constant 0 : index
    %c0_93 = arith.constant 0 : index
    %75 = vector.load %arg7[%c0_92, %c0_93] : memref<16x48xbf16, #tpu.memory_space<vmem>>, vector<16x48xbf16>
    %c0_94 = arith.constant 0 : index
    %c0_95 = arith.constant 0 : index
    %76 = vector.load %arg8[%c0_94, %c0_95] : memref<16x1xf32, #tpu.memory_space<vmem>>, vector<16x1xf32>
    %c0_96 = arith.constant 0 : index
    %c128_97 = arith.constant 128 : index
    %77 = vector.load %arg15[%c0_96, %c128_97] : memref<16x1280xbf16, #tpu.memory_space<vmem>>, vector<16x768xbf16>
    %c0_98 = arith.constant 0 : index
    %c0_99 = arith.constant 0 : index
    %78 = vector.load %arg16[%c0_98, %c0_99] : memref<432x768xbf16, #tpu.memory_space<vmem>>, vector<16x768xbf16>
    tpu.vector_store %arg16[%c0_98, %c0_99], %77 {strides = array<i32>} : memref<432x768xbf16, #tpu.memory_space<vmem>>, vector<16x768xbf16>,
    %c0_100 = arith.constant 0 : index
    %c256_101 = arith.constant 256 : index
    %79 = vector.load %arg15[%c0_100, %c256_101] : memref<16x1280xbf16, #tpu.memory_space<vmem>>, vector<16x768xbf16>
    %c16_102 = arith.constant 16 : index
    %c0_103 = arith.constant 0 : index
    %80 = vector.load %arg16[%c16_102, %c0_103] : memref<432x768xbf16, #tpu.memory_space<vmem>>, vector<16x768xbf16>
    tpu.vector_store %arg16[%c16_102, %c0_103], %79 {strides = array<i32>} : memref<432x768xbf16, #tpu.memory_space<vmem>>, vector<16x768xbf16>,
    %c0_104 = arith.constant 0 : index
    %c384 = arith.constant 384 : index
    %81 = vector.load %arg15[%c0_104, %c384] : memref<16x1280xbf16, #tpu.memory_space<vmem>>, vector<16x768xbf16>
    %c32_105 = arith.constant 32 : index
    %c0_106 = arith.constant 0 : index
    %82 = vector.load %arg16[%c32_105, %c0_106] : memref<432x768xbf16, #tpu.memory_space<vmem>>, vector<16x768xbf16>
    tpu.vector_store %arg16[%c32_105, %c0_106], %81 {strides = array<i32>} : memref<432x768xbf16, #tpu.memory_space<vmem>>, vector<16x768xbf16>,
    %c0_107 = arith.constant 0 : index
    %c0_108 = arith.constant 0 : index
    %83 = vector.load %arg16[%c0_107, %c0_108] : memref<432x768xbf16, #tpu.memory_space<vmem>>, vector<48x768xbf16>
    %cst_109 = arith.constant dense<0.000000e+00> : vector<16x768xf32>
    %84 = tpu.matmul %75, %83, %cst_109 {dimension_numbers = #tpu.dot_dimension_numbers<[1], [0], [0], [1], [0, 0, 1, 1], [], []>} : vector<16x48xbf16>, vector<48x768xbf16>, vector<16x768xf32> -> vector<16x768xf32>
    %85 = vector.broadcast %76 : vector<16x1xf32> to vector<16x768xf32>
    %86 = arith.addf %84, %85 : vector<16x768xf32>
    %cst_110 = arith.constant 0.000000e+00 : f32
    %87 = vector.broadcast %cst_110 : f32 to vector<16x768xf32>
    %88 = arith.maximumf %86, %87 : vector<16x768xf32>
    %c0_111 = arith.constant 0 : index
    %c0_112 = arith.constant 0 : index
    %89 = vector.load %arg2[%c0_111, %c0_112] : memref<1x768xf32, #tpu.memory_space<vmem>>, vector<1x768xf32>
    %90 = vector.broadcast %89 : vector<1x768xf32> to vector<16x768xf32>
    %91 = arith.mulf %88, %90 : vector<16x768xf32>
    %92 = arith.truncf %91 : vector<16x768xf32> to vector<16x768xbf16>
    %c0_113 = arith.constant 0 : index
    %c256_114 = arith.constant 256 : index
    %93 = vector.load %arg14[%c0_113, %c256_114] : memref<16x1280xbf16, #tpu.memory_space<vmem>>, vector<16x768xbf16>
    tpu.vector_store %arg14[%c0_113, %c256_114], %92 {strides = array<i32>} : memref<16x1280xbf16, #tpu.memory_space<vmem>>, vector<16x768xbf16>,
    %c0_115 = arith.constant 0 : index
    %c0_116 = arith.constant 0 : index
    %94 = vector.load %arg9[%c0_115, %c0_116] : memref<16x48xbf16, #tpu.memory_space<vmem>>, vector<16x48xbf16>
    %c0_117 = arith.constant 0 : index
    %c0_118 = arith.constant 0 : index
    %95 = vector.load %arg10[%c0_117, %c0_118] : memref<16x1xf32, #tpu.memory_space<vmem>>, vector<16x1xf32>
    %c0_119 = arith.constant 0 : index
    %c128_120 = arith.constant 128 : index
    %96 = vector.load %arg14[%c0_119, %c128_120] : memref<16x1280xbf16, #tpu.memory_space<vmem>>, vector<16x768xbf16>
    %c0_121 = arith.constant 0 : index
    %c0_122 = arith.constant 0 : index
    %97 = vector.load %arg16[%c0_121, %c0_122] : memref<432x768xbf16, #tpu.memory_space<vmem>>, vector<16x768xbf16>
    tpu.vector_store %arg16[%c0_121, %c0_122], %96 {strides = array<i32>} : memref<432x768xbf16, #tpu.memory_space<vmem>>, vector<16x768xbf16>,
    %c0_123 = arith.constant 0 : index
    %c256_124 = arith.constant 256 : index
    %98 = vector.load %arg14[%c0_123, %c256_124] : memref<16x1280xbf16, #tpu.memory_space<vmem>>, vector<16x768xbf16>
    %c16_125 = arith.constant 16 : index
    %c0_126 = arith.constant 0 : index
    %99 = vector.load %arg16[%c16_125, %c0_126] : memref<432x768xbf16, #tpu.memory_space<vmem>>, vector<16x768xbf16>
    tpu.vector_store %arg16[%c16_125, %c0_126], %98 {strides = array<i32>} : memref<432x768xbf16, #tpu.memory_space<vmem>>, vector<16x768xbf16>,
    %c0_127 = arith.constant 0 : index
    %c384_128 = arith.constant 384 : index
    %100 = vector.load %arg14[%c0_127, %c384_128] : memref<16x1280xbf16, #tpu.memory_space<vmem>>, vector<16x768xbf16>
    %c32_129 = arith.constant 32 : index
    %c0_130 = arith.constant 0 : index
    %101 = vector.load %arg16[%c32_129, %c0_130] : memref<432x768xbf16, #tpu.memory_space<vmem>>, vector<16x768xbf16>
    tpu.vector_store %arg16[%c32_129, %c0_130], %100 {strides = array<i32>} : memref<432x768xbf16, #tpu.memory_space<vmem>>, vector<16x768xbf16>,
    %c0_131 = arith.constant 0 : index
    %c0_132 = arith.constant 0 : index
    %102 = vector.load %arg16[%c0_131, %c0_132] : memref<432x768xbf16, #tpu.memory_space<vmem>>, vector<48x768xbf16>
    %cst_133 = arith.constant dense<0.000000e+00> : vector<16x768xf32>
    %103 = tpu.matmul %94, %102, %cst_133 {dimension_numbers = #tpu.dot_dimension_numbers<[1], [0], [0], [1], [0, 0, 1, 1], [], []>} : vector<16x48xbf16>, vector<48x768xbf16>, vector<16x768xf32> -> vector<16x768xf32>
    %104 = vector.broadcast %95 : vector<16x1xf32> to vector<16x768xf32>
    %105 = arith.addf %103, %104 : vector<16x768xf32>
    %cst_134 = arith.constant 0.000000e+00 : f32
    %106 = vector.broadcast %cst_134 : f32 to vector<16x768xf32>
    %107 = arith.maximumf %105, %106 : vector<16x768xf32>
    %c0_135 = arith.constant 0 : index
    %c0_136 = arith.constant 0 : index
    %108 = vector.load %arg2[%c0_135, %c0_136] : memref<1x768xf32, #tpu.memory_space<vmem>>, vector<1x768xf32>
    %109 = vector.broadcast %108 : vector<1x768xf32> to vector<16x768xf32>
    %110 = arith.mulf %107, %109 : vector<16x768xf32>
    %111 = arith.truncf %110 : vector<16x768xf32> to vector<16x768xbf16>
    %c0_137 = arith.constant 0 : index
    %c256_138 = arith.constant 256 : index
    %112 = vector.load %arg15[%c0_137, %c256_138] : memref<16x1280xbf16, #tpu.memory_space<vmem>>, vector<16x768xbf16>
    tpu.vector_store %arg15[%c0_137, %c256_138], %111 {strides = array<i32>} : memref<16x1280xbf16, #tpu.memory_space<vmem>>, vector<16x768xbf16>,
    %c0_139 = arith.constant 0 : index
    %c0_140 = arith.constant 0 : index
    %113 = vector.load %arg11[%c0_139, %c0_140] : memref<2x432xbf16, #tpu.memory_space<vmem>>, vector<2x432xbf16>
    %c0_141 = arith.constant 0 : index
    %c0_142 = arith.constant 0 : index
    %114 = vector.load %arg12[%c0_141, %c0_142] : memref<2x1xf32, #tpu.memory_space<vmem>>, vector<2x1xf32>
    %c0_143 = arith.constant 0 : index
    %c117 = arith.constant 117 : index
    %115 = vector.load %arg15[%c0_143, %c117] : memref<16x1280xbf16, #tpu.memory_space<vmem>>, vector<16x768xbf16>
    %c0_144 = arith.constant 0 : index
    %c0_145 = arith.constant 0 : index
    %116 = vector.load %arg16[%c0_144, %c0_145] : memref<432x768xbf16, #tpu.memory_space<vmem>>, vector<16x768xbf16>
    tpu.vector_store %arg16[%c0_144, %c0_145], %115 {strides = array<i32>} : memref<432x768xbf16, #tpu.memory_space<vmem>>, vector<16x768xbf16>,
    %c0_146 = arith.constant 0 : index
    %c118 = arith.constant 118 : index
    %117 = vector.load %arg15[%c0_146, %c118] : memref<16x1280xbf16, #tpu.memory_space<vmem>>, vector<16x768xbf16>
    %c16_147 = arith.constant 16 : index
    %c0_148 = arith.constant 0 : index
    %118 = vector.load %arg16[%c16_147, %c0_148] : memref<432x768xbf16, #tpu.memory_space<vmem>>, vector<16x768xbf16>
    tpu.vector_store %arg16[%c16_147, %c0_148], %117 {strides = array<i32>} : memref<432x768xbf16, #tpu.memory_space<vmem>>, vector<16x768xbf16>,
    %c0_149 = arith.constant 0 : index
    %c119 = arith.constant 119 : index
    %119 = vector.load %arg15[%c0_149, %c119] : memref<16x1280xbf16, #tpu.memory_space<vmem>>, vector<16x768xbf16>
    %c32_150 = arith.constant 32 : index
    %c0_151 = arith.constant 0 : index
    %120 = vector.load %arg16[%c32_150, %c0_151] : memref<432x768xbf16, #tpu.memory_space<vmem>>, vector<16x768xbf16>
    tpu.vector_store %arg16[%c32_150, %c0_151], %119 {strides = array<i32>} : memref<432x768xbf16, #tpu.memory_space<vmem>>, vector<16x768xbf16>,
    %c0_152 = arith.constant 0 : index
    %c127 = arith.constant 127 : index
    %121 = vector.load %arg15[%c0_152, %c127] : memref<16x1280xbf16, #tpu.memory_space<vmem>>, vector<16x768xbf16>
    %c48_153 = arith.constant 48 : index
    %c0_154 = arith.constant 0 : index
    %122 = vector.load %arg16[%c48_153, %c0_154] : memref<432x768xbf16, #tpu.memory_space<vmem>>, vector<16x768xbf16>
    tpu.vector_store %arg16[%c48_153, %c0_154], %121 {strides = array<i32>} : memref<432x768xbf16, #tpu.memory_space<vmem>>, vector<16x768xbf16>,
    %c0_155 = arith.constant 0 : index
    %c128_156 = arith.constant 128 : index
    %123 = vector.load %arg15[%c0_155, %c128_156] : memref<16x1280xbf16, #tpu.memory_space<vmem>>, vector<16x768xbf16>
    %c64_157 = arith.constant 64 : index
    %c0_158 = arith.constant 0 : index
    %124 = vector.load %arg16[%c64_157, %c0_158] : memref<432x768xbf16, #tpu.memory_space<vmem>>, vector<16x768xbf16>
    tpu.vector_store %arg16[%c64_157, %c0_158], %123 {strides = array<i32>} : memref<432x768xbf16, #tpu.memory_space<vmem>>, vector<16x768xbf16>,
    %c0_159 = arith.constant 0 : index
    %c129 = arith.constant 129 : index
    %125 = vector.load %arg15[%c0_159, %c129] : memref<16x1280xbf16, #tpu.memory_space<vmem>>, vector<16x768xbf16>
    %c80_160 = arith.constant 80 : index
    %c0_161 = arith.constant 0 : index
    %126 = vector.load %arg16[%c80_160, %c0_161] : memref<432x768xbf16, #tpu.memory_space<vmem>>, vector<16x768xbf16>
    tpu.vector_store %arg16[%c80_160, %c0_161], %125 {strides = array<i32>} : memref<432x768xbf16, #tpu.memory_space<vmem>>, vector<16x768xbf16>,
    %c0_162 = arith.constant 0 : index
    %c137 = arith.constant 137 : index
    %127 = vector.load %arg15[%c0_162, %c137] : memref<16x1280xbf16, #tpu.memory_space<vmem>>, vector<16x768xbf16>
    %c96_163 = arith.constant 96 : index
    %c0_164 = arith.constant 0 : index
    %128 = vector.load %arg16[%c96_163, %c0_164] : memref<432x768xbf16, #tpu.memory_space<vmem>>, vector<16x768xbf16>
    tpu.vector_store %arg16[%c96_163, %c0_164], %127 {strides = array<i32>} : memref<432x768xbf16, #tpu.memory_space<vmem>>, vector<16x768xbf16>,
    %c0_165 = arith.constant 0 : index
    %c138 = arith.constant 138 : index
    %129 = vector.load %arg15[%c0_165, %c138] : memref<16x1280xbf16, #tpu.memory_space<vmem>>, vector<16x768xbf16>
    %c112_166 = arith.constant 112 : index
    %c0_167 = arith.constant 0 : index
    %130 = vector.load %arg16[%c112_166, %c0_167] : memref<432x768xbf16, #tpu.memory_space<vmem>>, vector<16x768xbf16>
    tpu.vector_store %arg16[%c112_166, %c0_167], %129 {strides = array<i32>} : memref<432x768xbf16, #tpu.memory_space<vmem>>, vector<16x768xbf16>,
    %c0_168 = arith.constant 0 : index
    %c139 = arith.constant 139 : index
    %131 = vector.load %arg15[%c0_168, %c139] : memref<16x1280xbf16, #tpu.memory_space<vmem>>, vector<16x768xbf16>
    %c128_169 = arith.constant 128 : index
    %c0_170 = arith.constant 0 : index
    %132 = vector.load %arg16[%c128_169, %c0_170] : memref<432x768xbf16, #tpu.memory_space<vmem>>, vector<16x768xbf16>
    tpu.vector_store %arg16[%c128_169, %c0_170], %131 {strides = array<i32>} : memref<432x768xbf16, #tpu.memory_space<vmem>>, vector<16x768xbf16>,
    %c0_171 = arith.constant 0 : index
    %c245_172 = arith.constant 245 : index
    %133 = vector.load %arg15[%c0_171, %c245_172] : memref<16x1280xbf16, #tpu.memory_space<vmem>>, vector<16x768xbf16>
    %c144 = arith.constant 144 : index
    %c0_173 = arith.constant 0 : index
    %134 = vector.load %arg16[%c144, %c0_173] : memref<432x768xbf16, #tpu.memory_space<vmem>>, vector<16x768xbf16>
    tpu.vector_store %arg16[%c144, %c0_173], %133 {strides = array<i32>} : memref<432x768xbf16, #tpu.memory_space<vmem>>, vector<16x768xbf16>,
    %c0_174 = arith.constant 0 : index
    %c246_175 = arith.constant 246 : index
    %135 = vector.load %arg15[%c0_174, %c246_175] : memref<16x1280xbf16, #tpu.memory_space<vmem>>, vector<16x768xbf16>
    %c160 = arith.constant 160 : index
    %c0_176 = arith.constant 0 : index
    %136 = vector.load %arg16[%c160, %c0_176] : memref<432x768xbf16, #tpu.memory_space<vmem>>, vector<16x768xbf16>
    tpu.vector_store %arg16[%c160, %c0_176], %135 {strides = array<i32>} : memref<432x768xbf16, #tpu.memory_space<vmem>>, vector<16x768xbf16>,
    %c0_177 = arith.constant 0 : index
    %c247_178 = arith.constant 247 : index
    %137 = vector.load %arg15[%c0_177, %c247_178] : memref<16x1280xbf16, #tpu.memory_space<vmem>>, vector<16x768xbf16>
    %c176 = arith.constant 176 : index
    %c0_179 = arith.constant 0 : index
    %138 = vector.load %arg16[%c176, %c0_179] : memref<432x768xbf16, #tpu.memory_space<vmem>>, vector<16x768xbf16>
    tpu.vector_store %arg16[%c176, %c0_179], %137 {strides = array<i32>} : memref<432x768xbf16, #tpu.memory_space<vmem>>, vector<16x768xbf16>,
    %c0_180 = arith.constant 0 : index
    %c255_181 = arith.constant 255 : index
    %139 = vector.load %arg15[%c0_180, %c255_181] : memref<16x1280xbf16, #tpu.memory_space<vmem>>, vector<16x768xbf16>
    %c192 = arith.constant 192 : index
    %c0_182 = arith.constant 0 : index
    %140 = vector.load %arg16[%c192, %c0_182] : memref<432x768xbf16, #tpu.memory_space<vmem>>, vector<16x768xbf16>
    tpu.vector_store %arg16[%c192, %c0_182], %139 {strides = array<i32>} : memref<432x768xbf16, #tpu.memory_space<vmem>>, vector<16x768xbf16>,
    %c0_183 = arith.constant 0 : index
    %c256_184 = arith.constant 256 : index
    %141 = vector.load %arg15[%c0_183, %c256_184] : memref<16x1280xbf16, #tpu.memory_space<vmem>>, vector<16x768xbf16>
    %c208 = arith.constant 208 : index
    %c0_185 = arith.constant 0 : index
    %142 = vector.load %arg16[%c208, %c0_185] : memref<432x768xbf16, #tpu.memory_space<vmem>>, vector<16x768xbf16>
    tpu.vector_store %arg16[%c208, %c0_185], %141 {strides = array<i32>} : memref<432x768xbf16, #tpu.memory_space<vmem>>, vector<16x768xbf16>,
    %c0_186 = arith.constant 0 : index
    %c257_187 = arith.constant 257 : index
    %143 = vector.load %arg15[%c0_186, %c257_187] : memref<16x1280xbf16, #tpu.memory_space<vmem>>, vector<16x768xbf16>
    %c224 = arith.constant 224 : index
    %c0_188 = arith.constant 0 : index
    %144 = vector.load %arg16[%c224, %c0_188] : memref<432x768xbf16, #tpu.memory_space<vmem>>, vector<16x768xbf16>
    tpu.vector_store %arg16[%c224, %c0_188], %143 {strides = array<i32>} : memref<432x768xbf16, #tpu.memory_space<vmem>>, vector<16x768xbf16>,
    %c0_189 = arith.constant 0 : index
    %c265_190 = arith.constant 265 : index
    %145 = vector.load %arg15[%c0_189, %c265_190] : memref<16x1280xbf16, #tpu.memory_space<vmem>>, vector<16x768xbf16>
    %c240 = arith.constant 240 : index
    %c0_191 = arith.constant 0 : index
    %146 = vector.load %arg16[%c240, %c0_191] : memref<432x768xbf16, #tpu.memory_space<vmem>>, vector<16x768xbf16>
    tpu.vector_store %arg16[%c240, %c0_191], %145 {strides = array<i32>} : memref<432x768xbf16, #tpu.memory_space<vmem>>, vector<16x768xbf16>,
    %c0_192 = arith.constant 0 : index
    %c266_193 = arith.constant 266 : index
    %147 = vector.load %arg15[%c0_192, %c266_193] : memref<16x1280xbf16, #tpu.memory_space<vmem>>, vector<16x768xbf16>
    %c256_194 = arith.constant 256 : index
    %c0_195 = arith.constant 0 : index
    %148 = vector.load %arg16[%c256_194, %c0_195] : memref<432x768xbf16, #tpu.memory_space<vmem>>, vector<16x768xbf16>
    tpu.vector_store %arg16[%c256_194, %c0_195], %147 {strides = array<i32>} : memref<432x768xbf16, #tpu.memory_space<vmem>>, vector<16x768xbf16>,
    %c0_196 = arith.constant 0 : index
    %c267_197 = arith.constant 267 : index
    %149 = vector.load %arg15[%c0_196, %c267_197] : memref<16x1280xbf16, #tpu.memory_space<vmem>>, vector<16x768xbf16>
    %c272 = arith.constant 272 : index
    %c0_198 = arith.constant 0 : index
    %150 = vector.load %arg16[%c272, %c0_198] : memref<432x768xbf16, #tpu.memory_space<vmem>>, vector<16x768xbf16>
    tpu.vector_store %arg16[%c272, %c0_198], %149 {strides = array<i32>} : memref<432x768xbf16, #tpu.memory_space<vmem>>, vector<16x768xbf16>,
    %c0_199 = arith.constant 0 : index
    %c373 = arith.constant 373 : index
    %151 = vector.load %arg15[%c0_199, %c373] : memref<16x1280xbf16, #tpu.memory_space<vmem>>, vector<16x768xbf16>
    %c288 = arith.constant 288 : index
    %c0_200 = arith.constant 0 : index
    %152 = vector.load %arg16[%c288, %c0_200] : memref<432x768xbf16, #tpu.memory_space<vmem>>, vector<16x768xbf16>
    tpu.vector_store %arg16[%c288, %c0_200], %151 {strides = array<i32>} : memref<432x768xbf16, #tpu.memory_space<vmem>>, vector<16x768xbf16>,
    %c0_201 = arith.constant 0 : index
    %c374 = arith.constant 374 : index
    %153 = vector.load %arg15[%c0_201, %c374] : memref<16x1280xbf16, #tpu.memory_space<vmem>>, vector<16x768xbf16>
    %c304 = arith.constant 304 : index
    %c0_202 = arith.constant 0 : index
    %154 = vector.load %arg16[%c304, %c0_202] : memref<432x768xbf16, #tpu.memory_space<vmem>>, vector<16x768xbf16>
    tpu.vector_store %arg16[%c304, %c0_202], %153 {strides = array<i32>} : memref<432x768xbf16, #tpu.memory_space<vmem>>, vector<16x768xbf16>,
    %c0_203 = arith.constant 0 : index
    %c375 = arith.constant 375 : index
    %155 = vector.load %arg15[%c0_203, %c375] : memref<16x1280xbf16, #tpu.memory_space<vmem>>, vector<16x768xbf16>
    %c320 = arith.constant 320 : index
    %c0_204 = arith.constant 0 : index
    %156 = vector.load %arg16[%c320, %c0_204] : memref<432x768xbf16, #tpu.memory_space<vmem>>, vector<16x768xbf16>
    tpu.vector_store %arg16[%c320, %c0_204], %155 {strides = array<i32>} : memref<432x768xbf16, #tpu.memory_space<vmem>>, vector<16x768xbf16>,
    %c0_205 = arith.constant 0 : index
    %c383 = arith.constant 383 : index
    %157 = vector.load %arg15[%c0_205, %c383] : memref<16x1280xbf16, #tpu.memory_space<vmem>>, vector<16x768xbf16>
    %c336 = arith.constant 336 : index
    %c0_206 = arith.constant 0 : index
    %158 = vector.load %arg16[%c336, %c0_206] : memref<432x768xbf16, #tpu.memory_space<vmem>>, vector<16x768xbf16>
    tpu.vector_store %arg16[%c336, %c0_206], %157 {strides = array<i32>} : memref<432x768xbf16, #tpu.memory_space<vmem>>, vector<16x768xbf16>,
    %c0_207 = arith.constant 0 : index
    %c384_208 = arith.constant 384 : index
    %159 = vector.load %arg15[%c0_207, %c384_208] : memref<16x1280xbf16, #tpu.memory_space<vmem>>, vector<16x768xbf16>
    %c352 = arith.constant 352 : index
    %c0_209 = arith.constant 0 : index
    %160 = vector.load %arg16[%c352, %c0_209] : memref<432x768xbf16, #tpu.memory_space<vmem>>, vector<16x768xbf16>
    tpu.vector_store %arg16[%c352, %c0_209], %159 {strides = array<i32>} : memref<432x768xbf16, #tpu.memory_space<vmem>>, vector<16x768xbf16>,
    %c0_210 = arith.constant 0 : index
    %c385 = arith.constant 385 : index
    %161 = vector.load %arg15[%c0_210, %c385] : memref<16x1280xbf16, #tpu.memory_space<vmem>>, vector<16x768xbf16>
    %c368 = arith.constant 368 : index
    %c0_211 = arith.constant 0 : index
    %162 = vector.load %arg16[%c368, %c0_211] : memref<432x768xbf16, #tpu.memory_space<vmem>>, vector<16x768xbf16>
    tpu.vector_store %arg16[%c368, %c0_211], %161 {strides = array<i32>} : memref<432x768xbf16, #tpu.memory_space<vmem>>, vector<16x768xbf16>,
    %c0_212 = arith.constant 0 : index
    %c393 = arith.constant 393 : index
    %163 = vector.load %arg15[%c0_212, %c393] : memref<16x1280xbf16, #tpu.memory_space<vmem>>, vector<16x768xbf16>
    %c384_213 = arith.constant 384 : index
    %c0_214 = arith.constant 0 : index
    %164 = vector.load %arg16[%c384_213, %c0_214] : memref<432x768xbf16, #tpu.memory_space<vmem>>, vector<16x768xbf16>
    tpu.vector_store %arg16[%c384_213, %c0_214], %163 {strides = array<i32>} : memref<432x768xbf16, #tpu.memory_space<vmem>>, vector<16x768xbf16>,
    %c0_215 = arith.constant 0 : index
    %c394 = arith.constant 394 : index
    %165 = vector.load %arg15[%c0_215, %c394] : memref<16x1280xbf16, #tpu.memory_space<vmem>>, vector<16x768xbf16>
    %c400 = arith.constant 400 : index
    %c0_216 = arith.constant 0 : index
    %166 = vector.load %arg16[%c400, %c0_216] : memref<432x768xbf16, #tpu.memory_space<vmem>>, vector<16x768xbf16>
    tpu.vector_store %arg16[%c400, %c0_216], %165 {strides = array<i32>} : memref<432x768xbf16, #tpu.memory_space<vmem>>, vector<16x768xbf16>,
    %c0_217 = arith.constant 0 : index
    %c395 = arith.constant 395 : index
    %167 = vector.load %arg15[%c0_217, %c395] : memref<16x1280xbf16, #tpu.memory_space<vmem>>, vector<16x768xbf16>
    %c416 = arith.constant 416 : index
    %c0_218 = arith.constant 0 : index
    %168 = vector.load %arg16[%c416, %c0_218] : memref<432x768xbf16, #tpu.memory_space<vmem>>, vector<16x768xbf16>
    tpu.vector_store %arg16[%c416, %c0_218], %167 {strides = array<i32>} : memref<432x768xbf16, #tpu.memory_space<vmem>>, vector<16x768xbf16>,
    %c0_219 = arith.constant 0 : index
    %c0_220 = arith.constant 0 : index
    %169 = vector.load %arg16[%c0_219, %c0_220] : memref<432x768xbf16, #tpu.memory_space<vmem>>, vector<432x768xbf16>
    %cst_221 = arith.constant dense<0.000000e+00> : vector<2x768xf32>
    %170 = tpu.matmul %113, %169, %cst_221 {dimension_numbers = #tpu.dot_dimension_numbers<[1], [0], [0], [1], [0, 0, 1, 1], [], []>} : vector<2x432xbf16>, vector<432x768xbf16>, vector<2x768xf32> -> vector<2x768xf32>
    %171 = vector.broadcast %114 : vector<2x1xf32> to vector<2x768xf32>
    %172 = arith.addf %170, %171 : vector<2x768xf32>
    %c0_222 = arith.constant 0 : index
    %c0_223 = arith.constant 0 : index
    %173 = vector.load %arg2[%c0_222, %c0_223] : memref<1x768xf32, #tpu.memory_space<vmem>>, vector<1x768xf32>
    %174 = vector.broadcast %173 : vector<1x768xf32> to vector<2x768xf32>
    %175 = arith.mulf %172, %174 : vector<2x768xf32>
    %c0_224 = arith.constant 0 : index
    %c0_225 = arith.constant 0 : index
    %c0_226 = arith.constant 0 : index
    %176 = vector.load %arg13[%c0_224, %c0_225, %c0_226] : memref<1x2x768xf32, #tpu.memory_space<vmem>>, vector<1x2x768xf32>
    %177 = vector.shape_cast %176 : vector<1x2x768xf32> to vector<2x768xf32>
    %178 = vector.shape_cast %175 : vector<2x768xf32> to vector<1x2x768xf32>
    tpu.vector_store %arg13[%c0_224, %c0_225, %c0_226], %178 {strides = array<i32>} : memref<1x2x768xf32, #tpu.memory_space<vmem>>, vector<1x2x768xf32>,
    return
  }
  func.func @transform_0(%arg0: i32) -> (i32, i32, i32) {
    %c0_i32 = arith.constant 0 : i32
    %c0_i32_0 = arith.constant 0 : i32
    %c0_i32_1 = arith.constant 0 : i32
    return %arg0, %c0_i32, %c0_i32_0 : i32, i32, i32
  }
  func.func @transform_1(%arg0: i32) -> (i32, i32) {
    %c0_i32 = arith.constant 0 : i32
    %c0_i32_0 = arith.constant 0 : i32
    %c0_i32_1 = arith.constant 0 : i32
    return %c0_i32, %c0_i32_0 : i32, i32
  }
  func.func @transform_2(%arg0: i32) -> (i32, i32) {
    %c0_i32 = arith.constant 0 : i32
    %c0_i32_0 = arith.constant 0 : i32
    %c0_i32_1 = arith.constant 0 : i32
    return %c0_i32, %c0_i32_0 : i32, i32
  }
  func.func @transform_3(%arg0: i32) -> (i32, i32) {
    %c0_i32 = arith.constant 0 : i32
    %c0_i32_0 = arith.constant 0 : i32
    %c0_i32_1 = arith.constant 0 : i32
    return %c0_i32, %c0_i32_0 : i32, i32
  }
  func.func @transform_4(%arg0: i32) -> (i32, i32) {
    %c0_i32 = arith.constant 0 : i32
    %c0_i32_0 = arith.constant 0 : i32
    %c0_i32_1 = arith.constant 0 : i32
    return %c0_i32, %c0_i32_0 : i32, i32
  }
  func.func @transform_5(%arg0: i32) -> (i32, i32) {
    %c0_i32 = arith.constant 0 : i32
    %c0_i32_0 = arith.constant 0 : i32
    %c0_i32_1 = arith.constant 0 : i32
    return %c0_i32, %c0_i32_0 : i32, i32
  }
  func.func @transform_6(%arg0: i32) -> (i32, i32) {
    %c0_i32 = arith.constant 0 : i32
    %c0_i32_0 = arith.constant 0 : i32
    %c0_i32_1 = arith.constant 0 : i32
    return %c0_i32, %c0_i32_0 : i32, i32
  }
  func.func @transform_7(%arg0: i32) -> (i32, i32) {
    %c0_i32 = arith.constant 0 : i32
    %c0_i32_0 = arith.constant 0 : i32
    %c0_i32_1 = arith.constant 0 : i32
    return %c0_i32, %c0_i32_0 : i32, i32
  }
  func.func @transform_8(%arg0: i32) -> (i32, i32) {
    %c0_i32 = arith.constant 0 : i32
    %c0_i32_0 = arith.constant 0 : i32
    %c0_i32_1 = arith.constant 0 : i32
    return %c0_i32, %c0_i32_0 : i32, i32
  }
  func.func @transform_9(%arg0: i32) -> (i32, i32) {
    %c0_i32 = arith.constant 0 : i32
    %c0_i32_0 = arith.constant 0 : i32
    %c0_i32_1 = arith.constant 0 : i32
    return %c0_i32, %c0_i32_0 : i32, i32
  }
  func.func @transform_10(%arg0: i32) -> (i32, i32) {
    %c0_i32 = arith.constant 0 : i32
    %c0_i32_0 = arith.constant 0 : i32
    %c0_i32_1 = arith.constant 0 : i32
    return %c0_i32, %c0_i32_0 : i32, i32
  }
  func.func @transform_11(%arg0: i32) -> (i32, i32) {
    %c0_i32 = arith.constant 0 : i32
    %c0_i32_0 = arith.constant 0 : i32
    %c0_i32_1 = arith.constant 0 : i32
    return %c0_i32, %c0_i32_0 : i32, i32
  }
  func.func @transform_12(%arg0: i32) -> (i32, i32, i32) {
    %c0_i32 = arith.constant 0 : i32
    %c0_i32_0 = arith.constant 0 : i32
    %c0_i32_1 = arith.constant 0 : i32
    return %arg0, %c0_i32, %c0_i32_0 : i32, i32, i32
  }
}

</mosaic_0001>

<llo_original>
// kernel: _lambda_.1
$region0: #{_lambda_.1}
  #allocation0 [shape = 'u32[]', space=smem, size = 0x4, offset = 0x4, fixed_abs, tag = 'smem constant byte address 0x4 - core index']
  #allocation1 [shape = 'u32[144,128]{1,0:T(1,128)}', space=vmem, size = 0x12000, scoped, tag = 'internal scratch']
  #allocation2 [shape = 'bf16[16,1280]{1,0:T(8,128)(2,1)}', space=vmem, size = 0xa000, scoped, tag = 'scratch operand']
  #allocation3 [shape = 'bf16[16,1280]{1,0:T(8,128)(2,1)}', space=vmem, size = 0xa000, scoped, tag = 'scratch operand']
  #allocation4 [shape = 'bf16[432,768]{1,0:T(8,128)(2,1)}', space=vmem, size = 0xa2000, scoped, tag = 'scratch operand']
  %s0 = inlined_call_operand.vmem [shape: bf16[2,16,1280], index: 0, kind: input, shape index: {}]
  %s1 = inlined_call_operand.vmem [shape: f32[1,768], index: 1, kind: input, shape index: {}]
  %s2 = inlined_call_operand.vmem [shape: bf16[16,144], index: 2, kind: input, shape index: {}]
  %s3 = inlined_call_operand.vmem [shape: f32[16,1], index: 3, kind: input, shape index: {}]
  %s4 = inlined_call_operand.vmem [shape: bf16[16,144], index: 4, kind: input, shape index: {}]
  %s5 = inlined_call_operand.vmem [shape: f32[16,1], index: 5, kind: input, shape index: {}]
  %s6 = inlined_call_operand.vmem [shape: bf16[16,48], index: 6, kind: input, shape index: {}]
  %s7 = inlined_call_operand.vmem [shape: f32[16,1], index: 7, kind: input, shape index: {}]
  %s8 = inlined_call_operand.vmem [shape: bf16[16,48], index: 8, kind: input, shape index: {}]
  %s9 = inlined_call_operand.vmem [shape: f32[16,1], index: 9, kind: input, shape index: {}]
  %s10 = inlined_call_operand.vmem [shape: bf16[2,432], index: 10, kind: input, shape index: {}]
  %s11 = inlined_call_operand.vmem [shape: f32[2,1], index: 11, kind: input, shape index: {}]
  %s12 = inlined_call_operand.vmem [shape: f32[2,2,768], index: 12, kind: output, shape index: {}]
  %s13 = sld [smem:[#allocation0]]
  $region81: #{_lambda_.1} parent=0
    _
  %s15 = ssub.s32 1, %s13
  %s16 = scalar_select 0, %s15, %s13
  loop: start=0, step=1, limit=4
  $region2: #{_lambda_.1} parent=0 // loop_pre_header
    _
  $region3: #{_lambda_.1} parent=0 // loop_header
    %s18 = sphi 0, %s22
    %p19 = scmp.ge.s32.totalorder %s18, 4
    %s28 = sphi 0, %s30
    %s31 = sphi 0, %s28
    %s32 = sphi 0, %s31
    %s48 = sphi 0, %s32
    %s52 = sphi 0, %s52
    %s54 = sphi 0, %s52
    %s55 = sphi 0, %s54
    %s69 = sphi 0, %s55
    %s73 = sphi 0, %s73
    %s75 = sphi 0, %s73
    %s76 = sphi 0, %s75
    %s90 = sphi 0, %s76
    %s94 = sphi 0, %s94
    %s96 = sphi 0, %s94
    %s97 = sphi 0, %s96
    %s111 = sphi 0, %s97
    %s115 = sphi 0, %s115
    %s117 = sphi 0, %s115
    %s118 = sphi 0, %s117
    %s132 = sphi 0, %s118
    %s136 = sphi 0, %s136
    %s138 = sphi 0, %s136
    %s139 = sphi 0, %s138
    %s153 = sphi 0, %s139
    %s157 = sphi 0, %s157
    %s159 = sphi 0, %s157
    %s160 = sphi 0, %s159
    %s174 = sphi 0, %s160
    %s178 = sphi 0, %s178
    %s180 = sphi 0, %s178
    %s181 = sphi 0, %s180
    %s195 = sphi 0, %s181
    %s199 = sphi 0, %s199
    %s201 = sphi 0, %s199
    %s202 = sphi 0, %s201
    %s216 = sphi 0, %s202
    %s220 = sphi 0, %s220
    %s222 = sphi 0, %s220
    %s223 = sphi 0, %s222
    %s237 = sphi 0, %s223
    %s241 = sphi 0, %s241
    %s243 = sphi 0, %s241
    %s244 = sphi 0, %s243
    %s258 = sphi 0, %s244
    %s262 = sphi 0, %s262
    %s264 = sphi 0, %s262
    %s265 = sphi 0, %s264
    %s279 = sphi 0, %s265
    %s285 = sphi 0, %s287
    %s288 = sphi 0, %s285
    %s289 = sphi 0, %s288
    %s305 = sphi 0, %s289
  $region4: #{_lambda_.1} parent=0 // loop_header_branch
    %21 = sbr.rel (%p19) target = $region8
  $region5: #{_lambda_.1} parent=0 // loop_body
    %s23 = ssub.s32 %s18, 1
    %s24 = ssub.s32 %s18, 2
    %s25 = sadd.s32 %s18, 1
    %s26 = ssub.s32 %s18, %s25
    %p27 = scmp.eq.s32.totalorder %s26, 0
    %s29 = sadd.s32 %s28, 1
    %s30 = scalar_select %p27, %s28, %s29
    %p33 = pneg %p27
    %p34 = scmp.eq.s32.totalorder %s18, 1
    %p35 = por %p33, %p34
    %p36 = scmp.ne.s32.totalorder %s28, %s31
    %p37 = scmp.eq.s32.totalorder %s18, 0
    %p38 = por %p36, %p37
    %p39 = scmp.ne.s32.totalorder %s28, %s31
    %p40 = scmp.eq.s32.totalorder %s23, 1
    %p41 = por %p39, %p40
    %p42 = scmp.ne.s32.totalorder %s31, %s32
    %p43 = scmp.eq.s32.totalorder %s23, 0
    %p44 = por %p42, %p43
    %p45 = scmp.ne.s32.totalorder %s31, %s32
    %p46 = scmp.eq.s32.totalorder %s24, 1
    %p47 = por %p45, %p46
    %p49 = scmp.ne.s32.totalorder %s32, %s48
    %p50 = scmp.eq.s32.totalorder %s24, 0
    %p51 = por %p49, %p50
    %s53 = sadd.s32 %s52, 1
    %p56 = scmp.eq.s32.totalorder %s18, 1
    %p57 = scmp.ne.s32.totalorder %s52, %s54
    %p58 = scmp.eq.s32.totalorder %s18, 0
    %p59 = por %p57, %p58
    %p60 = scmp.ne.s32.totalorder %s52, %s54
    %p61 = scmp.eq.s32.totalorder %s23, 1
    %p62 = por %p60, %p61
    %p63 = scmp.ne.s32.totalorder %s54, %s55
    %p64 = scmp.eq.s32.totalorder %s23, 0
    %p65 = por %p63, %p64
    %p66 = scmp.ne.s32.totalorder %s54, %s55
    %p67 = scmp.eq.s32.totalorder %s24, 1
    %p68 = por %p66, %p67
    %p70 = scmp.ne.s32.totalorder %s55, %s69
    %p71 = scmp.eq.s32.totalorder %s24, 0
    %p72 = por %p70, %p71
    %s74 = sadd.s32 %s73, 1
    %p77 = scmp.eq.s32.totalorder %s18, 1
    %p78 = scmp.ne.s32.totalorder %s73, %s75
    %p79 = scmp.eq.s32.totalorder %s18, 0
    %p80 = por %p78, %p79
    %p81 = scmp.ne.s32.totalorder %s73, %s75
    %p82 = scmp.eq.s32.totalorder %s23, 1
    %p83 = por %p81, %p82
    %p84 = scmp.ne.s32.totalorder %s75, %s76
    %p85 = scmp.eq.s32.totalorder %s23, 0
    %p86 = por %p84, %p85
    %p87 = scmp.ne.s32.totalorder %s75, %s76
    %p88 = scmp.eq.s32.totalorder %s24, 1
    %p89 = por %p87, %p88
    %p91 = scmp.ne.s32.totalorder %s76, %s90
    %p92 = scmp.eq.s32.totalorder %s24, 0
    %p93 = por %p91, %p92
    %s95 = sadd.s32 %s94, 1
    %p98 = scmp.eq.s32.totalorder %s18, 1
    %p99 = scmp.ne.s32.totalorder %s94, %s96
    %p100 = scmp.eq.s32.totalorder %s18, 0
    %p101 = por %p99, %p100
    %p102 = scmp.ne.s32.totalorder %s94, %s96
    %p103 = scmp.eq.s32.totalorder %s23, 1
    %p104 = por %p102, %p103
    %p105 = scmp.ne.s32.totalorder %s96, %s97
    %p106 = scmp.eq.s32.totalorder %s23, 0
    %p107 = por %p105, %p106
    %p108 = scmp.ne.s32.totalorder %s96, %s97
    %p109 = scmp.eq.s32.totalorder %s24, 1
    %p110 = por %p108, %p109
    %p112 = scmp.ne.s32.totalorder %s97, %s111
    %p113 = scmp.eq.s32.totalorder %s24, 0
    %p114 = por %p112, %p113
    %s116 = sadd.s32 %s115, 1
    %p119 = scmp.eq.s32.totalorder %s18, 1
    %p120 = scmp.ne.s32.totalorder %s115, %s117
    %p121 = scmp.eq.s32.totalorder %s18, 0
    %p122 = por %p120, %p121
    %p123 = scmp.ne.s32.totalorder %s115, %s117
    %p124 = scmp.eq.s32.totalorder %s23, 1
    %p125 = por %p123, %p124
    %p126 = scmp.ne.s32.totalorder %s117, %s118
    %p127 = scmp.eq.s32.totalorder %s23, 0
    %p128 = por %p126, %p127
    %p129 = scmp.ne.s32.totalorder %s117, %s118
    %p130 = scmp.eq.s32.totalorder %s24, 1
    %p131 = por %p129, %p130
    %p133 = scmp.ne.s32.totalorder %s118, %s132
    %p134 = scmp.eq.s32.totalorder %s24, 0
    %p135 = por %p133, %p134
    %s137 = sadd.s32 %s136, 1
    %p140 = scmp.eq.s32.totalorder %s18, 1
    %p141 = scmp.ne.s32.totalorder %s136, %s138
    %p142 = scmp.eq.s32.totalorder %s18, 0
    %p143 = por %p141, %p142
    %p144 = scmp.ne.s32.totalorder %s136, %s138
    %p145 = scmp.eq.s32.totalorder %s23, 1
    %p146 = por %p144, %p145
    %p147 = scmp.ne.s32.totalorder %s138, %s139
    %p148 = scmp.eq.s32.totalorder %s23, 0
    %p149 = por %p147, %p148
    %p150 = scmp.ne.s32.totalorder %s138, %s139
    %p151 = scmp.eq.s32.totalorder %s24, 1
    %p152 = por %p150, %p151
    %p154 = scmp.ne.s32.totalorder %s139, %s153
    %p155 = scmp.eq.s32.totalorder %s24, 0
    %p156 = por %p154, %p155
    %s158 = sadd.s32 %s157, 1
    %p161 = scmp.eq.s32.totalorder %s18, 1
    %p162 = scmp.ne.s32.totalorder %s157, %s159
    %p163 = scmp.eq.s32.totalorder %s18, 0
    %p164 = por %p162, %p163
    %p165 = scmp.ne.s32.totalorder %s157, %s159
    %p166 = scmp.eq.s32.totalorder %s23, 1
    %p167 = por %p165, %p166
    %p168 = scmp.ne.s32.totalorder %s159, %s160
    %p169 = scmp.eq.s32.totalorder %s23, 0
    %p170 = por %p168, %p169
    %p171 = scmp.ne.s32.totalorder %s159, %s160
    %p172 = scmp.eq.s32.totalorder %s24, 1
    %p173 = por %p171, %p172
    %p175 = scmp.ne.s32.totalorder %s160, %s174
    %p176 = scmp.eq.s32.totalorder %s24, 0
    %p177 = por %p175, %p176
    %s179 = sadd.s32 %s178, 1
    %p182 = scmp.eq.s32.totalorder %s18, 1
    %p183 = scmp.ne.s32.totalorder %s178, %s180
    %p184 = scmp.eq.s32.totalorder %s18, 0
    %p185 = por %p183, %p184
    %p186 = scmp.ne.s32.totalorder %s178, %s180
    %p187 = scmp.eq.s32.totalorder %s23, 1
    %p188 = por %p186, %p187
    %p189 = scmp.ne.s32.totalorder %s180, %s181
    %p190 = scmp.eq.s32.totalorder %s23, 0
    %p191 = por %p189, %p190
    %p192 = scmp.ne.s32.totalorder %s180, %s181
    %p193 = scmp.eq.s32.totalorder %s24, 1
    %p194 = por %p192, %p193
    %p196 = scmp.ne.s32.totalorder %s181, %s195
    %p197 = scmp.eq.s32.totalorder %s24, 0
    %p198 = por %p196, %p197
    %s200 = sadd.s32 %s199, 1
    %p203 = scmp.eq.s32.totalorder %s18, 1
    %p204 = scmp.ne.s32.totalorder %s199, %s201
    %p205 = scmp.eq.s32.totalorder %s18, 0
    %p206 = por %p204, %p205
    %p207 = scmp.ne.s32.totalorder %s199, %s201
    %p208 = scmp.eq.s32.totalorder %s23, 1
    %p209 = por %p207, %p208
    %p210 = scmp.ne.s32.totalorder %s201, %s202
    %p211 = scmp.eq.s32.totalorder %s23, 0
    %p212 = por %p210, %p211
    %p213 = scmp.ne.s32.totalorder %s201, %s202
    %p214 = scmp.eq.s32.totalorder %s24, 1
    %p215 = por %p213, %p214
    %p217 = scmp.ne.s32.totalorder %s202, %s216
    %p218 = scmp.eq.s32.totalorder %s24, 0
    %p219 = por %p217, %p218
    %s221 = sadd.s32 %s220, 1
    %p224 = scmp.eq.s32.totalorder %s18, 1
    %p225 = scmp.ne.s32.totalorder %s220, %s222
    %p226 = scmp.eq.s32.totalorder %s18, 0
    %p227 = por %p225, %p226
    %p228 = scmp.ne.s32.totalorder %s220, %s222
    %p229 = scmp.eq.s32.totalorder %s23, 1
    %p230 = por %p228, %p229
    %p231 = scmp.ne.s32.totalorder %s222, %s223
    %p232 = scmp.eq.s32.totalorder %s23, 0
    %p233 = por %p231, %p232
    %p234 = scmp.ne.s32.totalorder %s222, %s223
    %p235 = scmp.eq.s32.totalorder %s24, 1
    %p236 = por %p234, %p235
    %p238 = scmp.ne.s32.totalorder %s223, %s237
    %p239 = scmp.eq.s32.totalorder %s24, 0
    %p240 = por %p238, %p239
    %s242 = sadd.s32 %s241, 1
    %p245 = scmp.eq.s32.totalorder %s18, 1
    %p246 = scmp.ne.s32.totalorder %s241, %s243
    %p247 = scmp.eq.s32.totalorder %s18, 0
    %p248 = por %p246, %p247
    %p249 = scmp.ne.s32.totalorder %s241, %s243
    %p250 = scmp.eq.s32.totalorder %s23, 1
    %p251 = por %p249, %p250
    %p252 = scmp.ne.s32.totalorder %s243, %s244
    %p253 = scmp.eq.s32.totalorder %s23, 0
    %p254 = por %p252, %p253
    %p255 = scmp.ne.s32.totalorder %s243, %s244
    %p256 = scmp.eq.s32.totalorder %s24, 1
    %p257 = por %p255, %p256
    %p259 = scmp.ne.s32.totalorder %s244, %s258
    %p260 = scmp.eq.s32.totalorder %s24, 0
    %p261 = por %p259, %p260
    %s263 = sadd.s32 %s262, 1
    %p266 = scmp.eq.s32.totalorder %s18, 1
    %p267 = scmp.ne.s32.totalorder %s262, %s264
    %p268 = scmp.eq.s32.totalorder %s18, 0
    %p269 = por %p267, %p268
    %p270 = scmp.ne.s32.totalorder %s262, %s264
    %p271 = scmp.eq.s32.totalorder %s23, 1
    %p272 = por %p270, %p271
    %p273 = scmp.ne.s32.totalorder %s264, %s265
    %p274 = scmp.eq.s32.totalorder %s23, 0
    %p275 = por %p273, %p274
    %p276 = scmp.ne.s32.totalorder %s264, %s265
    %p277 = scmp.eq.s32.totalorder %s24, 1
    %p278 = por %p276, %p277
    %p280 = scmp.ne.s32.totalorder %s265, %s279
    %p281 = scmp.eq.s32.totalorder %s24, 0
    %p282 = por %p280, %p281
    %s283 = ssub.s32 %s18, %s25
    %p284 = scmp.eq.s32.totalorder %s283, 0
    %s286 = sadd.s32 %s285, 1
    %s287 = scalar_select %p284, %s285, %s286
    %p290 = pneg %p284
    %p291 = scmp.eq.s32.totalorder %s18, 1
    %p292 = por %p290, %p291
    %p293 = scmp.ne.s32.totalorder %s285, %s288
    %p294 = scmp.eq.s32.totalorder %s18, 0
    %p295 = por %p293, %p294
    %p296 = scmp.ne.s32.totalorder %s285, %s288
    %p297 = scmp.eq.s32.totalorder %s23, 1
    %p298 = por %p296, %p297
    %p299 = scmp.ne.s32.totalorder %s288, %s289
    %p300 = scmp.eq.s32.totalorder %s23, 0
    %p301 = por %p299, %p300
    %p302 = scmp.ne.s32.totalorder %s288, %s289
    %p303 = scmp.eq.s32.totalorder %s24, 1
    %p304 = por %p302, %p303
    %p306 = scmp.ne.s32.totalorder %s289, %s305
    %p307 = scmp.eq.s32.totalorder %s24, 0
    %p308 = por %p306, %p307
    %p309 = scmp.le.s32.totalorder 1, %s18
    %p310 = scmp.lt.s32.totalorder %s18, 3
    %p311 = pnand %p309, %p310
    %p312 = pneg %p311
    // Predicated region
    $region9: #{_lambda_.1} parent=5 // pred_check
      _
    $region10: #{_lambda_.1} parent=5 // pred_check_branch
      %314 = sbr.rel (%p311) target = $region12
    $region11: #{_lambda_.1} parent=5 // pred_region
      %s315 = ssub.s32 %s18, 1
      // Predicated region
      $region13: #{_lambda_.1} parent=11 // pred_check
        %p316 = pneg %p65
      $region14: #{_lambda_.1} parent=11 // pred_check_branch
        %318 = sbr.rel (%p316) target = $region16
      $region15: #{_lambda_.1} parent=11 // pred_region
        _
      $region16: #{_lambda_.1} parent=11 // pred_fallthru
        _
      // Predicated region
      $region17: #{_lambda_.1} parent=11 // pred_check
        %p319 = pneg %p86
      $region18: #{_lambda_.1} parent=11 // pred_check_branch
        %321 = sbr.rel (%p319) target = $region20
      $region19: #{_lambda_.1} parent=11 // pred_region
        _
      $region20: #{_lambda_.1} parent=11 // pred_fallthru
        _
      // Predicated region
      $region21: #{_lambda_.1} parent=11 // pred_check
        %p322 = pneg %p107
      $region22: #{_lambda_.1} parent=11 // pred_check_branch
        %324 = sbr.rel (%p322) target = $region24
      $region23: #{_lambda_.1} parent=11 // pred_region
        _
      $region24: #{_lambda_.1} parent=11 // pred_fallthru
        _
      // Predicated region
      $region25: #{_lambda_.1} parent=11 // pred_check
        %p325 = pneg %p128
      $region26: #{_lambda_.1} parent=11 // pred_check_branch
        %327 = sbr.rel (%p325) target = $region28
      $region27: #{_lambda_.1} parent=11 // pred_region
        _
      $region28: #{_lambda_.1} parent=11 // pred_fallthru
        _
      // Predicated region
      $region29: #{_lambda_.1} parent=11 // pred_check
        %p328 = pneg %p149
      $region30: #{_lambda_.1} parent=11 // pred_check_branch
        %330 = sbr.rel (%p328) target = $region32
      $region31: #{_lambda_.1} parent=11 // pred_region
        _
      $region32: #{_lambda_.1} parent=11 // pred_fallthru
        _
      // Predicated region
      $region33: #{_lambda_.1} parent=11 // pred_check
        %p331 = pneg %p170
      $region34: #{_lambda_.1} parent=11 // pred_check_branch
        %333 = sbr.rel (%p331) target = $region36
      $region35: #{_lambda_.1} parent=11 // pred_region
        _
      $region36: #{_lambda_.1} parent=11 // pred_fallthru
        _
      // Predicated region
      $region37: #{_lambda_.1} parent=11 // pred_check
        %p334 = pneg %p191
      $region38: #{_lambda_.1} parent=11 // pred_check_branch
        %336 = sbr.rel (%p334) target = $region40
      $region39: #{_lambda_.1} parent=11 // pred_region
        _
      $region40: #{_lambda_.1} parent=11 // pred_fallthru
        _
      // Predicated region
      $region41: #{_lambda_.1} parent=11 // pred_check
        %p337 = pneg %p212
      $region42: #{_lambda_.1} parent=11 // pred_check_branch
        %339 = sbr.rel (%p337) target = $region44
      $region43: #{_lambda_.1} parent=11 // pred_region
        _
      $region44: #{_lambda_.1} parent=11 // pred_fallthru
        _
      // Predicated region
      $region45: #{_lambda_.1} parent=11 // pred_check
        %p340 = pneg %p233
      $region46: #{_lambda_.1} parent=11 // pred_check_branch
        %342 = sbr.rel (%p340) target = $region48
      $region47: #{_lambda_.1} parent=11 // pred_region
        _
      $region48: #{_lambda_.1} parent=11 // pred_fallthru
        _
      // Predicated region
      $region49: #{_lambda_.1} parent=11 // pred_check
        %p343 = pneg %p254
      $region50: #{_lambda_.1} parent=11 // pred_check_branch
        %345 = sbr.rel (%p343) target = $region52
      $region51: #{_lambda_.1} parent=11 // pred_region
        _
      $region52: #{_lambda_.1} parent=11 // pred_fallthru
        _
      // Predicated region
      $region53: #{_lambda_.1} parent=11 // pred_check
        %p346 = pneg %p275
      $region54: #{_lambda_.1} parent=11 // pred_check_branch
        %348 = sbr.rel (%p346) target = $region56
      $region55: #{_lambda_.1} parent=11 // pred_region
        _
      $region56: #{_lambda_.1} parent=11 // pred_fallthru
        _
    $region12: #{_lambda_.1} parent=5 // pred_fallthru
      _
    %p349 = scmp.lt.s32.totalorder %s18, 2
    // Predicated region
    $region57: #{_lambda_.1} parent=5 // pred_check
      %p350 = pneg %p349
    $region58: #{_lambda_.1} parent=5 // pred_check_branch
      %352 = sbr.rel (%p350) target = $region60
    $region59: #{_lambda_.1} parent=5 // pred_region
      // Predicated region
      $region61: #{_lambda_.1} parent=59 // pred_check
        %p353 = pneg %p38
      $region62: #{_lambda_.1} parent=59 // pred_check_branch
        %355 = sbr.rel (%p353) target = $region64
      $region63: #{_lambda_.1} parent=59 // pred_region
        %p356 = scmp.lt.s32.totalorder %s18, 1
        %s357 = scalar_select %p356, %s18, 1
        %s358 = smul.addr %s357, 20
        %s359 = smul.addr %s358, 4
        %s360 = scalar_lea.vmem %s0, %s359
      $region64: #{_lambda_.1} parent=59 // pred_fallthru
        _
    $region60: #{_lambda_.1} parent=5 // pred_fallthru
      _
    %p361 = scmp.le.s32.totalorder 1, %s18
    %p362 = scmp.lt.s32.totalorder %s18, 3
    %p363 = pnand %p361, %p362
    %p364 = pneg %p363
    // Predicated region
    $region65: #{_lambda_.1} parent=5 // pred_check
      _
    $region66: #{_lambda_.1} parent=5 // pred_check_branch
      %366 = sbr.rel (%p363) target = $region68
    $region67: #{_lambda_.1} parent=5 // pred_region
      %s367 = ssub.s32 %s18, 1
      %p368 = scmp.lt.s32.totalorder %s23, 1
      %s369 = scalar_select %p368, %s23, 1
      %s370 = smul.addr %s369, 20
      %s371 = smul.addr %s370, 4
      %s372 = scalar_lea.vmem %s0, %s371
      %p373 = pneg %p44
      %p374 = pneg %p41
      %p375 = pneg %p65
      %p376 = pneg %p62
      %p377 = pneg %p86
      %p378 = pneg %p83
      %p379 = pneg %p107
      %p380 = pneg %p104
      %p381 = pneg %p128
      %p382 = pneg %p125
      %p383 = pneg %p149
      %p384 = pneg %p146
      %p385 = pneg %p170
      %p386 = pneg %p167
      %p387 = pneg %p191
      %p388 = pneg %p188
      %p389 = pneg %p212
      %p390 = pneg %p209
      %p391 = pneg %p233
      %p392 = pneg %p230
      %p393 = pneg %p254
      %p394 = pneg %p251
      %p395 = pneg %p275
      %p396 = pneg %p272
      %p397 = pneg %p301
      %p398 = pneg %p298
      %p399 = scmp.lt.s32.totalorder %s23, 1
      %s400 = scalar_select %p399, %s23, 1
      %s401 = smul.addr %s400, 6
      %s402 = smul.addr %s401, 2
      %s403 = scalar_lea.vmem %s12, %s402
      %p404 = scmp.lt.s32.totalorder %s23, 1
      %s405 = scalar_select %p404, %s23, 1
      %s406 = smul.addr %s405, 20
      %s407 = smul.addr %s406, 4
      %s408 = scalar_lea.vmem %s0, %s407
      %p409 = scmp.lt.s32.totalorder %s23, 1
      %s410 = scalar_select %p409, %s23, 1
      %s411 = smul.addr %s410, 6
      %s412 = smul.addr %s411, 2
      %s413 = scalar_lea.vmem %s12, %s412
      %415 = vst [vmem:[#allocation2] sm:$0xff] 0
      %416 = vst [vmem:[#allocation2 + $0x8] sm:$0xff] 0
      %417 = vst [vmem:[#allocation2 + $0x10] sm:$0xff] 0
      %418 = vst [vmem:[#allocation2 + $0x18] sm:$0xff] 0
      %419 = vst [vmem:[#allocation2 + $0x20] sm:$0xff] 0
      %420 = vst [vmem:[#allocation2 + $0x28] sm:$0xff] 0
      %421 = vst [vmem:[#allocation2 + $0x30] sm:$0xff] 0
      %422 = vst [vmem:[#allocation2 + $0x38] sm:$0xff] 0
      %423 = vst [vmem:[#allocation2 + $0x40] sm:$0xff] 0
      %424 = vst [vmem:[#allocation2 + $0x48] sm:$0xff] 0
      %425 = vst [vmem:[#allocation3] sm:$0xff] 0
      %426 = vst [vmem:[#allocation3 + $0x8] sm:$0xff] 0
      %427 = vst [vmem:[#allocation3 + $0x10] sm:$0xff] 0
      %428 = vst [vmem:[#allocation3 + $0x18] sm:$0xff] 0
      %429 = vst [vmem:[#allocation3 + $0x20] sm:$0xff] 0
      %430 = vst [vmem:[#allocation3 + $0x28] sm:$0xff] 0
      %431 = vst [vmem:[#allocation3 + $0x30] sm:$0xff] 0
      %432 = vst [vmem:[#allocation3 + $0x38] sm:$0xff] 0
      %433 = vst [vmem:[#allocation3 + $0x40] sm:$0xff] 0
      %434 = vst [vmem:[#allocation3 + $0x48] sm:$0xff] 0
      %v435 = vld [vmem:[%s2] sm:$0xff]
      %v436 = vld [vmem:[%s2 + $0x8] sm:$0xff]
      %v437 = vld [vmem:[%s3] sm:$0xff]
      %v438 = vld [vmem:[%s3 + $0x8] sm:$0xff]
      %v439 = vld [vmem:[%s408 + $0x4] sm:$0xff]
      %v440 = vld [vmem:[%s408 + $0xc] sm:$0xff]
      %v441 = vld [vmem:[%s408 + $0x14] sm:$0xff]
      %v442 = vld [vmem:[%s408 + $0x1c] sm:$0xf]
      %v443 = vld [vmem:[%s408 + $0x2c] sm:$0xff]
      %v444 = vld [vmem:[%s408 + $0x34] sm:$0xff]
      %v445 = vld [vmem:[%s408 + $0x3c] sm:$0xff]
      %v446 = vld [vmem:[%s408 + $0x44] sm:$0xf]
      %455 = vrot.lane.b32.xlu0 %v439, 11
      %v456 = vpop.permute.xlu0 %455
      %457 = vrot.lane.b32.xlu0 %v440, 11
      %v458 = vpop.permute.xlu0 %457
      %459 = vrot.lane.b32.xlu0 %v441, 11
      %v460 = vpop.permute.xlu0 %459
      %461 = vrot.lane.b32.xlu0 %v442, 11
      %v462 = vpop.permute.xlu0 %461
      %463 = vrot.lane.b32.xlu0 %v443, 11
      %v464 = vpop.permute.xlu0 %463
      %465 = vrot.lane.b32.xlu0 %v444, 11
      %v466 = vpop.permute.xlu0 %465
      %467 = vrot.lane.b32.xlu0 %v445, 11
      %v468 = vpop.permute.xlu0 %467
      %469 = vrot.lane.b32.xlu0 %v446, 11
      %v470 = vpop.permute.xlu0 %469
      %v471 = vrot.slane %v456, 4
      %v472 = vrot.slane %v458, 4
      %v473 = vrot.slane %v460, 4
      %v474 = vrot.slane %v462, 4
      %v475 = vrot.slane %v464, 4
      %v476 = vrot.slane %v466, 4
      %v477 = vrot.slane %v468, 4
      %v478 = vrot.slane %v470, 4
      %vm479 = vcmask 1043456
      %v480 = vsel %vm479, %v471, %v472
      %vm481 = vcmask 89088
      %v482 = vsel %vm481, %v456, %v480
      %v483 = vsel %vm479, %v472, %v473
      %v484 = vsel %vm481, %v458, %v483
      %v485 = vsel %vm479, %v473, %v474
      %v486 = vsel %vm481, %v460, %v485
      %v487 = vsel %vm479, %v475, %v476
      %v488 = vsel %vm481, %v464, %v487
      %v489 = vsel %vm479, %v476, %v477
      %v490 = vsel %vm481, %v466, %v489
      %v491 = vsel %vm479, %v477, %v478
      %v492 = vsel %vm481, %v468, %v491
      %499 = vst [vmem:[#allocation4] sm:$0xff] %v482
      %500 = vst [vmem:[#allocation4 + $0x8] sm:$0xff] %v484
      %501 = vst [vmem:[#allocation4 + $0x10] sm:$0xff] %v486
      %502 = vst [vmem:[#allocation4 + $0x18] sm:$0xff] %v488
      %503 = vst [vmem:[#allocation4 + $0x20] sm:$0xff] %v490
      %504 = vst [vmem:[#allocation4 + $0x28] sm:$0xff] %v492
      %v505 = vld [vmem:[%s408 + $0x4] sm:$0xff]
      %v506 = vld [vmem:[%s408 + $0xc] sm:$0xff]
      %v507 = vld [vmem:[%s408 + $0x14] sm:$0xff]
      %v508 = vld [vmem:[%s408 + $0x1c] sm:$0xf]
      %v509 = vld [vmem:[%s408 + $0x2c] sm:$0xff]
      %v510 = vld [vmem:[%s408 + $0x34] sm:$0xff]
      %v511 = vld [vmem:[%s408 + $0x3c] sm:$0xff]
      %v512 = vld [vmem:[%s408 + $0x44] sm:$0xf]
      %521 = vrot.lane.b32.xlu0 %v505, 10
      %v522 = vpop.permute.xlu0 %521
      %523 = vrot.lane.b32.xlu0 %v506, 10
      %v524 = vpop.permute.xlu0 %523
      %525 = vrot.lane.b32.xlu0 %v507, 10
      %v526 = vpop.permute.xlu0 %525
      %527 = vrot.lane.b32.xlu0 %v508, 10
      %v528 = vpop.permute.xlu0 %527
      %529 = vrot.lane.b32.xlu0 %v509, 10
      %v530 = vpop.permute.xlu0 %529
      %531 = vrot.lane.b32.xlu0 %v510, 10
      %v532 = vpop.permute.xlu0 %531
      %533 = vrot.lane.b32.xlu0 %v511, 10
      %v534 = vpop.permute.xlu0 %533
      %535 = vrot.lane.b32.xlu0 %v512, 10
      %v536 = vpop.permute.xlu0 %535
      %v537 = vrot.slane %v522, 4
      %v538 = vrot.slane %v524, 4
      %v539 = vrot.slane %v526, 4
      %v540 = vrot.slane %v528, 4
      %v541 = vrot.slane %v530, 4
      %v542 = vrot.slane %v532, 4
      %v543 = vrot.slane %v534, 4
      %v544 = vrot.slane %v536, 4
      %v545 = vsel %vm479, %v537, %v538
      %vm546 = vcmask 80896
      %v547 = vsel %vm546, %v522, %v545
      %v548 = vsel %vm479, %v538, %v539
      %v549 = vsel %vm546, %v524, %v548
      %v550 = vsel %vm479, %v539, %v540
      %v551 = vsel %vm546, %v526, %v550
      %v552 = vsel %vm479, %v541, %v542
      %v553 = vsel %vm546, %v530, %v552
      %v554 = vsel %vm479, %v542, %v543
      %v555 = vsel %vm546, %v532, %v554
      %v556 = vsel %vm479, %v543, %v544
      %v557 = vsel %vm546, %v534, %v556
      %564 = vst [vmem:[#allocation4 + $0x30] sm:$0xff] %v547
      %565 = vst [vmem:[#allocation4 + $0x38] sm:$0xff] %v549
      %566 = vst [vmem:[#allocation4 + $0x40] sm:$0xff] %v551
      %567 = vst [vmem:[#allocation4 + $0x48] sm:$0xff] %v553
      %568 = vst [vmem:[#allocation4 + $0x50] sm:$0xff] %v555
      %569 = vst [vmem:[#allocation4 + $0x58] sm:$0xff] %v557
      %v570 = vld [vmem:[%s408 + $0x4] sm:$0xff]
      %v571 = vld [vmem:[%s408 + $0xc] sm:$0xff]
      %v572 = vld [vmem:[%s408 + $0x14] sm:$0xff]
      %v573 = vld [vmem:[%s408 + $0x1c] sm:$0xf]
      %v574 = vld [vmem:[%s408 + $0x2c] sm:$0xff]
      %v575 = vld [vmem:[%s408 + $0x34] sm:$0xff]
      %v576 = vld [vmem:[%s408 + $0x3c] sm:$0xff]
      %v577 = vld [vmem:[%s408 + $0x44] sm:$0xf]
      %586 = vrot.lane.b32.xlu0 %v570, 9
      %v587 = vpop.permute.xlu0 %586
      %588 = vrot.lane.b32.xlu0 %v571, 9
      %v589 = vpop.permute.xlu0 %588
      %590 = vrot.lane.b32.xlu0 %v572, 9
      %v591 = vpop.permute.xlu0 %590
      %592 = vrot.lane.b32.xlu0 %v573, 9
      %v593 = vpop.permute.xlu0 %592
      %594 = vrot.lane.b32.xlu0 %v574, 9
      %v595 = vpop.permute.xlu0 %594
      %596 = vrot.lane.b32.xlu0 %v575, 9
      %v597 = vpop.permute.xlu0 %596
      %598 = vrot.lane.b32.xlu0 %v576, 9
      %v599 = vpop.permute.xlu0 %598
      %600 = vrot.lane.b32.xlu0 %v577, 9
      %v601 = vpop.permute.xlu0 %600
      %v602 = vrot.slane %v587, 4
      %v603 = vrot.slane %v589, 4
      %v604 = vrot.slane %v591, 4
      %v605 = vrot.slane %v593, 4
      %v606 = vrot.slane %v595, 4
      %v607 = vrot.slane %v597, 4
      %v608 = vrot.slane %v599, 4
      %v609 = vrot.slane %v601, 4
      %v610 = vsel %vm479, %v602, %v603
      %vm611 = vcmask 72704
      %v612 = vsel %vm611, %v587, %v610
      %v613 = vsel %vm479, %v603, %v604
      %v614 = vsel %vm611, %v589, %v613
      %v615 = vsel %vm479, %v604, %v605
      %v616 = vsel %vm611, %v591, %v615
      %v617 = vsel %vm479, %v606, %v607
      %v618 = vsel %vm611, %v595, %v617
      %v619 = vsel %vm479, %v607, %v608
      %v620 = vsel %vm611, %v597, %v619
      %v621 = vsel %vm479, %v608, %v609
      %v622 = vsel %vm611, %v599, %v621
      %629 = vst [vmem:[#allocation4 + $0x60] sm:$0xff] %v612
      %630 = vst [vmem:[#allocation4 + $0x68] sm:$0xff] %v614
      %631 = vst [vmem:[#allocation4 + $0x70] sm:$0xff] %v616
      %632 = vst [vmem:[#allocation4 + $0x78] sm:$0xff] %v618
      %633 = vst [vmem:[#allocation4 + $0x80] sm:$0xff] %v620
      %634 = vst [vmem:[#allocation4 + $0x88] sm:$0xff] %v622
      %v635 = vld [vmem:[%s408 + $0x4] sm:$0xff]
      %v636 = vld [vmem:[%s408 + $0xc] sm:$0xff]
      %v637 = vld [vmem:[%s408 + $0x14] sm:$0xff]
      %v638 = vld [vmem:[%s408 + $0x1c] sm:$0xf]
      %v639 = vld [vmem:[%s408 + $0x2c] sm:$0xff]
      %v640 = vld [vmem:[%s408 + $0x34] sm:$0xff]
      %v641 = vld [vmem:[%s408 + $0x3c] sm:$0xff]
      %v642 = vld [vmem:[%s408 + $0x44] sm:$0xf]
      %651 = vrot.lane.b32.xlu0 %v635, 1
      %v652 = vpop.permute.xlu0 %651
      %653 = vrot.lane.b32.xlu0 %v636, 1
      %v654 = vpop.permute.xlu0 %653
      %655 = vrot.lane.b32.xlu0 %v637, 1
      %v656 = vpop.permute.xlu0 %655
      %657 = vrot.lane.b32.xlu0 %v638, 1
      %v658 = vpop.permute.xlu0 %657
      %659 = vrot.lane.b32.xlu0 %v639, 1
      %v660 = vpop.permute.xlu0 %659
      %661 = vrot.lane.b32.xlu0 %v640, 1
      %v662 = vpop.permute.xlu0 %661
      %663 = vrot.lane.b32.xlu0 %v641, 1
      %v664 = vpop.permute.xlu0 %663
      %665 = vrot.lane.b32.xlu0 %v642, 1
      %v666 = vpop.permute.xlu0 %665
      %v667 = vrot.slane %v652, 4
      %v668 = vrot.slane %v654, 4
      %v669 = vrot.slane %v656, 4
      %v670 = vrot.slane %v658, 4
      %v671 = vrot.slane %v660, 4
      %v672 = vrot.slane %v662, 4
      %v673 = vrot.slane %v664, 4
      %v674 = vrot.slane %v666, 4
      %v675 = vsel %vm479, %v667, %v668
      %vm676 = vcmask 7168
      %v677 = vsel %vm676, %v652, %v675
      %v678 = vsel %vm479, %v668, %v669
      %v679 = vsel %vm676, %v654, %v678
      %v680 = vsel %vm479, %v669, %v670
      %v681 = vsel %vm676, %v656, %v680
      %v682 = vsel %vm479, %v671, %v672
      %v683 = vsel %vm676, %v660, %v682
      %v684 = vsel %vm479, %v672, %v673
      %v685 = vsel %vm676, %v662, %v684
      %v686 = vsel %vm479, %v673, %v674
      %v687 = vsel %vm676, %v664, %v686
      %694 = vst [vmem:[#allocation4 + $0x90] sm:$0xff] %v677
      %695 = vst [vmem:[#allocation4 + $0x98] sm:$0xff] %v679
      %696 = vst [vmem:[#allocation4 + $0xa0] sm:$0xff] %v681
      %697 = vst [vmem:[#allocation4 + $0xa8] sm:$0xff] %v683
      %698 = vst [vmem:[#allocation4 + $0xb0] sm:$0xff] %v685
      %699 = vst [vmem:[#allocation4 + $0xb8] sm:$0xff] %v687
      %v700 = vld [vmem:[%s408 + $0x8] sm:$0xff]
      %v701 = vld [vmem:[%s408 + $0x10] sm:$0xff]
      %v702 = vld [vmem:[%s408 + $0x18] sm:$0xff]
      %v703 = vld [vmem:[%s408 + $0x30] sm:$0xff]
      %v704 = vld [vmem:[%s408 + $0x38] sm:$0xff]
      %v705 = vld [vmem:[%s408 + $0x40] sm:$0xff]
      %706 = vst [vmem:[#allocation4 + $0xc0] sm:$0xff] %v700
      %707 = vst [vmem:[#allocation4 + $0xc8] sm:$0xff] %v701
      %708 = vst [vmem:[#allocation4 + $0xd0] sm:$0xff] %v702
      %709 = vst [vmem:[#allocation4 + $0xd8] sm:$0xff] %v703
      %710 = vst [vmem:[#allocation4 + $0xe0] sm:$0xff] %v704
      %711 = vst [vmem:[#allocation4 + $0xe8] sm:$0xff] %v705
      %v712 = vld [vmem:[%s408 + $0x8] sm:$0xff]
      %v713 = vld [vmem:[%s408 + $0x10] sm:$0xff]
      %v714 = vld [vmem:[%s408 + $0x18] sm:$0xff]
      %v715 = vld [vmem:[%s408 + $0x20] sm:$0xf]
      %v716 = vld [vmem:[%s408 + $0x30] sm:$0xff]
      %v717 = vld [vmem:[%s408 + $0x38] sm:$0xff]
      %v718 = vld [vmem:[%s408 + $0x40] sm:$0xff]
      %v719 = vld [vmem:[%s408 + $0x48] sm:$0xf]
      %728 = vrot.lane.b32.xlu0 %v712, 127
      %v729 = vpop.permute.xlu0 %728
      %730 = vrot.lane.b32.xlu0 %v713, 127
      %v731 = vpop.permute.xlu0 %730
      %732 = vrot.lane.b32.xlu0 %v714, 127
      %v733 = vpop.permute.xlu0 %732
      %734 = vrot.lane.b32.xlu0 %v715, 127
      %v735 = vpop.permute.xlu0 %734
      %736 = vrot.lane.b32.xlu0 %v716, 127
      %v737 = vpop.permute.xlu0 %736
      %738 = vrot.lane.b32.xlu0 %v717, 127
      %v739 = vpop.permute.xlu0 %738
      %740 = vrot.lane.b32.xlu0 %v718, 127
      %v741 = vpop.permute.xlu0 %740
      %742 = vrot.lane.b32.xlu0 %v719, 127
      %v743 = vpop.permute.xlu0 %742
      %v744 = vrot.slane %v729, 4
      %v745 = vrot.slane %v731, 4
      %v746 = vrot.slane %v733, 4
      %v747 = vrot.slane %v735, 4
      %v748 = vrot.slane %v737, 4
      %v749 = vrot.slane %v739, 4
      %v750 = vrot.slane %v741, 4
      %v751 = vrot.slane %v743, 4
      %v752 = vsel %vm479, %v744, %v745
      %vm753 = vcmask 1039360
      %v754 = vsel %vm753, %v729, %v752
      %v755 = vsel %vm479, %v745, %v746
      %v756 = vsel %vm753, %v731, %v755
      %v757 = vsel %vm479, %v746, %v747
      %v758 = vsel %vm753, %v733, %v757
      %v759 = vsel %vm479, %v748, %v749
      %v760 = vsel %vm753, %v737, %v759
      %v761 = vsel %vm479, %v749, %v750
      %v762 = vsel %vm753, %v739, %v761
      %v763 = vsel %vm479, %v750, %v751
      %v764 = vsel %vm753, %v741, %v763
      %771 = vst [vmem:[#allocation4 + $0xf0] sm:$0xff] %v754
      %772 = vst [vmem:[#allocation4 + $0xf8] sm:$0xff] %v756
      %773 = vst [vmem:[#allocation4 + $0x100] sm:$0xff] %v758
      %774 = vst [vmem:[#allocation4 + $0x108] sm:$0xff] %v760
      %775 = vst [vmem:[#allocation4 + $0x110] sm:$0xff] %v762
      %776 = vst [vmem:[#allocation4 + $0x118] sm:$0xff] %v764
      %v777 = vld [vmem:[%s408 + $0x8] sm:$0xff]
      %v778 = vld [vmem:[%s408 + $0x10] sm:$0xff]
      %v779 = vld [vmem:[%s408 + $0x18] sm:$0xff]
      %v780 = vld [vmem:[%s408 + $0x20] sm:$0xf]
      %v781 = vld [vmem:[%s408 + $0x30] sm:$0xff]
      %v782 = vld [vmem:[%s408 + $0x38] sm:$0xff]
      %v783 = vld [vmem:[%s408 + $0x40] sm:$0xff]
      %v784 = vld [vmem:[%s408 + $0x48] sm:$0xf]
      %793 = vrot.lane.b32.xlu0 %v777, 119
      %v794 = vpop.permute.xlu0 %793
      %795 = vrot.lane.b32.xlu0 %v778, 119
      %v796 = vpop.permute.xlu0 %795
      %797 = vrot.lane.b32.xlu0 %v779, 119
      %v798 = vpop.permute.xlu0 %797
      %799 = vrot.lane.b32.xlu0 %v780, 119
      %v800 = vpop.permute.xlu0 %799
      %801 = vrot.lane.b32.xlu0 %v781, 119
      %v802 = vpop.permute.xlu0 %801
      %803 = vrot.lane.b32.xlu0 %v782, 119
      %v804 = vpop.permute.xlu0 %803
      %805 = vrot.lane.b32.xlu0 %v783, 119
      %v806 = vpop.permute.xlu0 %805
      %807 = vrot.lane.b32.xlu0 %v784, 119
      %v808 = vpop.permute.xlu0 %807
      %v809 = vrot.slane %v794, 4
      %v810 = vrot.slane %v796, 4
      %v811 = vrot.slane %v798, 4
      %v812 = vrot.slane %v800, 4
      %v813 = vrot.slane %v802, 4
      %v814 = vrot.slane %v804, 4
      %v815 = vrot.slane %v806, 4
      %v816 = vrot.slane %v808, 4
      %v817 = vsel %vm479, %v809, %v810
      %vm818 = vcmask 973824
      %v819 = vsel %vm818, %v794, %v817
      %v820 = vsel %vm479, %v810, %v811
      %v821 = vsel %vm818, %v796, %v820
      %v822 = vsel %vm479, %v811, %v812
      %v823 = vsel %vm818, %v798, %v822
      %v824 = vsel %vm479, %v813, %v814
      %v825 = vsel %vm818, %v802, %v824
      %v826 = vsel %vm479, %v814, %v815
      %v827 = vsel %vm818, %v804, %v826
      %v828 = vsel %vm479, %v815, %v816
      %v829 = vsel %vm818, %v806, %v828
      %836 = vst [vmem:[#allocation4 + $0x120] sm:$0xff] %v819
      %837 = vst [vmem:[#allocation4 + $0x128] sm:$0xff] %v821
      %838 = vst [vmem:[#allocation4 + $0x130] sm:$0xff] %v823
      %839 = vst [vmem:[#allocation4 + $0x138] sm:$0xff] %v825
      %840 = vst [vmem:[#allocation4 + $0x140] sm:$0xff] %v827
      %841 = vst [vmem:[#allocation4 + $0x148] sm:$0xff] %v829
      %v842 = vld [vmem:[%s408 + $0x8] sm:$0xff]
      %v843 = vld [vmem:[%s408 + $0x10] sm:$0xff]
      %v844 = vld [vmem:[%s408 + $0x18] sm:$0xff]
      %v845 = vld [vmem:[%s408 + $0x20] sm:$0xf]
      %v846 = vld [vmem:[%s408 + $0x30] sm:$0xff]
      %v847 = vld [vmem:[%s408 + $0x38] sm:$0xff]
      %v848 = vld [vmem:[%s408 + $0x40] sm:$0xff]
      %v849 = vld [vmem:[%s408 + $0x48] sm:$0xf]
      %858 = vrot.lane.b32.xlu0 %v842, 118
      %v859 = vpop.permute.xlu0 %858
      %860 = vrot.lane.b32.xlu0 %v843, 118
      %v861 = vpop.permute.xlu0 %860
      %862 = vrot.lane.b32.xlu0 %v844, 118
      %v863 = vpop.permute.xlu0 %862
      %864 = vrot.lane.b32.xlu0 %v845, 118
      %v865 = vpop.permute.xlu0 %864
      %866 = vrot.lane.b32.xlu0 %v846, 118
      %v867 = vpop.permute.xlu0 %866
      %868 = vrot.lane.b32.xlu0 %v847, 118
      %v869 = vpop.permute.xlu0 %868
      %870 = vrot.lane.b32.xlu0 %v848, 118
      %v871 = vpop.permute.xlu0 %870
      %872 = vrot.lane.b32.xlu0 %v849, 118
      %v873 = vpop.permute.xlu0 %872
      %v874 = vrot.slane %v859, 4
      %v875 = vrot.slane %v861, 4
      %v876 = vrot.slane %v863, 4
      %v877 = vrot.slane %v865, 4
      %v878 = vrot.slane %v867, 4
      %v879 = vrot.slane %v869, 4
      %v880 = vrot.slane %v871, 4
      %v881 = vrot.slane %v873, 4
      %v882 = vsel %vm479, %v874, %v875
      %vm883 = vcmask 965632
      %v884 = vsel %vm883, %v859, %v882
      %v885 = vsel %vm479, %v875, %v876
      %v886 = vsel %vm883, %v861, %v885
      %v887 = vsel %vm479, %v876, %v877
      %v888 = vsel %vm883, %v863, %v887
      %v889 = vsel %vm479, %v878, %v879
      %v890 = vsel %vm883, %v867, %v889
      %v891 = vsel %vm479, %v879, %v880
      %v892 = vsel %vm883, %v869, %v891
      %v893 = vsel %vm479, %v880, %v881
      %v894 = vsel %vm883, %v871, %v893
      %901 = vst [vmem:[#allocation4 + $0x150] sm:$0xff] %v884
      %902 = vst [vmem:[#allocation4 + $0x158] sm:$0xff] %v886
      %903 = vst [vmem:[#allocation4 + $0x160] sm:$0xff] %v888
      %904 = vst [vmem:[#allocation4 + $0x168] sm:$0xff] %v890
      %905 = vst [vmem:[#allocation4 + $0x170] sm:$0xff] %v892
      %906 = vst [vmem:[#allocation4 + $0x178] sm:$0xff] %v894
      %v907 = vld [vmem:[%s408 + $0x8] sm:$0xff]
      %v908 = vld [vmem:[%s408 + $0x10] sm:$0xff]
      %v909 = vld [vmem:[%s408 + $0x18] sm:$0xff]
      %v910 = vld [vmem:[%s408 + $0x20] sm:$0xf]
      %v911 = vld [vmem:[%s408 + $0x30] sm:$0xff]
      %v912 = vld [vmem:[%s408 + $0x38] sm:$0xff]
      %v913 = vld [vmem:[%s408 + $0x40] sm:$0xff]
      %v914 = vld [vmem:[%s408 + $0x48] sm:$0xf]
      %923 = vrot.lane.b32.xlu0 %v907, 117
      %v924 = vpop.permute.xlu0 %923
      %925 = vrot.lane.b32.xlu0 %v908, 117
      %v926 = vpop.permute.xlu0 %925
      %927 = vrot.lane.b32.xlu0 %v909, 117
      %v928 = vpop.permute.xlu0 %927
      %929 = vrot.lane.b32.xlu0 %v910, 117
      %v930 = vpop.permute.xlu0 %929
      %931 = vrot.lane.b32.xlu0 %v911, 117
      %v932 = vpop.permute.xlu0 %931
      %933 = vrot.lane.b32.xlu0 %v912, 117
      %v934 = vpop.permute.xlu0 %933
      %935 = vrot.lane.b32.xlu0 %v913, 117
      %v936 = vpop.permute.xlu0 %935
      %937 = vrot.lane.b32.xlu0 %v914, 117
      %v938 = vpop.permute.xlu0 %937
      %v939 = vrot.slane %v924, 4
      %v940 = vrot.slane %v926, 4
      %v941 = vrot.slane %v928, 4
      %v942 = vrot.slane %v930, 4
      %v943 = vrot.slane %v932, 4
      %v944 = vrot.slane %v934, 4
      %v945 = vrot.slane %v936, 4
      %v946 = vrot.slane %v938, 4
      %v947 = vsel %vm479, %v939, %v940
      %vm948 = vcmask 957440
      %v949 = vsel %vm948, %v924, %v947
      %v950 = vsel %vm479, %v940, %v941
      %v951 = vsel %vm948, %v926, %v950
      %v952 = vsel %vm479, %v941, %v942
      %v953 = vsel %vm948, %v928, %v952
      %v954 = vsel %vm479, %v943, %v944
      %v955 = vsel %vm948, %v932, %v954
      %v956 = vsel %vm479, %v944, %v945
      %v957 = vsel %vm948, %v934, %v956
      %v958 = vsel %vm479, %v945, %v946
      %v959 = vsel %vm948, %v936, %v958
      %966 = vst [vmem:[#allocation4 + $0x180] sm:$0xff] %v949
      %967 = vst [vmem:[#allocation4 + $0x188] sm:$0xff] %v951
      %968 = vst [vmem:[#allocation4 + $0x190] sm:$0xff] %v953
      %969 = vst [vmem:[#allocation4 + $0x198] sm:$0xff] %v955
      %970 = vst [vmem:[#allocation4 + $0x1a0] sm:$0xff] %v957
      %971 = vst [vmem:[#allocation4 + $0x1a8] sm:$0xff] %v959
      %v972 = vld [vmem:[#allocation4] sm:$0xff]
      %v973 = vld [vmem:[#allocation4 + $0x8] sm:$0xff]
      %v974 = vld [vmem:[#allocation4 + $0x10] sm:$0xff]
      %v975 = vld [vmem:[#allocation4 + $0x18] sm:$0xff]
      %v976 = vld [vmem:[#allocation4 + $0x20] sm:$0xff]
      %v977 = vld [vmem:[#allocation4 + $0x28] sm:$0xff]
      %v978 = vld [vmem:[#allocation4 + $0x30] sm:$0xff]
      %v979 = vld [vmem:[#allocation4 + $0x38] sm:$0xff]
      %v980 = vld [vmem:[#allocation4 + $0x40] sm:$0xff]
      %v981 = vld [vmem:[#allocation4 + $0x48] sm:$0xff]
      %v982 = vld [vmem:[#allocation4 + $0x50] sm:$0xff]
      %v983 = vld [vmem:[#allocation4 + $0x58] sm:$0xff]
      %v984 = vld [vmem:[#allocation4 + $0x60] sm:$0xff]
      %v985 = vld [vmem:[#allocation4 + $0x68] sm:$0xff]
      %v986 = vld [vmem:[#allocation4 + $0x70] sm:$0xff]
      %v987 = vld [vmem:[#allocation4 + $0x78] sm:$0xff]
      %v988 = vld [vmem:[#allocation4 + $0x80] sm:$0xff]
      %v989 = vld [vmem:[#allocation4 + $0x88] sm:$0xff]
      %v990 = vld [vmem:[#allocation4 + $0x90] sm:$0xff]
      %v991 = vld [vmem:[#allocation4 + $0x98] sm:$0xff]
      %v992 = vld [vmem:[#allocation4 + $0xa0] sm:$0xff]
      %v993 = vld [vmem:[#allocation4 + $0xa8] sm:$0xff]
      %v994 = vld [vmem:[#allocation4 + $0xb0] sm:$0xff]
      %v995 = vld [vmem:[#allocation4 + $0xb8] sm:$0xff]
      %v996 = vld [vmem:[#allocation4 + $0xc0] sm:$0xff]
      %v997 = vld [vmem:[#allocation4 + $0xc8] sm:$0xff]
      %v998 = vld [vmem:[#allocation4 + $0xd0] sm:$0xff]
      %v999 = vld [vmem:[#allocation4 + $0xd8] sm:$0xff]
      %v1000 = vld [vmem:[#allocation4 + $0xe0] sm:$0xff]
      %v1001 = vld [vmem:[#allocation4 + $0xe8] sm:$0xff]
      %v1002 = vld [vmem:[#allocation4 + $0xf0] sm:$0xff]
      %v1003 = vld [vmem:[#allocation4 + $0xf8] sm:$0xff]
      %v1004 = vld [vmem:[#allocation4 + $0x100] sm:$0xff]
      %v1005 = vld [vmem:[#allocation4 + $0x108] sm:$0xff]
      %v1006 = vld [vmem:[#allocation4 + $0x110] sm:$0xff]
      %v1007 = vld [vmem:[#allocation4 + $0x118] sm:$0xff]
      %v1008 = vld [vmem:[#allocation4 + $0x120] sm:$0xff]
      %v1009 = vld [vmem:[#allocation4 + $0x128] sm:$0xff]
      %v1010 = vld [vmem:[#allocation4 + $0x130] sm:$0xff]
      %v1011 = vld [vmem:[#allocation4 + $0x138] sm:$0xff]
      %v1012 = vld [vmem:[#allocation4 + $0x140] sm:$0xff]
      %v1013 = vld [vmem:[#allocation4 + $0x148] sm:$0xff]
      %v1014 = vld [vmem:[#allocation4 + $0x150] sm:$0xff]
      %v1015 = vld [vmem:[#allocation4 + $0x158] sm:$0xff]
      %v1016 = vld [vmem:[#allocation4 + $0x160] sm:$0xff]
      %v1017 = vld [vmem:[#allocation4 + $0x168] sm:$0xff]
      %v1018 = vld [vmem:[#allocation4 + $0x170] sm:$0xff]
      %v1019 = vld [vmem:[#allocation4 + $0x178] sm:$0xff]
      %v1020 = vld [vmem:[#allocation4 + $0x180] sm:$0xff]
      %v1021 = vld [vmem:[#allocation4 + $0x188] sm:$0xff]
      %v1022 = vld [vmem:[#allocation4 + $0x190] sm:$0xff]
      %v1023 = vld [vmem:[#allocation4 + $0x198] sm:$0xff]
      %v1024 = vld [vmem:[#allocation4 + $0x1a0] sm:$0xff]
      %v1025 = vld [vmem:[#allocation4 + $0x1a8] sm:$0xff]
      %1027 = vset.pattern.permute.xlu0 0
      %1028 = vperm.xlu0 %1027, %v437
      %v1029 = vpop.permute.xlu0 %1028
      %1032 = vset.pattern.permute.xlu0 0
      %1033 = vperm.xlu0 %1032, %v438
      %v1034 = vpop.permute.xlu0 %1033
      %v1038 = vunpack.c.l.b16 %v435
      %v1039 = vunpack.c.h.b16 %v435
      %v1040 = vunpack.c.l.b16 %v436
      %v1041 = vunpack.c.h.b16 %v436
      %v1042 = vpack.c.b16 %v1040, %v1038
      %v1043 = vpack.c.b16 %v1041, %v1039
      %v1099 = vunpack.c.l.b16 %v972
      %v1100 = vunpack.c.h.b16 %v972
      %v1101 = vunpack.c.l.b16 %v973
      %v1102 = vunpack.c.h.b16 %v973
      %v1103 = vunpack.c.l.b16 %v974
      %v1104 = vunpack.c.h.b16 %v974
      %v1105 = vunpack.c.l.b16 %v975
      %v1106 = vunpack.c.h.b16 %v975
      %v1107 = vunpack.c.l.b16 %v976
      %v1108 = vunpack.c.h.b16 %v976
      %v1109 = vunpack.c.l.b16 %v977
      %v1110 = vunpack.c.h.b16 %v977
      %v1111 = vunpack.c.l.b16 %v978
      %v1112 = vunpack.c.h.b16 %v978
      %v1113 = vunpack.c.l.b16 %v979
      %v1114 = vunpack.c.h.b16 %v979
      %v1115 = vunpack.c.l.b16 %v980
      %v1116 = vunpack.c.h.b16 %v980
      %v1117 = vunpack.c.l.b16 %v981
      %v1118 = vunpack.c.h.b16 %v981
      %v1119 = vunpack.c.l.b16 %v982
      %v1120 = vunpack.c.h.b16 %v982
      %v1121 = vunpack.c.l.b16 %v983
      %v1122 = vunpack.c.h.b16 %v983
      %v1123 = vunpack.c.l.b16 %v984
      %v1124 = vunpack.c.h.b16 %v984
      %v1125 = vunpack.c.l.b16 %v985
      %v1126 = vunpack.c.h.b16 %v985
      %v1127 = vunpack.c.l.b16 %v986
      %v1128 = vunpack.c.h.b16 %v986
      %v1129 = vunpack.c.l.b16 %v987
      %v1130 = vunpack.c.h.b16 %v987
      %v1131 = vunpack.c.l.b16 %v988
      %v1132 = vunpack.c.h.b16 %v988
      %v1133 = vunpack.c.l.b16 %v989
      %v1134 = vunpack.c.h.b16 %v989
      %v1135 = vunpack.c.l.b16 %v990
      %v1136 = vunpack.c.h.b16 %v990
      %v1137 = vunpack.c.l.b16 %v991
      %v1138 = vunpack.c.h.b16 %v991
      %v1139 = vunpack.c.l.b16 %v992
      %v1140 = vunpack.c.h.b16 %v992
      %v1141 = vunpack.c.l.b16 %v993
      %v1142 = vunpack.c.h.b16 %v993
      %v1143 = vunpack.c.l.b16 %v994
      %v1144 = vunpack.c.h.b16 %v994
      %v1145 = vunpack.c.l.b16 %v995
      %v1146 = vunpack.c.h.b16 %v995
      %v1147 = vunpack.c.l.b16 %v996
      %v1148 = vunpack.c.h.b16 %v996
      %v1149 = vunpack.c.l.b16 %v997
      %v1150 = vunpack.c.h.b16 %v997
      %v1151 = vunpack.c.l.b16 %v998
      %v1152 = vunpack.c.h.b16 %v998
      %v1153 = vunpack.c.l.b16 %v999
      %v1154 = vunpack.c.h.b16 %v999
      %v1155 = vunpack.c.l.b16 %v1000
      %v1156 = vunpack.c.h.b16 %v1000
      %v1157 = vunpack.c.l.b16 %v1001
      %v1158 = vunpack.c.h.b16 %v1001
      %v1159 = vunpack.c.l.b16 %v1002
      %v1160 = vunpack.c.h.b16 %v1002
      %v1161 = vunpack.c.l.b16 %v1003
      %v1162 = vunpack.c.h.b16 %v1003
      %v1163 = vunpack.c.l.b16 %v1004
      %v1164 = vunpack.c.h.b16 %v1004
      %v1165 = vunpack.c.l.b16 %v1005
      %v1166 = vunpack.c.h.b16 %v1005
      %v1167 = vunpack.c.l.b16 %v1006
      %v1168 = vunpack.c.h.b16 %v1006
      %v1169 = vunpack.c.l.b16 %v1007
      %v1170 = vunpack.c.h.b16 %v1007
      %v1171 = vunpack.c.l.b16 %v1008
      %v1172 = vunpack.c.h.b16 %v1008
      %v1173 = vunpack.c.l.b16 %v1009
      %v1174 = vunpack.c.h.b16 %v1009
      %v1175 = vunpack.c.l.b16 %v1010
      %v1176 = vunpack.c.h.b16 %v1010
      %v1177 = vunpack.c.l.b16 %v1011
      %v1178 = vunpack.c.h.b16 %v1011
      %v1179 = vunpack.c.l.b16 %v1012
      %v1180 = vunpack.c.h.b16 %v1012
      %v1181 = vunpack.c.l.b16 %v1013
      %v1182 = vunpack.c.h.b16 %v1013
      %v1183 = vunpack.c.l.b16 %v1014
      %v1184 = vunpack.c.h.b16 %v1014
      %v1185 = vunpack.c.l.b16 %v1015
      %v1186 = vunpack.c.h.b16 %v1015
      %v1187 = vunpack.c.l.b16 %v1016
      %v1188 = vunpack.c.h.b16 %v1016
      %v1189 = vunpack.c.l.b16 %v1017
      %v1190 = vunpack.c.h.b16 %v1017
      %v1191 = vunpack.c.l.b16 %v1018
      %v1192 = vunpack.c.h.b16 %v1018
      %v1193 = vunpack.c.l.b16 %v1019
      %v1194 = vunpack.c.h.b16 %v1019
      %v1195 = vunpack.c.l.b16 %v1020
      %v1196 = vunpack.c.h.b16 %v1020
      %v1197 = vunpack.c.l.b16 %v1021
      %v1198 = vunpack.c.h.b16 %v1021
      %v1199 = vunpack.c.l.b16 %v1022
      %v1200 = vunpack.c.h.b16 %v1022
      %v1201 = vunpack.c.l.b16 %v1023
      %v1202 = vunpack.c.h.b16 %v1023
      %v1203 = vunpack.c.l.b16 %v1024
      %v1204 = vunpack.c.h.b16 %v1024
      %v1205 = vunpack.c.l.b16 %v1025
      %v1206 = vunpack.c.h.b16 %v1025
      %v1207 = vpack.c.b16 %v1105, %v1099
      %v1208 = vpack.c.b16 %v1106, %v1100
      %v1209 = vpack.c.b16 %v1107, %v1101
      %v1210 = vpack.c.b16 %v1108, %v1102
      %v1211 = vpack.c.b16 %v1109, %v1103
      %v1212 = vpack.c.b16 %v1110, %v1104
      %v1213 = vpack.c.b16 %v1117, %v1111
      %v1214 = vpack.c.b16 %v1118, %v1112
      %v1215 = vpack.c.b16 %v1119, %v1113
      %v1216 = vpack.c.b16 %v1120, %v1114
      %v1217 = vpack.c.b16 %v1121, %v1115
      %v1218 = vpack.c.b16 %v1122, %v1116
      %v1219 = vpack.c.b16 %v1129, %v1123
      %v1220 = vpack.c.b16 %v1130, %v1124
      %v1221 = vpack.c.b16 %v1131, %v1125
      %v1222 = vpack.c.b16 %v1132, %v1126
      %v1223 = vpack.c.b16 %v1133, %v1127
      %v1224 = vpack.c.b16 %v1134, %v1128
      %v1225 = vpack.c.b16 %v1141, %v1135
      %v1226 = vpack.c.b16 %v1142, %v1136
      %v1227 = vpack.c.b16 %v1143, %v1137
      %v1228 = vpack.c.b16 %v1144, %v1138
      %v1229 = vpack.c.b16 %v1145, %v1139
      %v1230 = vpack.c.b16 %v1146, %v1140
      %v1231 = vpack.c.b16 %v1153, %v1147
      %v1232 = vpack.c.b16 %v1154, %v1148
      %v1233 = vpack.c.b16 %v1155, %v1149
      %v1234 = vpack.c.b16 %v1156, %v1150
      %v1235 = vpack.c.b16 %v1157, %v1151
      %v1236 = vpack.c.b16 %v1158, %v1152
      %v1237 = vpack.c.b16 %v1165, %v1159
      %v1238 = vpack.c.b16 %v1166, %v1160
      %v1239 = vpack.c.b16 %v1167, %v1161
      %v1240 = vpack.c.b16 %v1168, %v1162
      %v1241 = vpack.c.b16 %v1169, %v1163
      %v1242 = vpack.c.b16 %v1170, %v1164
      %v1243 = vpack.c.b16 %v1177, %v1171
      %v1244 = vpack.c.b16 %v1178, %v1172
      %v1245 = vpack.c.b16 %v1179, %v1173
      %v1246 = vpack.c.b16 %v1180, %v1174
      %v1247 = vpack.c.b16 %v1181, %v1175
      %v1248 = vpack.c.b16 %v1182, %v1176
      %v1249 = vpack.c.b16 %v1189, %v1183
      %v1250 = vpack.c.b16 %v1190, %v1184
      %v1251 = vpack.c.b16 %v1191, %v1185
      %v1252 = vpack.c.b16 %v1192, %v1186
      %v1253 = vpack.c.b16 %v1193, %v1187
      %v1254 = vpack.c.b16 %v1194, %v1188
      %v1255 = vpack.c.b16 %v1201, %v1195
      %v1256 = vpack.c.b16 %v1202, %v1196
      %v1257 = vpack.c.b16 %v1203, %v1197
      %v1258 = vpack.c.b16 %v1204, %v1198
      %v1259 = vpack.c.b16 %v1205, %v1199
      %v1260 = vpack.c.b16 %v1206, %v1200
      %vm1315 = vcmask 130048
      %v1317 = vsel %vm1315, %v1043, 0
      %1319 = vmatprep.subr.bf16.mxu0 %v1250
      %1320 = vmatpush1.bf16.msra.mxu0 %v1249
      %1321 = vmatprep.subr.bf16.mxu0 %v1244
      %1322 = vmatpush1.bf16.msra.mxu0 %v1243
      %1323 = vmatprep.subr.bf16.mxu0 %v1238
      %1324 = vmatpush1.bf16.msra.mxu0 %v1237
      %1325 = vmatprep.subr.bf16.mxu0 %v1232
      %1326 = vmatpush1.bf16.msra.mxu0 %v1231
      %1327 = vmatprep.subr.bf16.mxu0 %v1226
      %1328 = vmatpush1.bf16.msra.mxu0 %v1225
      %1329 = vmatprep.subr.bf16.mxu0 %v1220
      %1330 = vmatpush1.bf16.msra.mxu0 %v1219
      %1331 = vmatprep.subr.bf16.mxu0 %v1214
      %1332 = vmatpush1.bf16.msra.mxu0 %v1213
      %1333 = vmatprep.subr.bf16.mxu0 %v1208
      %1334 = vmatpush1.bf16.msra.mxu0 %v1207
      %1335 = vmatprep.subr.bf16.mxu0 0
      %1336 = vmatpush2.bf16.msra.mxu0 0
      %1337 = vmatprep.subr.bf16.mxu0 0
      %1338 = vmatpush2.bf16.msra.mxu0 0
      %1339 = vmatprep.subr.bf16.mxu0 0
      %1340 = vmatpush2.bf16.msra.mxu0 0
      %1341 = vmatprep.subr.bf16.mxu0 0
      %1342 = vmatpush2.bf16.msra.mxu0 0
      %1343 = vmatprep.subr.bf16.mxu0 0
      %1344 = vmatpush2.bf16.msra.mxu0 0
      %1345 = vmatprep.subr.bf16.mxu0 0
      %1346 = vmatpush2.bf16.msra.mxu0 0
      %1347 = vmatprep.subr.bf16.mxu0 0
      %1348 = vmatpush2.bf16.msra.mxu0 0
      %1349 = vmatprep.subr.bf16.mxu0 %v1256
      %1350 = vmatpush2.bf16.msra.mxu0 %v1255
      %1351 = vmatprep.mubr.bf16.mxu0 %v1317
      %1352 = vmatmul.mubr.bf16.gmra.mxu0 %v1042
      %v1353 = vpop.f32.mrf.mxu0
      %v1354 = vadd.f32 %v1029, %v1353
      %v1355 = vpop.f32.mrf.mxu0
      %v1356 = vadd.f32 %v1029, %v1355
      %v1357 = vpop.f32.mrf.mxu0
      %v1358 = vadd.f32 %v1034, %v1357
      %v1359 = vpop.f32.mrf.mxu0
      %v1360 = vadd.f32 %v1034, %v1359
      %1361 = vdwg.mxu0
      %1362 = vmatprep.subr.bf16.mxu0 %v1252
      %1363 = vmatpush1.bf16.msra.mxu0 %v1251
      %1364 = vmatprep.subr.bf16.mxu0 %v1246
      %1365 = vmatpush1.bf16.msra.mxu0 %v1245
      %1366 = vmatprep.subr.bf16.mxu0 %v1240
      %1367 = vmatpush1.bf16.msra.mxu0 %v1239
      %1368 = vmatprep.subr.bf16.mxu0 %v1234
      %1369 = vmatpush1.bf16.msra.mxu0 %v1233
      %1370 = vmatprep.subr.bf16.mxu0 %v1228
      %1371 = vmatpush1.bf16.msra.mxu0 %v1227
      %1372 = vmatprep.subr.bf16.mxu0 %v1222
      %1373 = vmatpush1.bf16.msra.mxu0 %v1221
      %1374 = vmatprep.subr.bf16.mxu0 %v1216
      %1375 = vmatpush1.bf16.msra.mxu0 %v1215
      %1376 = vmatprep.subr.bf16.mxu0 %v1210
      %1377 = vmatpush1.bf16.msra.mxu0 %v1209
      %1378 = vmatprep.subr.bf16.mxu0 0
      %1379 = vmatpush2.bf16.msra.mxu0 0
      %1380 = vmatprep.subr.bf16.mxu0 0
      %1381 = vmatpush2.bf16.msra.mxu0 0
      %1382 = vmatprep.subr.bf16.mxu0 0
      %1383 = vmatpush2.bf16.msra.mxu0 0
      %1384 = vmatprep.subr.bf16.mxu0 0
      %1385 = vmatpush2.bf16.msra.mxu0 0
      %1386 = vmatprep.subr.bf16.mxu0 0
      %1387 = vmatpush2.bf16.msra.mxu0 0
      %1388 = vmatprep.subr.bf16.mxu0 0
      %1389 = vmatpush2.bf16.msra.mxu0 0
      %1390 = vmatprep.subr.bf16.mxu0 0
      %1391 = vmatpush2.bf16.msra.mxu0 0
      %1392 = vmatprep.subr.bf16.mxu0 %v1258
      %1393 = vmatpush2.bf16.msra.mxu0 %v1257
      %1394 = vmatprep.mubr.bf16.mxu0 %v1317
      %1395 = vmatmul.mubr.bf16.gmra.mxu0 %v1042
      %v1396 = vpop.f32.mrf.mxu0
      %v1397 = vadd.f32 %v1029, %v1396
      %v1398 = vpop.f32.mrf.mxu0
      %v1399 = vadd.f32 %v1029, %v1398
      %v1400 = vpop.f32.mrf.mxu0
      %v1401 = vadd.f32 %v1034, %v1400
      %v1402 = vpop.f32.mrf.mxu0
      %v1403 = vadd.f32 %v1034, %v1402
      %1404 = vdwg.mxu0
      %1405 = vmatprep.subr.bf16.mxu0 %v1254
      %1406 = vmatpush1.bf16.msra.mxu0 %v1253
      %1407 = vmatprep.subr.bf16.mxu0 %v1248
      %1408 = vmatpush1.bf16.msra.mxu0 %v1247
      %1409 = vmatprep.subr.bf16.mxu0 %v1242
      %1410 = vmatpush1.bf16.msra.mxu0 %v1241
      %1411 = vmatprep.subr.bf16.mxu0 %v1236
      %1412 = vmatpush1.bf16.msra.mxu0 %v1235
      %1413 = vmatprep.subr.bf16.mxu0 %v1230
      %1414 = vmatpush1.bf16.msra.mxu0 %v1229
      %1415 = vmatprep.subr.bf16.mxu0 %v1224
      %1416 = vmatpush1.bf16.msra.mxu0 %v1223
      %1417 = vmatprep.subr.bf16.mxu0 %v1218
      %1418 = vmatpush1.bf16.msra.mxu0 %v1217
      %1419 = vmatprep.subr.bf16.mxu0 %v1212
      %1420 = vmatpush1.bf16.msra.mxu0 %v1211
      %1421 = vmatprep.subr.bf16.mxu0 0
      %1422 = vmatpush2.bf16.msra.mxu0 0
      %1423 = vmatprep.subr.bf16.mxu0 0
      %1424 = vmatpush2.bf16.msra.mxu0 0
      %1425 = vmatprep.subr.bf16.mxu0 0
      %1426 = vmatpush2.bf16.msra.mxu0 0
      %1427 = vmatprep.subr.bf16.mxu0 0
      %1428 = vmatpush2.bf16.msra.mxu0 0
      %1429 = vmatprep.subr.bf16.mxu0 0
      %1430 = vmatpush2.bf16.msra.mxu0 0
      %1431 = vmatprep.subr.bf16.mxu0 0
      %1432 = vmatpush2.bf16.msra.mxu0 0
      %1433 = vmatprep.subr.bf16.mxu0 0
      %1434 = vmatpush2.bf16.msra.mxu0 0
      %1435 = vmatprep.subr.bf16.mxu0 %v1260
      %1436 = vmatpush2.bf16.msra.mxu0 %v1259
      %1437 = vmatprep.mubr.bf16.mxu0 %v1317
      %1438 = vmatmul.mubr.bf16.gmra.mxu0 %v1042
      %v1439 = vpop.f32.mrf.mxu0
      %v1440 = vadd.f32 %v1029, %v1439
      %v1441 = vpop.f32.mrf.mxu0
      %v1442 = vadd.f32 %v1029, %v1441
      %v1443 = vpop.f32.mrf.mxu0
      %v1444 = vadd.f32 %v1034, %v1443
      %v1445 = vpop.f32.mrf.mxu0
      %v1446 = vadd.f32 %v1034, %v1445
      %1447 = vdwg.mxu0
      %v1448 = vmax.f32 %v1354, 0.0
      %v1449 = vmax.f32 %v1356, 0.0
      %v1450 = vmax.f32 %v1397, 0.0
      %v1451 = vmax.f32 %v1399, 0.0
      %v1452 = vmax.f32 %v1440, 0.0
      %v1453 = vmax.f32 %v1442, 0.0
      %v1454 = vmax.f32 %v1358, 0.0
      %v1455 = vmax.f32 %v1360, 0.0
      %v1456 = vmax.f32 %v1401, 0.0
      %v1457 = vmax.f32 %v1403, 0.0
      %v1458 = vmax.f32 %v1444, 0.0
      %v1459 = vmax.f32 %v1446, 0.0
      %v1460 = vld [vmem:[%s1] sm:$0x3f]
      %v1462 = vlaneseq
      %v1463 = vshrl.u32 %v1462, 7
      %v1464 = vsub.s32 0, %v1463
      %v1465 = vrot.slane %v1460, %v1464
      %v1466 = vlaneseq
      %v1467 = vshrl.u32 %v1466, 7
      %v1468 = vsub.s32 1, %v1467
      %v1469 = vrot.slane %v1460, %v1468
      %v1470 = vlaneseq
      %v1471 = vshrl.u32 %v1470, 7
      %v1472 = vsub.s32 2, %v1471
      %v1473 = vrot.slane %v1460, %v1472
      %v1474 = vlaneseq
      %v1475 = vshrl.u32 %v1474, 7
      %v1476 = vsub.s32 3, %v1475
      %v1477 = vrot.slane %v1460, %v1476
      %v1478 = vlaneseq
      %v1479 = vshrl.u32 %v1478, 7
      %v1480 = vsub.s32 4, %v1479
      %v1481 = vrot.slane %v1460, %v1480
      %v1482 = vlaneseq
      %v1483 = vshrl.u32 %v1482, 7
      %v1484 = vsub.s32 5, %v1483
      %v1485 = vrot.slane %v1460, %v1484
      %v1492 = vmul.f32 %v1448, %v1465
      %v1493 = vmul.f32 %v1449, %v1469
      %v1494 = vmul.f32 %v1450, %v1473
      %v1495 = vmul.f32 %v1451, %v1477
      %v1496 = vmul.f32 %v1452, %v1481
      %v1497 = vmul.f32 %v1453, %v1485
      %v1498 = vmul.f32 %v1454, %v1465
      %v1499 = vmul.f32 %v1455, %v1469
      %v1500 = vmul.f32 %v1456, %v1473
      %v1501 = vmul.f32 %v1457, %v1477
      %v1502 = vmul.f32 %v1458, %v1481
      %v1503 = vmul.f32 %v1459, %v1485
      %v1504 = vpack.c.bf16 %v1498, %v1492
      %v1505 = vpack.c.bf16 %v1499, %v1493
      %v1506 = vpack.c.bf16 %v1500, %v1494
      %v1507 = vpack.c.bf16 %v1501, %v1495
      %v1508 = vpack.c.bf16 %v1502, %v1496
      %v1509 = vpack.c.bf16 %v1503, %v1497
      %v1516 = vunpack.c.l.b16 %v1504
      %v1517 = vunpack.c.l.b16 %v1505
      %v1518 = vunpack.c.l.b16 %v1506
      %v1519 = vunpack.c.l.b16 %v1507
      %v1520 = vunpack.c.l.b16 %v1508
      %v1521 = vunpack.c.l.b16 %v1509
      %v1522 = vunpack.c.h.b16 %v1504
      %v1523 = vunpack.c.h.b16 %v1505
      %v1524 = vunpack.c.h.b16 %v1506
      %v1525 = vunpack.c.h.b16 %v1507
      %v1526 = vunpack.c.h.b16 %v1508
      %v1527 = vunpack.c.h.b16 %v1509
      %v1528 = vpack.c.b16 %v1517, %v1516
      %v1529 = vpack.c.b16 %v1519, %v1518
      %v1530 = vpack.c.b16 %v1521, %v1520
      %v1531 = vpack.c.b16 %v1523, %v1522
      %v1532 = vpack.c.b16 %v1525, %v1524
      %v1533 = vpack.c.b16 %v1527, %v1526
      %1540 = vst [vmem:[#allocation2 + $0x8] sm:$0xff] %v1528
      %1541 = vst [vmem:[#allocation2 + $0x10] sm:$0xff] %v1529
      %1542 = vst [vmem:[#allocation2 + $0x18] sm:$0xff] %v1530
      %1543 = vst [vmem:[#allocation2 + $0x30] sm:$0xff] %v1531
      %1544 = vst [vmem:[#allocation2 + $0x38] sm:$0xff] %v1532
      %1545 = vst [vmem:[#allocation2 + $0x40] sm:$0xff] %v1533
      %v1546 = vld [vmem:[%s4] sm:$0xff]
      %v1547 = vld [vmem:[%s4 + $0x8] sm:$0xff]
      %v1548 = vld [vmem:[%s5] sm:$0xff]
      %v1549 = vld [vmem:[%s5 + $0x8] sm:$0xff]
      %v1550 = vld [vmem:[#allocation2 + $0x4] sm:$0xff]
      %v1551 = vld [vmem:[#allocation2 + $0xc] sm:$0xff]
      %v1552 = vld [vmem:[#allocation2 + $0x14] sm:$0xff]
      %v1553 = vld [vmem:[#allocation2 + $0x1c] sm:$0xf]
      %v1554 = vld [vmem:[#allocation2 + $0x2c] sm:$0xff]
      %v1555 = vld [vmem:[#allocation2 + $0x34] sm:$0xff]
      %v1556 = vld [vmem:[#allocation2 + $0x3c] sm:$0xff]
      %v1557 = vld [vmem:[#allocation2 + $0x44] sm:$0xf]
      %1566 = vrot.lane.b32.xlu0 %v1550, 11
      %v1567 = vpop.permute.xlu0 %1566
      %1568 = vrot.lane.b32.xlu0 %v1551, 11
      %v1569 = vpop.permute.xlu0 %1568
      %1570 = vrot.lane.b32.xlu0 %v1552, 11
      %v1571 = vpop.permute.xlu0 %1570
      %1572 = vrot.lane.b32.xlu0 %v1553, 11
      %v1573 = vpop.permute.xlu0 %1572
      %1574 = vrot.lane.b32.xlu0 %v1554, 11
      %v1575 = vpop.permute.xlu0 %1574
      %1576 = vrot.lane.b32.xlu0 %v1555, 11
      %v1577 = vpop.permute.xlu0 %1576
      %1578 = vrot.lane.b32.xlu0 %v1556, 11
      %v1579 = vpop.permute.xlu0 %1578
      %1580 = vrot.lane.b32.xlu0 %v1557, 11
      %v1581 = vpop.permute.xlu0 %1580
      %v1582 = vrot.slane %v1567, 4
      %v1583 = vrot.slane %v1569, 4
      %v1584 = vrot.slane %v1571, 4
      %v1585 = vrot.slane %v1573, 4
      %v1586 = vrot.slane %v1575, 4
      %v1587 = vrot.slane %v1577, 4
      %v1588 = vrot.slane %v1579, 4
      %v1589 = vrot.slane %v1581, 4
      %v1590 = vsel %vm479, %v1582, %v1583
      %v1591 = vsel %vm481, %v1567, %v1590
      %v1592 = vsel %vm479, %v1583, %v1584
      %v1593 = vsel %vm481, %v1569, %v1592
      %v1594 = vsel %vm479, %v1584, %v1585
      %v1595 = vsel %vm481, %v1571, %v1594
      %v1596 = vsel %vm479, %v1586, %v1587
      %v1597 = vsel %vm481, %v1575, %v1596
      %v1598 = vsel %vm479, %v1587, %v1588
      %v1599 = vsel %vm481, %v1577, %v1598
      %v1600 = vsel %vm479, %v1588, %v1589
      %v1601 = vsel %vm481, %v1579, %v1600
      %1608 = vst [vmem:[#allocation4] sm:$0xff] %v1591
      %1609 = vst [vmem:[#allocation4 + $0x8] sm:$0xff] %v1593
      %1610 = vst [vmem:[#allocation4 + $0x10] sm:$0xff] %v1595
      %1611 = vst [vmem:[#allocation4 + $0x18] sm:$0xff] %v1597
      %1612 = vst [vmem:[#allocation4 + $0x20] sm:$0xff] %v1599
      %1613 = vst [vmem:[#allocation4 + $0x28] sm:$0xff] %v1601
      %v1614 = vld [vmem:[#allocation2 + $0x4] sm:$0xff]
      %v1615 = vld [vmem:[#allocation2 + $0xc] sm:$0xff]
      %v1616 = vld [vmem:[#allocation2 + $0x14] sm:$0xff]
      %v1617 = vld [vmem:[#allocation2 + $0x1c] sm:$0xf]
      %v1618 = vld [vmem:[#allocation2 + $0x2c] sm:$0xff]
      %v1619 = vld [vmem:[#allocation2 + $0x34] sm:$0xff]
      %v1620 = vld [vmem:[#allocation2 + $0x3c] sm:$0xff]
      %v1621 = vld [vmem:[#allocation2 + $0x44] sm:$0xf]
      %1630 = vrot.lane.b32.xlu0 %v1614, 10
      %v1631 = vpop.permute.xlu0 %1630
      %1632 = vrot.lane.b32.xlu0 %v1615, 10
      %v1633 = vpop.permute.xlu0 %1632
      %1634 = vrot.lane.b32.xlu0 %v1616, 10
      %v1635 = vpop.permute.xlu0 %1634
      %1636 = vrot.lane.b32.xlu0 %v1617, 10
      %v1637 = vpop.permute.xlu0 %1636
      %1638 = vrot.lane.b32.xlu0 %v1618, 10
      %v1639 = vpop.permute.xlu0 %1638
      %1640 = vrot.lane.b32.xlu0 %v1619, 10
      %v1641 = vpop.permute.xlu0 %1640
      %1642 = vrot.lane.b32.xlu0 %v1620, 10
      %v1643 = vpop.permute.xlu0 %1642
      %1644 = vrot.lane.b32.xlu0 %v1621, 10
      %v1645 = vpop.permute.xlu0 %1644
      %v1646 = vrot.slane %v1631, 4
      %v1647 = vrot.slane %v1633, 4
      %v1648 = vrot.slane %v1635, 4
      %v1649 = vrot.slane %v1637, 4
      %v1650 = vrot.slane %v1639, 4
      %v1651 = vrot.slane %v1641, 4
      %v1652 = vrot.slane %v1643, 4
      %v1653 = vrot.slane %v1645, 4
      %v1654 = vsel %vm479, %v1646, %v1647
      %v1655 = vsel %vm546, %v1631, %v1654
      %v1656 = vsel %vm479, %v1647, %v1648
      %v1657 = vsel %vm546, %v1633, %v1656
      %v1658 = vsel %vm479, %v1648, %v1649
      %v1659 = vsel %vm546, %v1635, %v1658
      %v1660 = vsel %vm479, %v1650, %v1651
      %v1661 = vsel %vm546, %v1639, %v1660
      %v1662 = vsel %vm479, %v1651, %v1652
      %v1663 = vsel %vm546, %v1641, %v1662
      %v1664 = vsel %vm479, %v1652, %v1653
      %v1665 = vsel %vm546, %v1643, %v1664
      %1672 = vst [vmem:[#allocation4 + $0x30] sm:$0xff] %v1655
      %1673 = vst [vmem:[#allocation4 + $0x38] sm:$0xff] %v1657
      %1674 = vst [vmem:[#allocation4 + $0x40] sm:$0xff] %v1659
      %1675 = vst [vmem:[#allocation4 + $0x48] sm:$0xff] %v1661
      %1676 = vst [vmem:[#allocation4 + $0x50] sm:$0xff] %v1663
      %1677 = vst [vmem:[#allocation4 + $0x58] sm:$0xff] %v1665
      %v1678 = vld [vmem:[#allocation2 + $0x4] sm:$0xff]
      %v1679 = vld [vmem:[#allocation2 + $0xc] sm:$0xff]
      %v1680 = vld [vmem:[#allocation2 + $0x14] sm:$0xff]
      %v1681 = vld [vmem:[#allocation2 + $0x1c] sm:$0xf]
      %v1682 = vld [vmem:[#allocation2 + $0x2c] sm:$0xff]
      %v1683 = vld [vmem:[#allocation2 + $0x34] sm:$0xff]
      %v1684 = vld [vmem:[#allocation2 + $0x3c] sm:$0xff]
      %v1685 = vld [vmem:[#allocation2 + $0x44] sm:$0xf]
      %1694 = vrot.lane.b32.xlu0 %v1678, 9
      %v1695 = vpop.permute.xlu0 %1694
      %1696 = vrot.lane.b32.xlu0 %v1679, 9
      %v1697 = vpop.permute.xlu0 %1696
      %1698 = vrot.lane.b32.xlu0 %v1680, 9
      %v1699 = vpop.permute.xlu0 %1698
      %1700 = vrot.lane.b32.xlu0 %v1681, 9
      %v1701 = vpop.permute.xlu0 %1700
      %1702 = vrot.lane.b32.xlu0 %v1682, 9
      %v1703 = vpop.permute.xlu0 %1702
      %1704 = vrot.lane.b32.xlu0 %v1683, 9
      %v1705 = vpop.permute.xlu0 %1704
      %1706 = vrot.lane.b32.xlu0 %v1684, 9
      %v1707 = vpop.permute.xlu0 %1706
      %1708 = vrot.lane.b32.xlu0 %v1685, 9
      %v1709 = vpop.permute.xlu0 %1708
      %v1710 = vrot.slane %v1695, 4
      %v1711 = vrot.slane %v1697, 4
      %v1712 = vrot.slane %v1699, 4
      %v1713 = vrot.slane %v1701, 4
      %v1714 = vrot.slane %v1703, 4
      %v1715 = vrot.slane %v1705, 4
      %v1716 = vrot.slane %v1707, 4
      %v1717 = vrot.slane %v1709, 4
      %v1718 = vsel %vm479, %v1710, %v1711
      %v1719 = vsel %vm611, %v1695, %v1718
      %v1720 = vsel %vm479, %v1711, %v1712
      %v1721 = vsel %vm611, %v1697, %v1720
      %v1722 = vsel %vm479, %v1712, %v1713
      %v1723 = vsel %vm611, %v1699, %v1722
      %v1724 = vsel %vm479, %v1714, %v1715
      %v1725 = vsel %vm611, %v1703, %v1724
      %v1726 = vsel %vm479, %v1715, %v1716
      %v1727 = vsel %vm611, %v1705, %v1726
      %v1728 = vsel %vm479, %v1716, %v1717
      %v1729 = vsel %vm611, %v1707, %v1728
      %1736 = vst [vmem:[#allocation4 + $0x60] sm:$0xff] %v1719
      %1737 = vst [vmem:[#allocation4 + $0x68] sm:$0xff] %v1721
      %1738 = vst [vmem:[#allocation4 + $0x70] sm:$0xff] %v1723
      %1739 = vst [vmem:[#allocation4 + $0x78] sm:$0xff] %v1725
      %1740 = vst [vmem:[#allocation4 + $0x80] sm:$0xff] %v1727
      %1741 = vst [vmem:[#allocation4 + $0x88] sm:$0xff] %v1729
      %v1742 = vld [vmem:[#allocation2 + $0x4] sm:$0xff]
      %v1743 = vld [vmem:[#allocation2 + $0xc] sm:$0xff]
      %v1744 = vld [vmem:[#allocation2 + $0x14] sm:$0xff]
      %v1745 = vld [vmem:[#allocation2 + $0x1c] sm:$0xf]
      %v1746 = vld [vmem:[#allocation2 + $0x2c] sm:$0xff]
      %v1747 = vld [vmem:[#allocation2 + $0x34] sm:$0xff]
      %v1748 = vld [vmem:[#allocation2 + $0x3c] sm:$0xff]
      %v1749 = vld [vmem:[#allocation2 + $0x44] sm:$0xf]
      %1758 = vrot.lane.b32.xlu0 %v1742, 1
      %v1759 = vpop.permute.xlu0 %1758
      %1760 = vrot.lane.b32.xlu0 %v1743, 1
      %v1761 = vpop.permute.xlu0 %1760
      %1762 = vrot.lane.b32.xlu0 %v1744, 1
      %v1763 = vpop.permute.xlu0 %1762
      %1764 = vrot.lane.b32.xlu0 %v1745, 1
      %v1765 = vpop.permute.xlu0 %1764
      %1766 = vrot.lane.b32.xlu0 %v1746, 1
      %v1767 = vpop.permute.xlu0 %1766
      %1768 = vrot.lane.b32.xlu0 %v1747, 1
      %v1769 = vpop.permute.xlu0 %1768
      %1770 = vrot.lane.b32.xlu0 %v1748, 1
      %v1771 = vpop.permute.xlu0 %1770
      %1772 = vrot.lane.b32.xlu0 %v1749, 1
      %v1773 = vpop.permute.xlu0 %1772
      %v1774 = vrot.slane %v1759, 4
      %v1775 = vrot.slane %v1761, 4
      %v1776 = vrot.slane %v1763, 4
      %v1777 = vrot.slane %v1765, 4
      %v1778 = vrot.slane %v1767, 4
      %v1779 = vrot.slane %v1769, 4
      %v1780 = vrot.slane %v1771, 4
      %v1781 = vrot.slane %v1773, 4
      %v1782 = vsel %vm479, %v1774, %v1775
      %v1783 = vsel %vm676, %v1759, %v1782
      %v1784 = vsel %vm479, %v1775, %v1776
      %v1785 = vsel %vm676, %v1761, %v1784
      %v1786 = vsel %vm479, %v1776, %v1777
      %v1787 = vsel %vm676, %v1763, %v1786
      %v1788 = vsel %vm479, %v1778, %v1779
      %v1789 = vsel %vm676, %v1767, %v1788
      %v1790 = vsel %vm479, %v1779, %v1780
      %v1791 = vsel %vm676, %v1769, %v1790
      %v1792 = vsel %vm479, %v1780, %v1781
      %v1793 = vsel %vm676, %v1771, %v1792
      %1800 = vst [vmem:[#allocation4 + $0x90] sm:$0xff] %v1783
      %1801 = vst [vmem:[#allocation4 + $0x98] sm:$0xff] %v1785
      %1802 = vst [vmem:[#allocation4 + $0xa0] sm:$0xff] %v1787
      %1803 = vst [vmem:[#allocation4 + $0xa8] sm:$0xff] %v1789
      %1804 = vst [vmem:[#allocation4 + $0xb0] sm:$0xff] %v1791
      %1805 = vst [vmem:[#allocation4 + $0xb8] sm:$0xff] %v1793
      %v1806 = vld [vmem:[#allocation2 + $0x8] sm:$0xff]
      %v1807 = vld [vmem:[#allocation2 + $0x10] sm:$0xff]
      %v1808 = vld [vmem:[#allocation2 + $0x18] sm:$0xff]
      %v1809 = vld [vmem:[#allocation2 + $0x30] sm:$0xff]
      %v1810 = vld [vmem:[#allocation2 + $0x38] sm:$0xff]
      %v1811 = vld [vmem:[#allocation2 + $0x40] sm:$0xff]
      %1812 = vst [vmem:[#allocation4 + $0xc0] sm:$0xff] %v1806
      %1813 = vst [vmem:[#allocation4 + $0xc8] sm:$0xff] %v1807
      %1814 = vst [vmem:[#allocation4 + $0xd0] sm:$0xff] %v1808
      %1815 = vst [vmem:[#allocation4 + $0xd8] sm:$0xff] %v1809
      %1816 = vst [vmem:[#allocation4 + $0xe0] sm:$0xff] %v1810
      %1817 = vst [vmem:[#allocation4 + $0xe8] sm:$0xff] %v1811
      %v1818 = vld [vmem:[#allocation2 + $0x8] sm:$0xff]
      %v1819 = vld [vmem:[#allocation2 + $0x10] sm:$0xff]
      %v1820 = vld [vmem:[#allocation2 + $0x18] sm:$0xff]
      %v1821 = vld [vmem:[#allocation2 + $0x20] sm:$0xf]
      %v1822 = vld [vmem:[#allocation2 + $0x30] sm:$0xff]
      %v1823 = vld [vmem:[#allocation2 + $0x38] sm:$0xff]
      %v1824 = vld [vmem:[#allocation2 + $0x40] sm:$0xff]
      %v1825 = vld [vmem:[#allocation2 + $0x48] sm:$0xf]
      %1834 = vrot.lane.b32.xlu0 %v1818, 127
      %v1835 = vpop.permute.xlu0 %1834
      %1836 = vrot.lane.b32.xlu0 %v1819, 127
      %v1837 = vpop.permute.xlu0 %1836
      %1838 = vrot.lane.b32.xlu0 %v1820, 127
      %v1839 = vpop.permute.xlu0 %1838
      %1840 = vrot.lane.b32.xlu0 %v1821, 127
      %v1841 = vpop.permute.xlu0 %1840
      %1842 = vrot.lane.b32.xlu0 %v1822, 127
      %v1843 = vpop.permute.xlu0 %1842
      %1844 = vrot.lane.b32.xlu0 %v1823, 127
      %v1845 = vpop.permute.xlu0 %1844
      %1846 = vrot.lane.b32.xlu0 %v1824, 127
      %v1847 = vpop.permute.xlu0 %1846
      %1848 = vrot.lane.b32.xlu0 %v1825, 127
      %v1849 = vpop.permute.xlu0 %1848
      %v1850 = vrot.slane %v1835, 4
      %v1851 = vrot.slane %v1837, 4
      %v1852 = vrot.slane %v1839, 4
      %v1853 = vrot.slane %v1841, 4
      %v1854 = vrot.slane %v1843, 4
      %v1855 = vrot.slane %v1845, 4
      %v1856 = vrot.slane %v1847, 4
      %v1857 = vrot.slane %v1849, 4
      %v1858 = vsel %vm479, %v1850, %v1851
      %v1859 = vsel %vm753, %v1835, %v1858
      %v1860 = vsel %vm479, %v1851, %v1852
      %v1861 = vsel %vm753, %v1837, %v1860
      %v1862 = vsel %vm479, %v1852, %v1853
      %v1863 = vsel %vm753, %v1839, %v1862
      %v1864 = vsel %vm479, %v1854, %v1855
      %v1865 = vsel %vm753, %v1843, %v1864
      %v1866 = vsel %vm479, %v1855, %v1856
      %v1867 = vsel %vm753, %v1845, %v1866
      %v1868 = vsel %vm479, %v1856, %v1857
      %v1869 = vsel %vm753, %v1847, %v1868
      %1876 = vst [vmem:[#allocation4 + $0xf0] sm:$0xff] %v1859
      %1877 = vst [vmem:[#allocation4 + $0xf8] sm:$0xff] %v1861
      %1878 = vst [vmem:[#allocation4 + $0x100] sm:$0xff] %v1863
      %1879 = vst [vmem:[#allocation4 + $0x108] sm:$0xff] %v1865
      %1880 = vst [vmem:[#allocation4 + $0x110] sm:$0xff] %v1867
      %1881 = vst [vmem:[#allocation4 + $0x118] sm:$0xff] %v1869
      %v1882 = vld [vmem:[#allocation2 + $0x8] sm:$0xff]
      %v1883 = vld [vmem:[#allocation2 + $0x10] sm:$0xff]
      %v1884 = vld [vmem:[#allocation2 + $0x18] sm:$0xff]
      %v1885 = vld [vmem:[#allocation2 + $0x20] sm:$0xf]
      %v1886 = vld [vmem:[#allocation2 + $0x30] sm:$0xff]
      %v1887 = vld [vmem:[#allocation2 + $0x38] sm:$0xff]
      %v1888 = vld [vmem:[#allocation2 + $0x40] sm:$0xff]
      %v1889 = vld [vmem:[#allocation2 + $0x48] sm:$0xf]
      %1898 = vrot.lane.b32.xlu0 %v1882, 119
      %v1899 = vpop.permute.xlu0 %1898
      %1900 = vrot.lane.b32.xlu0 %v1883, 119
      %v1901 = vpop.permute.xlu0 %1900
      %1902 = vrot.lane.b32.xlu0 %v1884, 119
      %v1903 = vpop.permute.xlu0 %1902
      %1904 = vrot.lane.b32.xlu0 %v1885, 119
      %v1905 = vpop.permute.xlu0 %1904
      %1906 = vrot.lane.b32.xlu0 %v1886, 119
      %v1907 = vpop.permute.xlu0 %1906
      %1908 = vrot.lane.b32.xlu0 %v1887, 119
      %v1909 = vpop.permute.xlu0 %1908
      %1910 = vrot.lane.b32.xlu0 %v1888, 119
      %v1911 = vpop.permute.xlu0 %1910
      %1912 = vrot.lane.b32.xlu0 %v1889, 119
      %v1913 = vpop.permute.xlu0 %1912
      %v1914 = vrot.slane %v1899, 4
      %v1915 = vrot.slane %v1901, 4
      %v1916 = vrot.slane %v1903, 4
      %v1917 = vrot.slane %v1905, 4
      %v1918 = vrot.slane %v1907, 4
      %v1919 = vrot.slane %v1909, 4
      %v1920 = vrot.slane %v1911, 4
      %v1921 = vrot.slane %v1913, 4
      %v1922 = vsel %vm479, %v1914, %v1915
      %v1923 = vsel %vm818, %v1899, %v1922
      %v1924 = vsel %vm479, %v1915, %v1916
      %v1925 = vsel %vm818, %v1901, %v1924
      %v1926 = vsel %vm479, %v1916, %v1917
      %v1927 = vsel %vm818, %v1903, %v1926
      %v1928 = vsel %vm479, %v1918, %v1919
      %v1929 = vsel %vm818, %v1907, %v1928
      %v1930 = vsel %vm479, %v1919, %v1920
      %v1931 = vsel %vm818, %v1909, %v1930
      %v1932 = vsel %vm479, %v1920, %v1921
      %v1933 = vsel %vm818, %v1911, %v1932
      %1940 = vst [vmem:[#allocation4 + $0x120] sm:$0xff] %v1923
      %1941 = vst [vmem:[#allocation4 + $0x128] sm:$0xff] %v1925
      %1942 = vst [vmem:[#allocation4 + $0x130] sm:$0xff] %v1927
      %1943 = vst [vmem:[#allocation4 + $0x138] sm:$0xff] %v1929
      %1944 = vst [vmem:[#allocation4 + $0x140] sm:$0xff] %v1931
      %1945 = vst [vmem:[#allocation4 + $0x148] sm:$0xff] %v1933
      %v1946 = vld [vmem:[#allocation2 + $0x8] sm:$0xff]
      %v1947 = vld [vmem:[#allocation2 + $0x10] sm:$0xff]
      %v1948 = vld [vmem:[#allocation2 + $0x18] sm:$0xff]
      %v1949 = vld [vmem:[#allocation2 + $0x20] sm:$0xf]
      %v1950 = vld [vmem:[#allocation2 + $0x30] sm:$0xff]
      %v1951 = vld [vmem:[#allocation2 + $0x38] sm:$0xff]
      %v1952 = vld [vmem:[#allocation2 + $0x40] sm:$0xff]
      %v1953 = vld [vmem:[#allocation2 + $0x48] sm:$0xf]
      %1962 = vrot.lane.b32.xlu0 %v1946, 118
      %v1963 = vpop.permute.xlu0 %1962
      %1964 = vrot.lane.b32.xlu0 %v1947, 118
      %v1965 = vpop.permute.xlu0 %1964
      %1966 = vrot.lane.b32.xlu0 %v1948, 118
      %v1967 = vpop.permute.xlu0 %1966
      %1968 = vrot.lane.b32.xlu0 %v1949, 118
      %v1969 = vpop.permute.xlu0 %1968
      %1970 = vrot.lane.b32.xlu0 %v1950, 118
      %v1971 = vpop.permute.xlu0 %1970
      %1972 = vrot.lane.b32.xlu0 %v1951, 118
      %v1973 = vpop.permute.xlu0 %1972
      %1974 = vrot.lane.b32.xlu0 %v1952, 118
      %v1975 = vpop.permute.xlu0 %1974
      %1976 = vrot.lane.b32.xlu0 %v1953, 118
      %v1977 = vpop.permute.xlu0 %1976
      %v1978 = vrot.slane %v1963, 4
      %v1979 = vrot.slane %v1965, 4
      %v1980 = vrot.slane %v1967, 4
      %v1981 = vrot.slane %v1969, 4
      %v1982 = vrot.slane %v1971, 4
      %v1983 = vrot.slane %v1973, 4
      %v1984 = vrot.slane %v1975, 4
      %v1985 = vrot.slane %v1977, 4
      %v1986 = vsel %vm479, %v1978, %v1979
      %v1987 = vsel %vm883, %v1963, %v1986
      %v1988 = vsel %vm479, %v1979, %v1980
      %v1989 = vsel %vm883, %v1965, %v1988
      %v1990 = vsel %vm479, %v1980, %v1981
      %v1991 = vsel %vm883, %v1967, %v1990
      %v1992 = vsel %vm479, %v1982, %v1983
      %v1993 = vsel %vm883, %v1971, %v1992
      %v1994 = vsel %vm479, %v1983, %v1984
      %v1995 = vsel %vm883, %v1973, %v1994
      %v1996 = vsel %vm479, %v1984, %v1985
      %v1997 = vsel %vm883, %v1975, %v1996
      %2004 = vst [vmem:[#allocation4 + $0x150] sm:$0xff] %v1987
      %2005 = vst [vmem:[#allocation4 + $0x158] sm:$0xff] %v1989
      %2006 = vst [vmem:[#allocation4 + $0x160] sm:$0xff] %v1991
      %2007 = vst [vmem:[#allocation4 + $0x168] sm:$0xff] %v1993
      %2008 = vst [vmem:[#allocation4 + $0x170] sm:$0xff] %v1995
      %2009 = vst [vmem:[#allocation4 + $0x178] sm:$0xff] %v1997
      %v2010 = vld [vmem:[#allocation2 + $0x8] sm:$0xff]
      %v2011 = vld [vmem:[#allocation2 + $0x10] sm:$0xff]
      %v2012 = vld [vmem:[#allocation2 + $0x18] sm:$0xff]
      %v2013 = vld [vmem:[#allocation2 + $0x20] sm:$0xf]
      %v2014 = vld [vmem:[#allocation2 + $0x30] sm:$0xff]
      %v2015 = vld [vmem:[#allocation2 + $0x38] sm:$0xff]
      %v2016 = vld [vmem:[#allocation2 + $0x40] sm:$0xff]
      %v2017 = vld [vmem:[#allocation2 + $0x48] sm:$0xf]
      %2026 = vrot.lane.b32.xlu0 %v2010, 117
      %v2027 = vpop.permute.xlu0 %2026
      %2028 = vrot.lane.b32.xlu0 %v2011, 117
      %v2029 = vpop.permute.xlu0 %2028
      %2030 = vrot.lane.b32.xlu0 %v2012, 117
      %v2031 = vpop.permute.xlu0 %2030
      %2032 = vrot.lane.b32.xlu0 %v2013, 117
      %v2033 = vpop.permute.xlu0 %2032
      %2034 = vrot.lane.b32.xlu0 %v2014, 117
      %v2035 = vpop.permute.xlu0 %2034
      %2036 = vrot.lane.b32.xlu0 %v2015, 117
      %v2037 = vpop.permute.xlu0 %2036
      %2038 = vrot.lane.b32.xlu0 %v2016, 117
      %v2039 = vpop.permute.xlu0 %2038
      %2040 = vrot.lane.b32.xlu0 %v2017, 117
      %v2041 = vpop.permute.xlu0 %2040
      %v2042 = vrot.slane %v2027, 4
      %v2043 = vrot.slane %v2029, 4
      %v2044 = vrot.slane %v2031, 4
      %v2045 = vrot.slane %v2033, 4
      %v2046 = vrot.slane %v2035, 4
      %v2047 = vrot.slane %v2037, 4
      %v2048 = vrot.slane %v2039, 4
      %v2049 = vrot.slane %v2041, 4
      %v2050 = vsel %vm479, %v2042, %v2043
      %v2051 = vsel %vm948, %v2027, %v2050
      %v2052 = vsel %vm479, %v2043, %v2044
      %v2053 = vsel %vm948, %v2029, %v2052
      %v2054 = vsel %vm479, %v2044, %v2045
      %v2055 = vsel %vm948, %v2031, %v2054
      %v2056 = vsel %vm479, %v2046, %v2047
      %v2057 = vsel %vm948, %v2035, %v2056
      %v2058 = vsel %vm479, %v2047, %v2048
      %v2059 = vsel %vm948, %v2037, %v2058
      %v2060 = vsel %vm479, %v2048, %v2049
      %v2061 = vsel %vm948, %v2039, %v2060
      %2068 = vst [vmem:[#allocation4 + $0x180] sm:$0xff] %v2051
      %2069 = vst [vmem:[#allocation4 + $0x188] sm:$0xff] %v2053
      %2070 = vst [vmem:[#allocation4 + $0x190] sm:$0xff] %v2055
      %2071 = vst [vmem:[#allocation4 + $0x198] sm:$0xff] %v2057
      %2072 = vst [vmem:[#allocation4 + $0x1a0] sm:$0xff] %v2059
      %2073 = vst [vmem:[#allocation4 + $0x1a8] sm:$0xff] %v2061
      %v2074 = vld [vmem:[#allocation4] sm:$0xff]
      %v2075 = vld [vmem:[#allocation4 + $0x8] sm:$0xff]
      %v2076 = vld [vmem:[#allocation4 + $0x10] sm:$0xff]
      %v2077 = vld [vmem:[#allocation4 + $0x18] sm:$0xff]
      %v2078 = vld [vmem:[#allocation4 + $0x20] sm:$0xff]
      %v2079 = vld [vmem:[#allocation4 + $0x28] sm:$0xff]
      %v2080 = vld [vmem:[#allocation4 + $0x30] sm:$0xff]
      %v2081 = vld [vmem:[#allocation4 + $0x38] sm:$0xff]
      %v2082 = vld [vmem:[#allocation4 + $0x40] sm:$0xff]
      %v2083 = vld [vmem:[#allocation4 + $0x48] sm:$0xff]
      %v2084 = vld [vmem:[#allocation4 + $0x50] sm:$0xff]
      %v2085 = vld [vmem:[#allocation4 + $0x58] sm:$0xff]
      %v2086 = vld [vmem:[#allocation4 + $0x60] sm:$0xff]
      %v2087 = vld [vmem:[#allocation4 + $0x68] sm:$0xff]
      %v2088 = vld [vmem:[#allocation4 + $0x70] sm:$0xff]
      %v2089 = vld [vmem:[#allocation4 + $0x78] sm:$0xff]
      %v2090 = vld [vmem:[#allocation4 + $0x80] sm:$0xff]
      %v2091 = vld [vmem:[#allocation4 + $0x88] sm:$0xff]
      %v2092 = vld [vmem:[#allocation4 + $0x90] sm:$0xff]
      %v2093 = vld [vmem:[#allocation4 + $0x98] sm:$0xff]
      %v2094 = vld [vmem:[#allocation4 + $0xa0] sm:$0xff]
      %v2095 = vld [vmem:[#allocation4 + $0xa8] sm:$0xff]
      %v2096 = vld [vmem:[#allocation4 + $0xb0] sm:$0xff]
      %v2097 = vld [vmem:[#allocation4 + $0xb8] sm:$0xff]
      %v2098 = vld [vmem:[#allocation4 + $0xc0] sm:$0xff]
      %v2099 = vld [vmem:[#allocation4 + $0xc8] sm:$0xff]
      %v2100 = vld [vmem:[#allocation4 + $0xd0] sm:$0xff]
      %v2101 = vld [vmem:[#allocation4 + $0xd8] sm:$0xff]
      %v2102 = vld [vmem:[#allocation4 + $0xe0] sm:$0xff]
      %v2103 = vld [vmem:[#allocation4 + $0xe8] sm:$0xff]
      %v2104 = vld [vmem:[#allocation4 + $0xf0] sm:$0xff]
      %v2105 = vld [vmem:[#allocation4 + $0xf8] sm:$0xff]
      %v2106 = vld [vmem:[#allocation4 + $0x100] sm:$0xff]
      %v2107 = vld [vmem:[#allocation4 + $0x108] sm:$0xff]
      %v2108 = vld [vmem:[#allocation4 + $0x110] sm:$0xff]
      %v2109 = vld [vmem:[#allocation4 + $0x118] sm:$0xff]
      %v2110 = vld [vmem:[#allocation4 + $0x120] sm:$0xff]
      %v2111 = vld [vmem:[#allocation4 + $0x128] sm:$0xff]
      %v2112 = vld [vmem:[#allocation4 + $0x130] sm:$0xff]
      %v2113 = vld [vmem:[#allocation4 + $0x138] sm:$0xff]
      %v2114 = vld [vmem:[#allocation4 + $0x140] sm:$0xff]
      %v2115 = vld [vmem:[#allocation4 + $0x148] sm:$0xff]
      %v2116 = vld [vmem:[#allocation4 + $0x150] sm:$0xff]
      %v2117 = vld [vmem:[#allocation4 + $0x158] sm:$0xff]
      %v2118 = vld [vmem:[#allocation4 + $0x160] sm:$0xff]
      %v2119 = vld [vmem:[#allocation4 + $0x168] sm:$0xff]
      %v2120 = vld [vmem:[#allocation4 + $0x170] sm:$0xff]
      %v2121 = vld [vmem:[#allocation4 + $0x178] sm:$0xff]
      %v2122 = vld [vmem:[#allocation4 + $0x180] sm:$0xff]
      %v2123 = vld [vmem:[#allocation4 + $0x188] sm:$0xff]
      %v2124 = vld [vmem:[#allocation4 + $0x190] sm:$0xff]
      %v2125 = vld [vmem:[#allocation4 + $0x198] sm:$0xff]
      %v2126 = vld [vmem:[#allocation4 + $0x1a0] sm:$0xff]
      %v2127 = vld [vmem:[#allocation4 + $0x1a8] sm:$0xff]
      %2129 = vset.pattern.permute.xlu0 0
      %2130 = vperm.xlu0 %2129, %v1548
      %v2131 = vpop.permute.xlu0 %2130
      %2134 = vset.pattern.permute.xlu0 0
      %2135 = vperm.xlu0 %2134, %v1549
      %v2136 = vpop.permute.xlu0 %2135
      %v2140 = vunpack.c.l.b16 %v1546
      %v2141 = vunpack.c.h.b16 %v1546
      %v2142 = vunpack.c.l.b16 %v1547
      %v2143 = vunpack.c.h.b16 %v1547
      %v2144 = vpack.c.b16 %v2142, %v2140
      %v2145 = vpack.c.b16 %v2143, %v2141
      %v2201 = vunpack.c.l.b16 %v2074
      %v2202 = vunpack.c.h.b16 %v2074
      %v2203 = vunpack.c.l.b16 %v2075
      %v2204 = vunpack.c.h.b16 %v2075
      %v2205 = vunpack.c.l.b16 %v2076
      %v2206 = vunpack.c.h.b16 %v2076
      %v2207 = vunpack.c.l.b16 %v2077
      %v2208 = vunpack.c.h.b16 %v2077
      %v2209 = vunpack.c.l.b16 %v2078
      %v2210 = vunpack.c.h.b16 %v2078
      %v2211 = vunpack.c.l.b16 %v2079
      %v2212 = vunpack.c.h.b16 %v2079
      %v2213 = vunpack.c.l.b16 %v2080
      %v2214 = vunpack.c.h.b16 %v2080
      %v2215 = vunpack.c.l.b16 %v2081
      %v2216 = vunpack.c.h.b16 %v2081
      %v2217 = vunpack.c.l.b16 %v2082
      %v2218 = vunpack.c.h.b16 %v2082
      %v2219 = vunpack.c.l.b16 %v2083
      %v2220 = vunpack.c.h.b16 %v2083
      %v2221 = vunpack.c.l.b16 %v2084
      %v2222 = vunpack.c.h.b16 %v2084
      %v2223 = vunpack.c.l.b16 %v2085
      %v2224 = vunpack.c.h.b16 %v2085
      %v2225 = vunpack.c.l.b16 %v2086
      %v2226 = vunpack.c.h.b16 %v2086
      %v2227 = vunpack.c.l.b16 %v2087
      %v2228 = vunpack.c.h.b16 %v2087
      %v2229 = vunpack.c.l.b16 %v2088
      %v2230 = vunpack.c.h.b16 %v2088
      %v2231 = vunpack.c.l.b16 %v2089
      %v2232 = vunpack.c.h.b16 %v2089
      %v2233 = vunpack.c.l.b16 %v2090
      %v2234 = vunpack.c.h.b16 %v2090
      %v2235 = vunpack.c.l.b16 %v2091
      %v2236 = vunpack.c.h.b16 %v2091
      %v2237 = vunpack.c.l.b16 %v2092
      %v2238 = vunpack.c.h.b16 %v2092
      %v2239 = vunpack.c.l.b16 %v2093
      %v2240 = vunpack.c.h.b16 %v2093
      %v2241 = vunpack.c.l.b16 %v2094
      %v2242 = vunpack.c.h.b16 %v2094
      %v2243 = vunpack.c.l.b16 %v2095
      %v2244 = vunpack.c.h.b16 %v2095
      %v2245 = vunpack.c.l.b16 %v2096
      %v2246 = vunpack.c.h.b16 %v2096
      %v2247 = vunpack.c.l.b16 %v2097
      %v2248 = vunpack.c.h.b16 %v2097
      %v2249 = vunpack.c.l.b16 %v2098
      %v2250 = vunpack.c.h.b16 %v2098
      %v2251 = vunpack.c.l.b16 %v2099
      %v2252 = vunpack.c.h.b16 %v2099
      %v2253 = vunpack.c.l.b16 %v2100
      %v2254 = vunpack.c.h.b16 %v2100
      %v2255 = vunpack.c.l.b16 %v2101
      %v2256 = vunpack.c.h.b16 %v2101
      %v2257 = vunpack.c.l.b16 %v2102
      %v2258 = vunpack.c.h.b16 %v2102
      %v2259 = vunpack.c.l.b16 %v2103
      %v2260 = vunpack.c.h.b16 %v2103
      %v2261 = vunpack.c.l.b16 %v2104
      %v2262 = vunpack.c.h.b16 %v2104
      %v2263 = vunpack.c.l.b16 %v2105
      %v2264 = vunpack.c.h.b16 %v2105
      %v2265 = vunpack.c.l.b16 %v2106
      %v2266 = vunpack.c.h.b16 %v2106
      %v2267 = vunpack.c.l.b16 %v2107
      %v2268 = vunpack.c.h.b16 %v2107
      %v2269 = vunpack.c.l.b16 %v2108
      %v2270 = vunpack.c.h.b16 %v2108
      %v2271 = vunpack.c.l.b16 %v2109
      %v2272 = vunpack.c.h.b16 %v2109
      %v2273 = vunpack.c.l.b16 %v2110
      %v2274 = vunpack.c.h.b16 %v2110
      %v2275 = vunpack.c.l.b16 %v2111
      %v2276 = vunpack.c.h.b16 %v2111
      %v2277 = vunpack.c.l.b16 %v2112
      %v2278 = vunpack.c.h.b16 %v2112
      %v2279 = vunpack.c.l.b16 %v2113
      %v2280 = vunpack.c.h.b16 %v2113
      %v2281 = vunpack.c.l.b16 %v2114
      %v2282 = vunpack.c.h.b16 %v2114
      %v2283 = vunpack.c.l.b16 %v2115
      %v2284 = vunpack.c.h.b16 %v2115
      %v2285 = vunpack.c.l.b16 %v2116
      %v2286 = vunpack.c.h.b16 %v2116
      %v2287 = vunpack.c.l.b16 %v2117
      %v2288 = vunpack.c.h.b16 %v2117
      %v2289 = vunpack.c.l.b16 %v2118
      %v2290 = vunpack.c.h.b16 %v2118
      %v2291 = vunpack.c.l.b16 %v2119
      %v2292 = vunpack.c.h.b16 %v2119
      %v2293 = vunpack.c.l.b16 %v2120
      %v2294 = vunpack.c.h.b16 %v2120
      %v2295 = vunpack.c.l.b16 %v2121
      %v2296 = vunpack.c.h.b16 %v2121
      %v2297 = vunpack.c.l.b16 %v2122
      %v2298 = vunpack.c.h.b16 %v2122
      %v2299 = vunpack.c.l.b16 %v2123
      %v2300 = vunpack.c.h.b16 %v2123
      %v2301 = vunpack.c.l.b16 %v2124
      %v2302 = vunpack.c.h.b16 %v2124
      %v2303 = vunpack.c.l.b16 %v2125
      %v2304 = vunpack.c.h.b16 %v2125
      %v2305 = vunpack.c.l.b16 %v2126
      %v2306 = vunpack.c.h.b16 %v2126
      %v2307 = vunpack.c.l.b16 %v2127
      %v2308 = vunpack.c.h.b16 %v2127
      %v2309 = vpack.c.b16 %v2207, %v2201
      %v2310 = vpack.c.b16 %v2208, %v2202
      %v2311 = vpack.c.b16 %v2209, %v2203
      %v2312 = vpack.c.b16 %v2210, %v2204
      %v2313 = vpack.c.b16 %v2211, %v2205
      %v2314 = vpack.c.b16 %v2212, %v2206
      %v2315 = vpack.c.b16 %v2219, %v2213
      %v2316 = vpack.c.b16 %v2220, %v2214
      %v2317 = vpack.c.b16 %v2221, %v2215
      %v2318 = vpack.c.b16 %v2222, %v2216
      %v2319 = vpack.c.b16 %v2223, %v2217
      %v2320 = vpack.c.b16 %v2224, %v2218
      %v2321 = vpack.c.b16 %v2231, %v2225
      %v2322 = vpack.c.b16 %v2232, %v2226
      %v2323 = vpack.c.b16 %v2233, %v2227
      %v2324 = vpack.c.b16 %v2234, %v2228
      %v2325 = vpack.c.b16 %v2235, %v2229
      %v2326 = vpack.c.b16 %v2236, %v2230
      %v2327 = vpack.c.b16 %v2243, %v2237
      %v2328 = vpack.c.b16 %v2244, %v2238
      %v2329 = vpack.c.b16 %v2245, %v2239
      %v2330 = vpack.c.b16 %v2246, %v2240
      %v2331 = vpack.c.b16 %v2247, %v2241
      %v2332 = vpack.c.b16 %v2248, %v2242
      %v2333 = vpack.c.b16 %v2255, %v2249
      %v2334 = vpack.c.b16 %v2256, %v2250
      %v2335 = vpack.c.b16 %v2257, %v2251
      %v2336 = vpack.c.b16 %v2258, %v2252
      %v2337 = vpack.c.b16 %v2259, %v2253
      %v2338 = vpack.c.b16 %v2260, %v2254
      %v2339 = vpack.c.b16 %v2267, %v2261
      %v2340 = vpack.c.b16 %v2268, %v2262
      %v2341 = vpack.c.b16 %v2269, %v2263
      %v2342 = vpack.c.b16 %v2270, %v2264
      %v2343 = vpack.c.b16 %v2271, %v2265
      %v2344 = vpack.c.b16 %v2272, %v2266
      %v2345 = vpack.c.b16 %v2279, %v2273
      %v2346 = vpack.c.b16 %v2280, %v2274
      %v2347 = vpack.c.b16 %v2281, %v2275
      %v2348 = vpack.c.b16 %v2282, %v2276
      %v2349 = vpack.c.b16 %v2283, %v2277
      %v2350 = vpack.c.b16 %v2284, %v2278
      %v2351 = vpack.c.b16 %v2291, %v2285
      %v2352 = vpack.c.b16 %v2292, %v2286
      %v2353 = vpack.c.b16 %v2293, %v2287
      %v2354 = vpack.c.b16 %v2294, %v2288
      %v2355 = vpack.c.b16 %v2295, %v2289
      %v2356 = vpack.c.b16 %v2296, %v2290
      %v2357 = vpack.c.b16 %v2303, %v2297
      %v2358 = vpack.c.b16 %v2304, %v2298
      %v2359 = vpack.c.b16 %v2305, %v2299
      %v2360 = vpack.c.b16 %v2306, %v2300
      %v2361 = vpack.c.b16 %v2307, %v2301
      %v2362 = vpack.c.b16 %v2308, %v2302
      %v2418 = vsel %vm1315, %v2145, 0
      %2420 = vmatprep.subr.bf16.mxu0 %v2352
      %2421 = vmatpush1.bf16.msra.mxu0 %v2351
      %2422 = vmatprep.subr.bf16.mxu0 %v2346
      %2423 = vmatpush1.bf16.msra.mxu0 %v2345
      %2424 = vmatprep.subr.bf16.mxu0 %v2340
      %2425 = vmatpush1.bf16.msra.mxu0 %v2339
      %2426 = vmatprep.subr.bf16.mxu0 %v2334
      %2427 = vmatpush1.bf16.msra.mxu0 %v2333
      %2428 = vmatprep.subr.bf16.mxu0 %v2328
      %2429 = vmatpush1.bf16.msra.mxu0 %v2327
      %2430 = vmatprep.subr.bf16.mxu0 %v2322
      %2431 = vmatpush1.bf16.msra.mxu0 %v2321
      %2432 = vmatprep.subr.bf16.mxu0 %v2316
      %2433 = vmatpush1.bf16.msra.mxu0 %v2315
      %2434 = vmatprep.subr.bf16.mxu0 %v2310
      %2435 = vmatpush1.bf16.msra.mxu0 %v2309
      %2436 = vmatprep.subr.bf16.mxu0 0
      %2437 = vmatpush2.bf16.msra.mxu0 0
      %2438 = vmatprep.subr.bf16.mxu0 0
      %2439 = vmatpush2.bf16.msra.mxu0 0
      %2440 = vmatprep.subr.bf16.mxu0 0
      %2441 = vmatpush2.bf16.msra.mxu0 0
      %2442 = vmatprep.subr.bf16.mxu0 0
      %2443 = vmatpush2.bf16.msra.mxu0 0
      %2444 = vmatprep.subr.bf16.mxu0 0
      %2445 = vmatpush2.bf16.msra.mxu0 0
      %2446 = vmatprep.subr.bf16.mxu0 0
      %2447 = vmatpush2.bf16.msra.mxu0 0
      %2448 = vmatprep.subr.bf16.mxu0 0
      %2449 = vmatpush2.bf16.msra.mxu0 0
      %2450 = vmatprep.subr.bf16.mxu0 %v2358
      %2451 = vmatpush2.bf16.msra.mxu0 %v2357
      %2452 = vmatprep.mubr.bf16.mxu0 %v2418
      %2453 = vmatmul.mubr.bf16.gmra.mxu0 %v2144
      %v2454 = vpop.f32.mrf.mxu0
      %v2455 = vadd.f32 %v2131, %v2454
      %v2456 = vpop.f32.mrf.mxu0
      %v2457 = vadd.f32 %v2131, %v2456
      %v2458 = vpop.f32.mrf.mxu0
      %v2459 = vadd.f32 %v2136, %v2458
      %v2460 = vpop.f32.mrf.mxu0
      %v2461 = vadd.f32 %v2136, %v2460
      %2462 = vdwg.mxu0
      %2463 = vmatprep.subr.bf16.mxu0 %v2354
      %2464 = vmatpush1.bf16.msra.mxu0 %v2353
      %2465 = vmatprep.subr.bf16.mxu0 %v2348
      %2466 = vmatpush1.bf16.msra.mxu0 %v2347
      %2467 = vmatprep.subr.bf16.mxu0 %v2342
      %2468 = vmatpush1.bf16.msra.mxu0 %v2341
      %2469 = vmatprep.subr.bf16.mxu0 %v2336
      %2470 = vmatpush1.bf16.msra.mxu0 %v2335
      %2471 = vmatprep.subr.bf16.mxu0 %v2330
      %2472 = vmatpush1.bf16.msra.mxu0 %v2329
      %2473 = vmatprep.subr.bf16.mxu0 %v2324
      %2474 = vmatpush1.bf16.msra.mxu0 %v2323
      %2475 = vmatprep.subr.bf16.mxu0 %v2318
      %2476 = vmatpush1.bf16.msra.mxu0 %v2317
      %2477 = vmatprep.subr.bf16.mxu0 %v2312
      %2478 = vmatpush1.bf16.msra.mxu0 %v2311
      %2479 = vmatprep.subr.bf16.mxu0 0
      %2480 = vmatpush2.bf16.msra.mxu0 0
      %2481 = vmatprep.subr.bf16.mxu0 0
      %2482 = vmatpush2.bf16.msra.mxu0 0
      %2483 = vmatprep.subr.bf16.mxu0 0
      %2484 = vmatpush2.bf16.msra.mxu0 0
      %2485 = vmatprep.subr.bf16.mxu0 0
      %2486 = vmatpush2.bf16.msra.mxu0 0
      %2487 = vmatprep.subr.bf16.mxu0 0
      %2488 = vmatpush2.bf16.msra.mxu0 0
      %2489 = vmatprep.subr.bf16.mxu0 0
      %2490 = vmatpush2.bf16.msra.mxu0 0
      %2491 = vmatprep.subr.bf16.mxu0 0
      %2492 = vmatpush2.bf16.msra.mxu0 0
      %2493 = vmatprep.subr.bf16.mxu0 %v2360
      %2494 = vmatpush2.bf16.msra.mxu0 %v2359
      %2495 = vmatprep.mubr.bf16.mxu0 %v2418
      %2496 = vmatmul.mubr.bf16.gmra.mxu0 %v2144
      %v2497 = vpop.f32.mrf.mxu0
      %v2498 = vadd.f32 %v2131, %v2497
      %v2499 = vpop.f32.mrf.mxu0
      %v2500 = vadd.f32 %v2131, %v2499
      %v2501 = vpop.f32.mrf.mxu0
      %v2502 = vadd.f32 %v2136, %v2501
      %v2503 = vpop.f32.mrf.mxu0
      %v2504 = vadd.f32 %v2136, %v2503
      %2505 = vdwg.mxu0
      %2506 = vmatprep.subr.bf16.mxu0 %v2356
      %2507 = vmatpush1.bf16.msra.mxu0 %v2355
      %2508 = vmatprep.subr.bf16.mxu0 %v2350
      %2509 = vmatpush1.bf16.msra.mxu0 %v2349
      %2510 = vmatprep.subr.bf16.mxu0 %v2344
      %2511 = vmatpush1.bf16.msra.mxu0 %v2343
      %2512 = vmatprep.subr.bf16.mxu0 %v2338
      %2513 = vmatpush1.bf16.msra.mxu0 %v2337
      %2514 = vmatprep.subr.bf16.mxu0 %v2332
      %2515 = vmatpush1.bf16.msra.mxu0 %v2331
      %2516 = vmatprep.subr.bf16.mxu0 %v2326
      %2517 = vmatpush1.bf16.msra.mxu0 %v2325
      %2518 = vmatprep.subr.bf16.mxu0 %v2320
      %2519 = vmatpush1.bf16.msra.mxu0 %v2319
      %2520 = vmatprep.subr.bf16.mxu0 %v2314
      %2521 = vmatpush1.bf16.msra.mxu0 %v2313
      %2522 = vmatprep.subr.bf16.mxu0 0
      %2523 = vmatpush2.bf16.msra.mxu0 0
      %2524 = vmatprep.subr.bf16.mxu0 0
      %2525 = vmatpush2.bf16.msra.mxu0 0
      %2526 = vmatprep.subr.bf16.mxu0 0
      %2527 = vmatpush2.bf16.msra.mxu0 0
      %2528 = vmatprep.subr.bf16.mxu0 0
      %2529 = vmatpush2.bf16.msra.mxu0 0
      %2530 = vmatprep.subr.bf16.mxu0 0
      %2531 = vmatpush2.bf16.msra.mxu0 0
      %2532 = vmatprep.subr.bf16.mxu0 0
      %2533 = vmatpush2.bf16.msra.mxu0 0
      %2534 = vmatprep.subr.bf16.mxu0 0
      %2535 = vmatpush2.bf16.msra.mxu0 0
      %2536 = vmatprep.subr.bf16.mxu0 %v2362
      %2537 = vmatpush2.bf16.msra.mxu0 %v2361
      %2538 = vmatprep.mubr.bf16.mxu0 %v2418
      %2539 = vmatmul.mubr.bf16.gmra.mxu0 %v2144
      %v2540 = vpop.f32.mrf.mxu0
      %v2541 = vadd.f32 %v2131, %v2540
      %v2542 = vpop.f32.mrf.mxu0
      %v2543 = vadd.f32 %v2131, %v2542
      %v2544 = vpop.f32.mrf.mxu0
      %v2545 = vadd.f32 %v2136, %v2544
      %v2546 = vpop.f32.mrf.mxu0
      %v2547 = vadd.f32 %v2136, %v2546
      %2548 = vdwg.mxu0
      %v2549 = vmax.f32 %v2455, 0.0
      %v2550 = vmax.f32 %v2457, 0.0
      %v2551 = vmax.f32 %v2498, 0.0
      %v2552 = vmax.f32 %v2500, 0.0
      %v2553 = vmax.f32 %v2541, 0.0
      %v2554 = vmax.f32 %v2543, 0.0
      %v2555 = vmax.f32 %v2459, 0.0
      %v2556 = vmax.f32 %v2461, 0.0
      %v2557 = vmax.f32 %v2502, 0.0
      %v2558 = vmax.f32 %v2504, 0.0
      %v2559 = vmax.f32 %v2545, 0.0
      %v2560 = vmax.f32 %v2547, 0.0
      %v2561 = vld [vmem:[%s1] sm:$0x3f]
      %v2563 = vlaneseq
      %v2564 = vshrl.u32 %v2563, 7
      %v2565 = vsub.s32 0, %v2564
      %v2566 = vrot.slane %v2561, %v2565
      %v2567 = vlaneseq
      %v2568 = vshrl.u32 %v2567, 7
      %v2569 = vsub.s32 1, %v2568
      %v2570 = vrot.slane %v2561, %v2569
      %v2571 = vlaneseq
      %v2572 = vshrl.u32 %v2571, 7
      %v2573 = vsub.s32 2, %v2572
      %v2574 = vrot.slane %v2561, %v2573
      %v2575 = vlaneseq
      %v2576 = vshrl.u32 %v2575, 7
      %v2577 = vsub.s32 3, %v2576
      %v2578 = vrot.slane %v2561, %v2577
      %v2579 = vlaneseq
      %v2580 = vshrl.u32 %v2579, 7
      %v2581 = vsub.s32 4, %v2580
      %v2582 = vrot.slane %v2561, %v2581
      %v2583 = vlaneseq
      %v2584 = vshrl.u32 %v2583, 7
      %v2585 = vsub.s32 5, %v2584
      %v2586 = vrot.slane %v2561, %v2585
      %v2593 = vmul.f32 %v2549, %v2566
      %v2594 = vmul.f32 %v2550, %v2570
      %v2595 = vmul.f32 %v2551, %v2574
      %v2596 = vmul.f32 %v2552, %v2578
      %v2597 = vmul.f32 %v2553, %v2582
      %v2598 = vmul.f32 %v2554, %v2586
      %v2599 = vmul.f32 %v2555, %v2566
      %v2600 = vmul.f32 %v2556, %v2570
      %v2601 = vmul.f32 %v2557, %v2574
      %v2602 = vmul.f32 %v2558, %v2578
      %v2603 = vmul.f32 %v2559, %v2582
      %v2604 = vmul.f32 %v2560, %v2586
      %v2605 = vpack.c.bf16 %v2599, %v2593
      %v2606 = vpack.c.bf16 %v2600, %v2594
      %v2607 = vpack.c.bf16 %v2601, %v2595
      %v2608 = vpack.c.bf16 %v2602, %v2596
      %v2609 = vpack.c.bf16 %v2603, %v2597
      %v2610 = vpack.c.bf16 %v2604, %v2598
      %v2617 = vunpack.c.l.b16 %v2605
      %v2618 = vunpack.c.l.b16 %v2606
      %v2619 = vunpack.c.l.b16 %v2607
      %v2620 = vunpack.c.l.b16 %v2608
      %v2621 = vunpack.c.l.b16 %v2609
      %v2622 = vunpack.c.l.b16 %v2610
      %v2623 = vunpack.c.h.b16 %v2605
      %v2624 = vunpack.c.h.b16 %v2606
      %v2625 = vunpack.c.h.b16 %v2607
      %v2626 = vunpack.c.h.b16 %v2608
      %v2627 = vunpack.c.h.b16 %v2609
      %v2628 = vunpack.c.h.b16 %v2610
      %v2629 = vpack.c.b16 %v2618, %v2617
      %v2630 = vpack.c.b16 %v2620, %v2619
      %v2631 = vpack.c.b16 %v2622, %v2621
      %v2632 = vpack.c.b16 %v2624, %v2623
      %v2633 = vpack.c.b16 %v2626, %v2625
      %v2634 = vpack.c.b16 %v2628, %v2627
      %2641 = vst [vmem:[#allocation3 + $0x8] sm:$0xff] %v2629
      %2642 = vst [vmem:[#allocation3 + $0x10] sm:$0xff] %v2630
      %2643 = vst [vmem:[#allocation3 + $0x18] sm:$0xff] %v2631
      %2644 = vst [vmem:[#allocation3 + $0x30] sm:$0xff] %v2632
      %2645 = vst [vmem:[#allocation3 + $0x38] sm:$0xff] %v2633
      %2646 = vst [vmem:[#allocation3 + $0x40] sm:$0xff] %v2634
      %v2647 = vld [vmem:[%s6] sm:$0xf]
      %v2648 = vld [vmem:[%s6 + $0x4] sm:$0xf]
      %v2649 = vld [vmem:[%s7] sm:$0xff]
      %v2650 = vld [vmem:[%s7 + $0x8] sm:$0xff]
      %v2651 = vld [vmem:[#allocation3 + $0x4] sm:$0xff]
      %v2652 = vld [vmem:[#allocation3 + $0xc] sm:$0xff]
      %v2653 = vld [vmem:[#allocation3 + $0x14] sm:$0xff]
      %v2654 = vld [vmem:[#allocation3 + $0x2c] sm:$0xff]
      %v2655 = vld [vmem:[#allocation3 + $0x34] sm:$0xff]
      %v2656 = vld [vmem:[#allocation3 + $0x3c] sm:$0xff]
      %2657 = vst [vmem:[#allocation4] sm:$0xff] %v2651
      %2658 = vst [vmem:[#allocation4 + $0x8] sm:$0xff] %v2652
      %2659 = vst [vmem:[#allocation4 + $0x10] sm:$0xff] %v2653
      %2660 = vst [vmem:[#allocation4 + $0x18] sm:$0xff] %v2654
      %2661 = vst [vmem:[#allocation4 + $0x20] sm:$0xff] %v2655
      %2662 = vst [vmem:[#allocation4 + $0x28] sm:$0xff] %v2656
      %v2663 = vld [vmem:[#allocation3 + $0x8] sm:$0xff]
      %v2664 = vld [vmem:[#allocation3 + $0x10] sm:$0xff]
      %v2665 = vld [vmem:[#allocation3 + $0x18] sm:$0xff]
      %v2666 = vld [vmem:[#allocation3 + $0x30] sm:$0xff]
      %v2667 = vld [vmem:[#allocation3 + $0x38] sm:$0xff]
      %v2668 = vld [vmem:[#allocation3 + $0x40] sm:$0xff]
      %2669 = vst [vmem:[#allocation4 + $0x30] sm:$0xff] %v2663
      %2670 = vst [vmem:[#allocation4 + $0x38] sm:$0xff] %v2664
      %2671 = vst [vmem:[#allocation4 + $0x40] sm:$0xff] %v2665
      %2672 = vst [vmem:[#allocation4 + $0x48] sm:$0xff] %v2666
      %2673 = vst [vmem:[#allocation4 + $0x50] sm:$0xff] %v2667
      %2674 = vst [vmem:[#allocation4 + $0x58] sm:$0xff] %v2668
      %v2675 = vld [vmem:[#allocation3 + $0xc] sm:$0xff]
      %v2676 = vld [vmem:[#allocation3 + $0x14] sm:$0xff]
      %v2677 = vld [vmem:[#allocation3 + $0x1c] sm:$0xff]
      %v2678 = vld [vmem:[#allocation3 + $0x34] sm:$0xff]
      %v2679 = vld [vmem:[#allocation3 + $0x3c] sm:$0xff]
      %v2680 = vld [vmem:[#allocation3 + $0x44] sm:$0xff]
      %2681 = vst [vmem:[#allocation4 + $0x60] sm:$0xff] %v2675
      %2682 = vst [vmem:[#allocation4 + $0x68] sm:$0xff] %v2676
      %2683 = vst [vmem:[#allocation4 + $0x70] sm:$0xff] %v2677
      %2684 = vst [vmem:[#allocation4 + $0x78] sm:$0xff] %v2678
      %2685 = vst [vmem:[#allocation4 + $0x80] sm:$0xff] %v2679
      %2686 = vst [vmem:[#allocation4 + $0x88] sm:$0xff] %v2680
      %v2687 = vld [vmem:[#allocation4] sm:$0xff]
      %v2688 = vld [vmem:[#allocation4 + $0x8] sm:$0xff]
      %v2689 = vld [vmem:[#allocation4 + $0x10] sm:$0xff]
      %v2690 = vld [vmem:[#allocation4 + $0x18] sm:$0xff]
      %v2691 = vld [vmem:[#allocation4 + $0x20] sm:$0xff]
      %v2692 = vld [vmem:[#allocation4 + $0x28] sm:$0xff]
      %v2693 = vld [vmem:[#allocation4 + $0x30] sm:$0xff]
      %v2694 = vld [vmem:[#allocation4 + $0x38] sm:$0xff]
      %v2695 = vld [vmem:[#allocation4 + $0x40] sm:$0xff]
      %v2696 = vld [vmem:[#allocation4 + $0x48] sm:$0xff]
      %v2697 = vld [vmem:[#allocation4 + $0x50] sm:$0xff]
      %v2698 = vld [vmem:[#allocation4 + $0x58] sm:$0xff]
      %v2699 = vld [vmem:[#allocation4 + $0x60] sm:$0xff]
      %v2700 = vld [vmem:[#allocation4 + $0x68] sm:$0xff]
      %v2701 = vld [vmem:[#allocation4 + $0x70] sm:$0xff]
      %v2702 = vld [vmem:[#allocation4 + $0x78] sm:$0xff]
      %v2703 = vld [vmem:[#allocation4 + $0x80] sm:$0xff]
      %v2704 = vld [vmem:[#allocation4 + $0x88] sm:$0xff]
      %2706 = vset.pattern.permute.xlu0 0
      %2707 = vperm.xlu0 %2706, %v2649
      %v2708 = vpop.permute.xlu0 %2707
      %2711 = vset.pattern.permute.xlu0 0
      %2712 = vperm.xlu0 %2711, %v2650
      %v2713 = vpop.permute.xlu0 %2712
      %v2717 = vunpack.c.l.b16 %v2647
      %v2718 = vunpack.c.l.b16 %v2648
      %v2719 = vpack.c.b16 %v2718, %v2717
      %v2738 = vunpack.c.l.b16 %v2687
      %v2739 = vunpack.c.h.b16 %v2687
      %v2740 = vunpack.c.l.b16 %v2688
      %v2741 = vunpack.c.h.b16 %v2688
      %v2742 = vunpack.c.l.b16 %v2689
      %v2743 = vunpack.c.h.b16 %v2689
      %v2744 = vunpack.c.l.b16 %v2690
      %v2745 = vunpack.c.h.b16 %v2690
      %v2746 = vunpack.c.l.b16 %v2691
      %v2747 = vunpack.c.h.b16 %v2691
      %v2748 = vunpack.c.l.b16 %v2692
      %v2749 = vunpack.c.h.b16 %v2692
      %v2750 = vunpack.c.l.b16 %v2693
      %v2751 = vunpack.c.h.b16 %v2693
      %v2752 = vunpack.c.l.b16 %v2694
      %v2753 = vunpack.c.h.b16 %v2694
      %v2754 = vunpack.c.l.b16 %v2695
      %v2755 = vunpack.c.h.b16 %v2695
      %v2756 = vunpack.c.l.b16 %v2696
      %v2757 = vunpack.c.h.b16 %v2696
      %v2758 = vunpack.c.l.b16 %v2697
      %v2759 = vunpack.c.h.b16 %v2697
      %v2760 = vunpack.c.l.b16 %v2698
      %v2761 = vunpack.c.h.b16 %v2698
      %v2762 = vunpack.c.l.b16 %v2699
      %v2763 = vunpack.c.h.b16 %v2699
      %v2764 = vunpack.c.l.b16 %v2700
      %v2765 = vunpack.c.h.b16 %v2700
      %v2766 = vunpack.c.l.b16 %v2701
      %v2767 = vunpack.c.h.b16 %v2701
      %v2768 = vunpack.c.l.b16 %v2702
      %v2769 = vunpack.c.h.b16 %v2702
      %v2770 = vunpack.c.l.b16 %v2703
      %v2771 = vunpack.c.h.b16 %v2703
      %v2772 = vunpack.c.l.b16 %v2704
      %v2773 = vunpack.c.h.b16 %v2704
      %v2774 = vpack.c.b16 %v2744, %v2738
      %v2775 = vpack.c.b16 %v2745, %v2739
      %v2776 = vpack.c.b16 %v2746, %v2740
      %v2777 = vpack.c.b16 %v2747, %v2741
      %v2778 = vpack.c.b16 %v2748, %v2742
      %v2779 = vpack.c.b16 %v2749, %v2743
      %v2780 = vpack.c.b16 %v2756, %v2750
      %v2781 = vpack.c.b16 %v2757, %v2751
      %v2782 = vpack.c.b16 %v2758, %v2752
      %v2783 = vpack.c.b16 %v2759, %v2753
      %v2784 = vpack.c.b16 %v2760, %v2754
      %v2785 = vpack.c.b16 %v2761, %v2755
      %v2786 = vpack.c.b16 %v2768, %v2762
      %v2787 = vpack.c.b16 %v2769, %v2763
      %v2788 = vpack.c.b16 %v2770, %v2764
      %v2789 = vpack.c.b16 %v2771, %v2765
      %v2790 = vpack.c.b16 %v2772, %v2766
      %v2791 = vpack.c.b16 %v2773, %v2767
      %vm2810 = vcmask 392192
      %v2812 = vsel %vm2810, %v2719, 0
      %2814 = vmatprep.subr.bf16.mxu0 0
      %2815 = vmatpush1.bf16.msra.mxu0 0
      %2816 = vmatprep.subr.bf16.mxu0 0
      %2817 = vmatpush1.bf16.msra.mxu0 0
      %2818 = vmatprep.subr.bf16.mxu0 0
      %2819 = vmatpush1.bf16.msra.mxu0 0
      %2820 = vmatprep.subr.bf16.mxu0 0
      %2821 = vmatpush1.bf16.msra.mxu0 0
      %2822 = vmatprep.subr.bf16.mxu0 0
      %2823 = vmatpush1.bf16.msra.mxu0 0
      %2824 = vmatprep.subr.bf16.mxu0 %v2787
      %2825 = vmatpush1.bf16.msra.mxu0 %v2786
      %2826 = vmatprep.subr.bf16.mxu0 %v2781
      %2827 = vmatpush1.bf16.msra.mxu0 %v2780
      %2828 = vmatprep.subr.bf16.mxu0 %v2775
      %2829 = vmatpush1.bf16.msra.mxu0 %v2774
      %2830 = vmatprep.subr.bf16.mxu0 0
      %2831 = vmatpush2.bf16.msra.mxu0 0
      %2832 = vmatprep.subr.bf16.mxu0 0
      %2833 = vmatpush2.bf16.msra.mxu0 0
      %2834 = vmatprep.subr.bf16.mxu0 0
      %2835 = vmatpush2.bf16.msra.mxu0 0
      %2836 = vmatprep.subr.bf16.mxu0 0
      %2837 = vmatpush2.bf16.msra.mxu0 0
      %2838 = vmatprep.subr.bf16.mxu0 0
      %2839 = vmatpush2.bf16.msra.mxu0 0
      %2840 = vmatprep.subr.bf16.mxu0 0
      %2841 = vmatpush2.bf16.msra.mxu0 0
      %2842 = vmatprep.subr.bf16.mxu0 0
      %2843 = vmatpush2.bf16.msra.mxu0 0
      %2844 = vmatprep.subr.bf16.mxu0 0
      %2845 = vmatpush2.bf16.msra.mxu0 0
      %2846 = vmatprep.mubr.bf16.mxu0 0
      %2847 = vmatmul.mubr.bf16.gmra.mxu0 %v2812
      %v2848 = vpop.f32.mrf.mxu0
      %v2849 = vadd.f32 %v2708, %v2848
      %v2850 = vpop.f32.mrf.mxu0
      %v2851 = vadd.f32 %v2708, %v2850
      %v2852 = vpop.f32.mrf.mxu0
      %v2853 = vadd.f32 %v2713, %v2852
      %v2854 = vpop.f32.mrf.mxu0
      %v2855 = vadd.f32 %v2713, %v2854
      %2856 = vdwg.mxu0
      %2857 = vmatprep.subr.bf16.mxu0 0
      %2858 = vmatpush1.bf16.msra.mxu0 0
      %2859 = vmatprep.subr.bf16.mxu0 0
      %2860 = vmatpush1.bf16.msra.mxu0 0
      %2861 = vmatprep.subr.bf16.mxu0 0
      %2862 = vmatpush1.bf16.msra.mxu0 0
      %2863 = vmatprep.subr.bf16.mxu0 0
      %2864 = vmatpush1.bf16.msra.mxu0 0
      %2865 = vmatprep.subr.bf16.mxu0 0
      %2866 = vmatpush1.bf16.msra.mxu0 0
      %2867 = vmatprep.subr.bf16.mxu0 %v2789
      %2868 = vmatpush1.bf16.msra.mxu0 %v2788
      %2869 = vmatprep.subr.bf16.mxu0 %v2783
      %2870 = vmatpush1.bf16.msra.mxu0 %v2782
      %2871 = vmatprep.subr.bf16.mxu0 %v2777
      %2872 = vmatpush1.bf16.msra.mxu0 %v2776
      %2873 = vmatprep.subr.bf16.mxu0 0
      %2874 = vmatpush2.bf16.msra.mxu0 0
      %2875 = vmatprep.subr.bf16.mxu0 0
      %2876 = vmatpush2.bf16.msra.mxu0 0
      %2877 = vmatprep.subr.bf16.mxu0 0
      %2878 = vmatpush2.bf16.msra.mxu0 0
      %2879 = vmatprep.subr.bf16.mxu0 0
      %2880 = vmatpush2.bf16.msra.mxu0 0
      %2881 = vmatprep.subr.bf16.mxu0 0
      %2882 = vmatpush2.bf16.msra.mxu0 0
      %2883 = vmatprep.subr.bf16.mxu0 0
      %2884 = vmatpush2.bf16.msra.mxu0 0
      %2885 = vmatprep.subr.bf16.mxu0 0
      %2886 = vmatpush2.bf16.msra.mxu0 0
      %2887 = vmatprep.subr.bf16.mxu0 0
      %2888 = vmatpush2.bf16.msra.mxu0 0
      %2889 = vmatprep.mubr.bf16.mxu0 0
      %2890 = vmatmul.mubr.bf16.gmra.mxu0 %v2812
      %v2891 = vpop.f32.mrf.mxu0
      %v2892 = vadd.f32 %v2708, %v2891
      %v2893 = vpop.f32.mrf.mxu0
      %v2894 = vadd.f32 %v2708, %v2893
      %v2895 = vpop.f32.mrf.mxu0
      %v2896 = vadd.f32 %v2713, %v2895
      %v2897 = vpop.f32.mrf.mxu0
      %v2898 = vadd.f32 %v2713, %v2897
      %2899 = vdwg.mxu0
      %2900 = vmatprep.subr.bf16.mxu0 0
      %2901 = vmatpush1.bf16.msra.mxu0 0
      %2902 = vmatprep.subr.bf16.mxu0 0
      %2903 = vmatpush1.bf16.msra.mxu0 0
      %2904 = vmatprep.subr.bf16.mxu0 0
      %2905 = vmatpush1.bf16.msra.mxu0 0
      %2906 = vmatprep.subr.bf16.mxu0 0
      %2907 = vmatpush1.bf16.msra.mxu0 0
      %2908 = vmatprep.subr.bf16.mxu0 0
      %2909 = vmatpush1.bf16.msra.mxu0 0
      %2910 = vmatprep.subr.bf16.mxu0 %v2791
      %2911 = vmatpush1.bf16.msra.mxu0 %v2790
      %2912 = vmatprep.subr.bf16.mxu0 %v2785
      %2913 = vmatpush1.bf16.msra.mxu0 %v2784
      %2914 = vmatprep.subr.bf16.mxu0 %v2779
      %2915 = vmatpush1.bf16.msra.mxu0 %v2778
      %2916 = vmatprep.subr.bf16.mxu0 0
      %2917 = vmatpush2.bf16.msra.mxu0 0
      %2918 = vmatprep.subr.bf16.mxu0 0
      %2919 = vmatpush2.bf16.msra.mxu0 0
      %2920 = vmatprep.subr.bf16.mxu0 0
      %2921 = vmatpush2.bf16.msra.mxu0 0
      %2922 = vmatprep.subr.bf16.mxu0 0
      %2923 = vmatpush2.bf16.msra.mxu0 0
      %2924 = vmatprep.subr.bf16.mxu0 0
      %2925 = vmatpush2.bf16.msra.mxu0 0
      %2926 = vmatprep.subr.bf16.mxu0 0
      %2927 = vmatpush2.bf16.msra.mxu0 0
      %2928 = vmatprep.subr.bf16.mxu0 0
      %2929 = vmatpush2.bf16.msra.mxu0 0
      %2930 = vmatprep.subr.bf16.mxu0 0
      %2931 = vmatpush2.bf16.msra.mxu0 0
      %2932 = vmatprep.mubr.bf16.mxu0 0
      %2933 = vmatmul.mubr.bf16.gmra.mxu0 %v2812
      %v2934 = vpop.f32.mrf.mxu0
      %v2935 = vadd.f32 %v2708, %v2934
      %v2936 = vpop.f32.mrf.mxu0
      %v2937 = vadd.f32 %v2708, %v2936
      %v2938 = vpop.f32.mrf.mxu0
      %v2939 = vadd.f32 %v2713, %v2938
      %v2940 = vpop.f32.mrf.mxu0
      %v2941 = vadd.f32 %v2713, %v2940
      %2942 = vdwg.mxu0
      %v2943 = vmax.f32 %v2849, 0.0
      %v2944 = vmax.f32 %v2851, 0.0
      %v2945 = vmax.f32 %v2892, 0.0
      %v2946 = vmax.f32 %v2894, 0.0
      %v2947 = vmax.f32 %v2935, 0.0
      %v2948 = vmax.f32 %v2937, 0.0
      %v2949 = vmax.f32 %v2853, 0.0
      %v2950 = vmax.f32 %v2855, 0.0
      %v2951 = vmax.f32 %v2896, 0.0
      %v2952 = vmax.f32 %v2898, 0.0
      %v2953 = vmax.f32 %v2939, 0.0
      %v2954 = vmax.f32 %v2941, 0.0
      %v2955 = vld [vmem:[%s1] sm:$0x3f]
      %v2957 = vlaneseq
      %v2958 = vshrl.u32 %v2957, 7
      %v2959 = vsub.s32 0, %v2958
      %v2960 = vrot.slane %v2955, %v2959
      %v2961 = vlaneseq
      %v2962 = vshrl.u32 %v2961, 7
      %v2963 = vsub.s32 1, %v2962
      %v2964 = vrot.slane %v2955, %v2963
      %v2965 = vlaneseq
      %v2966 = vshrl.u32 %v2965, 7
      %v2967 = vsub.s32 2, %v2966
      %v2968 = vrot.slane %v2955, %v2967
      %v2969 = vlaneseq
      %v2970 = vshrl.u32 %v2969, 7
      %v2971 = vsub.s32 3, %v2970
      %v2972 = vrot.slane %v2955, %v2971
      %v2973 = vlaneseq
      %v2974 = vshrl.u32 %v2973, 7
      %v2975 = vsub.s32 4, %v2974
      %v2976 = vrot.slane %v2955, %v2975
      %v2977 = vlaneseq
      %v2978 = vshrl.u32 %v2977, 7
      %v2979 = vsub.s32 5, %v2978
      %v2980 = vrot.slane %v2955, %v2979
      %v2987 = vmul.f32 %v2943, %v2960
      %v2988 = vmul.f32 %v2944, %v2964
      %v2989 = vmul.f32 %v2945, %v2968
      %v2990 = vmul.f32 %v2946, %v2972
      %v2991 = vmul.f32 %v2947, %v2976
      %v2992 = vmul.f32 %v2948, %v2980
      %v2993 = vmul.f32 %v2949, %v2960
      %v2994 = vmul.f32 %v2950, %v2964
      %v2995 = vmul.f32 %v2951, %v2968
      %v2996 = vmul.f32 %v2952, %v2972
      %v2997 = vmul.f32 %v2953, %v2976
      %v2998 = vmul.f32 %v2954, %v2980
      %v2999 = vpack.c.bf16 %v2993, %v2987
      %v3000 = vpack.c.bf16 %v2994, %v2988
      %v3001 = vpack.c.bf16 %v2995, %v2989
      %v3002 = vpack.c.bf16 %v2996, %v2990
      %v3003 = vpack.c.bf16 %v2997, %v2991
      %v3004 = vpack.c.bf16 %v2998, %v2992
      %v3011 = vunpack.c.l.b16 %v2999
      %v3012 = vunpack.c.l.b16 %v3000
      %v3013 = vunpack.c.l.b16 %v3001
      %v3014 = vunpack.c.l.b16 %v3002
      %v3015 = vunpack.c.l.b16 %v3003
      %v3016 = vunpack.c.l.b16 %v3004
      %v3017 = vunpack.c.h.b16 %v2999
      %v3018 = vunpack.c.h.b16 %v3000
      %v3019 = vunpack.c.h.b16 %v3001
      %v3020 = vunpack.c.h.b16 %v3002
      %v3021 = vunpack.c.h.b16 %v3003
      %v3022 = vunpack.c.h.b16 %v3004
      %v3023 = vpack.c.b16 %v3012, %v3011
      %v3024 = vpack.c.b16 %v3014, %v3013
      %v3025 = vpack.c.b16 %v3016, %v3015
      %v3026 = vpack.c.b16 %v3018, %v3017
      %v3027 = vpack.c.b16 %v3020, %v3019
      %v3028 = vpack.c.b16 %v3022, %v3021
      %3035 = vst [vmem:[#allocation2 + $0x8] sm:$0xff] %v3023
      %3036 = vst [vmem:[#allocation2 + $0x10] sm:$0xff] %v3024
      %3037 = vst [vmem:[#allocation2 + $0x18] sm:$0xff] %v3025
      %3038 = vst [vmem:[#allocation2 + $0x30] sm:$0xff] %v3026
      %3039 = vst [vmem:[#allocation2 + $0x38] sm:$0xff] %v3027
      %3040 = vst [vmem:[#allocation2 + $0x40] sm:$0xff] %v3028
      %v3041 = vld [vmem:[%s8] sm:$0xf]
      %v3042 = vld [vmem:[%s8 + $0x4] sm:$0xf]
      %v3043 = vld [vmem:[%s9] sm:$0xff]
      %v3044 = vld [vmem:[%s9 + $0x8] sm:$0xff]
      %v3045 = vld [vmem:[#allocation2 + $0x4] sm:$0xff]
      %v3046 = vld [vmem:[#allocation2 + $0xc] sm:$0xff]
      %v3047 = vld [vmem:[#allocation2 + $0x14] sm:$0xff]
      %v3048 = vld [vmem:[#allocation2 + $0x2c] sm:$0xff]
      %v3049 = vld [vmem:[#allocation2 + $0x34] sm:$0xff]
      %v3050 = vld [vmem:[#allocation2 + $0x3c] sm:$0xff]
      %3051 = vst [vmem:[#allocation4] sm:$0xff] %v3045
      %3052 = vst [vmem:[#allocation4 + $0x8] sm:$0xff] %v3046
      %3053 = vst [vmem:[#allocation4 + $0x10] sm:$0xff] %v3047
      %3054 = vst [vmem:[#allocation4 + $0x18] sm:$0xff] %v3048
      %3055 = vst [vmem:[#allocation4 + $0x20] sm:$0xff] %v3049
      %3056 = vst [vmem:[#allocation4 + $0x28] sm:$0xff] %v3050
      %v3057 = vld [vmem:[#allocation2 + $0x8] sm:$0xff]
      %v3058 = vld [vmem:[#allocation2 + $0x10] sm:$0xff]
      %v3059 = vld [vmem:[#allocation2 + $0x18] sm:$0xff]
      %v3060 = vld [vmem:[#allocation2 + $0x30] sm:$0xff]
      %v3061 = vld [vmem:[#allocation2 + $0x38] sm:$0xff]
      %v3062 = vld [vmem:[#allocation2 + $0x40] sm:$0xff]
      %3063 = vst [vmem:[#allocation4 + $0x30] sm:$0xff] %v3057
      %3064 = vst [vmem:[#allocation4 + $0x38] sm:$0xff] %v3058
      %3065 = vst [vmem:[#allocation4 + $0x40] sm:$0xff] %v3059
      %3066 = vst [vmem:[#allocation4 + $0x48] sm:$0xff] %v3060
      %3067 = vst [vmem:[#allocation4 + $0x50] sm:$0xff] %v3061
      %3068 = vst [vmem:[#allocation4 + $0x58] sm:$0xff] %v3062
      %v3069 = vld [vmem:[#allocation2 + $0xc] sm:$0xff]
      %v3070 = vld [vmem:[#allocation2 + $0x14] sm:$0xff]
      %v3071 = vld [vmem:[#allocation2 + $0x1c] sm:$0xff]
      %v3072 = vld [vmem:[#allocation2 + $0x34] sm:$0xff]
      %v3073 = vld [vmem:[#allocation2 + $0x3c] sm:$0xff]
      %v3074 = vld [vmem:[#allocation2 + $0x44] sm:$0xff]
      %3075 = vst [vmem:[#allocation4 + $0x60] sm:$0xff] %v3069
      %3076 = vst [vmem:[#allocation4 + $0x68] sm:$0xff] %v3070
      %3077 = vst [vmem:[#allocation4 + $0x70] sm:$0xff] %v3071
      %3078 = vst [vmem:[#allocation4 + $0x78] sm:$0xff] %v3072
      %3079 = vst [vmem:[#allocation4 + $0x80] sm:$0xff] %v3073
      %3080 = vst [vmem:[#allocation4 + $0x88] sm:$0xff] %v3074
      %v3081 = vld [vmem:[#allocation4] sm:$0xff]
      %v3082 = vld [vmem:[#allocation4 + $0x8] sm:$0xff]
      %v3083 = vld [vmem:[#allocation4 + $0x10] sm:$0xff]
      %v3084 = vld [vmem:[#allocation4 + $0x18] sm:$0xff]
      %v3085 = vld [vmem:[#allocation4 + $0x20] sm:$0xff]
      %v3086 = vld [vmem:[#allocation4 + $0x28] sm:$0xff]
      %v3087 = vld [vmem:[#allocation4 + $0x30] sm:$0xff]
      %v3088 = vld [vmem:[#allocation4 + $0x38] sm:$0xff]
      %v3089 = vld [vmem:[#allocation4 + $0x40] sm:$0xff]
      %v3090 = vld [vmem:[#allocation4 + $0x48] sm:$0xff]
      %v3091 = vld [vmem:[#allocation4 + $0x50] sm:$0xff]
      %v3092 = vld [vmem:[#allocation4 + $0x58] sm:$0xff]
      %v3093 = vld [vmem:[#allocation4 + $0x60] sm:$0xff]
      %v3094 = vld [vmem:[#allocation4 + $0x68] sm:$0xff]
      %v3095 = vld [vmem:[#allocation4 + $0x70] sm:$0xff]
      %v3096 = vld [vmem:[#allocation4 + $0x78] sm:$0xff]
      %v3097 = vld [vmem:[#allocation4 + $0x80] sm:$0xff]
      %v3098 = vld [vmem:[#allocation4 + $0x88] sm:$0xff]
      %3100 = vset.pattern.permute.xlu0 0
      %3101 = vperm.xlu0 %3100, %v3043
      %v3102 = vpop.permute.xlu0 %3101
      %3105 = vset.pattern.permute.xlu0 0
      %3106 = vperm.xlu0 %3105, %v3044
      %v3107 = vpop.permute.xlu0 %3106
      %v3111 = vunpack.c.l.b16 %v3041
      %v3112 = vunpack.c.l.b16 %v3042
      %v3113 = vpack.c.b16 %v3112, %v3111
      %v3132 = vunpack.c.l.b16 %v3081
      %v3133 = vunpack.c.h.b16 %v3081
      %v3134 = vunpack.c.l.b16 %v3082
      %v3135 = vunpack.c.h.b16 %v3082
      %v3136 = vunpack.c.l.b16 %v3083
      %v3137 = vunpack.c.h.b16 %v3083
      %v3138 = vunpack.c.l.b16 %v3084
      %v3139 = vunpack.c.h.b16 %v3084
      %v3140 = vunpack.c.l.b16 %v3085
      %v3141 = vunpack.c.h.b16 %v3085
      %v3142 = vunpack.c.l.b16 %v3086
      %v3143 = vunpack.c.h.b16 %v3086
      %v3144 = vunpack.c.l.b16 %v3087
      %v3145 = vunpack.c.h.b16 %v3087
      %v3146 = vunpack.c.l.b16 %v3088
      %v3147 = vunpack.c.h.b16 %v3088
      %v3148 = vunpack.c.l.b16 %v3089
      %v3149 = vunpack.c.h.b16 %v3089
      %v3150 = vunpack.c.l.b16 %v3090
      %v3151 = vunpack.c.h.b16 %v3090
      %v3152 = vunpack.c.l.b16 %v3091
      %v3153 = vunpack.c.h.b16 %v3091
      %v3154 = vunpack.c.l.b16 %v3092
      %v3155 = vunpack.c.h.b16 %v3092
      %v3156 = vunpack.c.l.b16 %v3093
      %v3157 = vunpack.c.h.b16 %v3093
      %v3158 = vunpack.c.l.b16 %v3094
      %v3159 = vunpack.c.h.b16 %v3094
      %v3160 = vunpack.c.l.b16 %v3095
      %v3161 = vunpack.c.h.b16 %v3095
      %v3162 = vunpack.c.l.b16 %v3096
      %v3163 = vunpack.c.h.b16 %v3096
      %v3164 = vunpack.c.l.b16 %v3097
      %v3165 = vunpack.c.h.b16 %v3097
      %v3166 = vunpack.c.l.b16 %v3098
      %v3167 = vunpack.c.h.b16 %v3098
      %v3168 = vpack.c.b16 %v3138, %v3132
      %v3169 = vpack.c.b16 %v3139, %v3133
      %v3170 = vpack.c.b16 %v3140, %v3134
      %v3171 = vpack.c.b16 %v3141, %v3135
      %v3172 = vpack.c.b16 %v3142, %v3136
      %v3173 = vpack.c.b16 %v3143, %v3137
      %v3174 = vpack.c.b16 %v3150, %v3144
      %v3175 = vpack.c.b16 %v3151, %v3145
      %v3176 = vpack.c.b16 %v3152, %v3146
      %v3177 = vpack.c.b16 %v3153, %v3147
      %v3178 = vpack.c.b16 %v3154, %v3148
      %v3179 = vpack.c.b16 %v3155, %v3149
      %v3180 = vpack.c.b16 %v3162, %v3156
      %v3181 = vpack.c.b16 %v3163, %v3157
      %v3182 = vpack.c.b16 %v3164, %v3158
      %v3183 = vpack.c.b16 %v3165, %v3159
      %v3184 = vpack.c.b16 %v3166, %v3160
      %v3185 = vpack.c.b16 %v3167, %v3161
      %v3205 = vsel %vm2810, %v3113, 0
      %3207 = vmatprep.subr.bf16.mxu0 0
      %3208 = vmatpush1.bf16.msra.mxu0 0
      %3209 = vmatprep.subr.bf16.mxu0 0
      %3210 = vmatpush1.bf16.msra.mxu0 0
      %3211 = vmatprep.subr.bf16.mxu0 0
      %3212 = vmatpush1.bf16.msra.mxu0 0
      %3213 = vmatprep.subr.bf16.mxu0 0
      %3214 = vmatpush1.bf16.msra.mxu0 0
      %3215 = vmatprep.subr.bf16.mxu0 0
      %3216 = vmatpush1.bf16.msra.mxu0 0
      %3217 = vmatprep.subr.bf16.mxu0 %v3181
      %3218 = vmatpush1.bf16.msra.mxu0 %v3180
      %3219 = vmatprep.subr.bf16.mxu0 %v3175
      %3220 = vmatpush1.bf16.msra.mxu0 %v3174
      %3221 = vmatprep.subr.bf16.mxu0 %v3169
      %3222 = vmatpush1.bf16.msra.mxu0 %v3168
      %3223 = vmatprep.subr.bf16.mxu0 0
      %3224 = vmatpush2.bf16.msra.mxu0 0
      %3225 = vmatprep.subr.bf16.mxu0 0
      %3226 = vmatpush2.bf16.msra.mxu0 0
      %3227 = vmatprep.subr.bf16.mxu0 0
      %3228 = vmatpush2.bf16.msra.mxu0 0
      %3229 = vmatprep.subr.bf16.mxu0 0
      %3230 = vmatpush2.bf16.msra.mxu0 0
      %3231 = vmatprep.subr.bf16.mxu0 0
      %3232 = vmatpush2.bf16.msra.mxu0 0
      %3233 = vmatprep.subr.bf16.mxu0 0
      %3234 = vmatpush2.bf16.msra.mxu0 0
      %3235 = vmatprep.subr.bf16.mxu0 0
      %3236 = vmatpush2.bf16.msra.mxu0 0
      %3237 = vmatprep.subr.bf16.mxu0 0
      %3238 = vmatpush2.bf16.msra.mxu0 0
      %3239 = vmatprep.mubr.bf16.mxu0 0
      %3240 = vmatmul.mubr.bf16.gmra.mxu0 %v3205
      %v3241 = vpop.f32.mrf.mxu0
      %v3242 = vadd.f32 %v3102, %v3241
      %v3243 = vpop.f32.mrf.mxu0
      %v3244 = vadd.f32 %v3102, %v3243
      %v3245 = vpop.f32.mrf.mxu0
      %v3246 = vadd.f32 %v3107, %v3245
      %v3247 = vpop.f32.mrf.mxu0
      %v3248 = vadd.f32 %v3107, %v3247
      %3249 = vdwg.mxu0
      %3250 = vmatprep.subr.bf16.mxu0 0
      %3251 = vmatpush1.bf16.msra.mxu0 0
      %3252 = vmatprep.subr.bf16.mxu0 0
      %3253 = vmatpush1.bf16.msra.mxu0 0
      %3254 = vmatprep.subr.bf16.mxu0 0
      %3255 = vmatpush1.bf16.msra.mxu0 0
      %3256 = vmatprep.subr.bf16.mxu0 0
      %3257 = vmatpush1.bf16.msra.mxu0 0
      %3258 = vmatprep.subr.bf16.mxu0 0
      %3259 = vmatpush1.bf16.msra.mxu0 0
      %3260 = vmatprep.subr.bf16.mxu0 %v3183
      %3261 = vmatpush1.bf16.msra.mxu0 %v3182
      %3262 = vmatprep.subr.bf16.mxu0 %v3177
      %3263 = vmatpush1.bf16.msra.mxu0 %v3176
      %3264 = vmatprep.subr.bf16.mxu0 %v3171
      %3265 = vmatpush1.bf16.msra.mxu0 %v3170
      %3266 = vmatprep.subr.bf16.mxu0 0
      %3267 = vmatpush2.bf16.msra.mxu0 0
      %3268 = vmatprep.subr.bf16.mxu0 0
      %3269 = vmatpush2.bf16.msra.mxu0 0
      %3270 = vmatprep.subr.bf16.mxu0 0
      %3271 = vmatpush2.bf16.msra.mxu0 0
      %3272 = vmatprep.subr.bf16.mxu0 0
      %3273 = vmatpush2.bf16.msra.mxu0 0
      %3274 = vmatprep.subr.bf16.mxu0 0
      %3275 = vmatpush2.bf16.msra.mxu0 0
      %3276 = vmatprep.subr.bf16.mxu0 0
      %3277 = vmatpush2.bf16.msra.mxu0 0
      %3278 = vmatprep.subr.bf16.mxu0 0
      %3279 = vmatpush2.bf16.msra.mxu0 0
      %3280 = vmatprep.subr.bf16.mxu0 0
      %3281 = vmatpush2.bf16.msra.mxu0 0
      %3282 = vmatprep.mubr.bf16.mxu0 0
      %3283 = vmatmul.mubr.bf16.gmra.mxu0 %v3205
      %v3284 = vpop.f32.mrf.mxu0
      %v3285 = vadd.f32 %v3102, %v3284
      %v3286 = vpop.f32.mrf.mxu0
      %v3287 = vadd.f32 %v3102, %v3286
      %v3288 = vpop.f32.mrf.mxu0
      %v3289 = vadd.f32 %v3107, %v3288
      %v3290 = vpop.f32.mrf.mxu0
      %v3291 = vadd.f32 %v3107, %v3290
      %3292 = vdwg.mxu0
      %3293 = vmatprep.subr.bf16.mxu0 0
      %3294 = vmatpush1.bf16.msra.mxu0 0
      %3295 = vmatprep.subr.bf16.mxu0 0
      %3296 = vmatpush1.bf16.msra.mxu0 0
      %3297 = vmatprep.subr.bf16.mxu0 0
      %3298 = vmatpush1.bf16.msra.mxu0 0
      %3299 = vmatprep.subr.bf16.mxu0 0
      %3300 = vmatpush1.bf16.msra.mxu0 0
      %3301 = vmatprep.subr.bf16.mxu0 0
      %3302 = vmatpush1.bf16.msra.mxu0 0
      %3303 = vmatprep.subr.bf16.mxu0 %v3185
      %3304 = vmatpush1.bf16.msra.mxu0 %v3184
      %3305 = vmatprep.subr.bf16.mxu0 %v3179
      %3306 = vmatpush1.bf16.msra.mxu0 %v3178
      %3307 = vmatprep.subr.bf16.mxu0 %v3173
      %3308 = vmatpush1.bf16.msra.mxu0 %v3172
      %3309 = vmatprep.subr.bf16.mxu0 0
      %3310 = vmatpush2.bf16.msra.mxu0 0
      %3311 = vmatprep.subr.bf16.mxu0 0
      %3312 = vmatpush2.bf16.msra.mxu0 0
      %3313 = vmatprep.subr.bf16.mxu0 0
      %3314 = vmatpush2.bf16.msra.mxu0 0
      %3315 = vmatprep.subr.bf16.mxu0 0
      %3316 = vmatpush2.bf16.msra.mxu0 0
      %3317 = vmatprep.subr.bf16.mxu0 0
      %3318 = vmatpush2.bf16.msra.mxu0 0
      %3319 = vmatprep.subr.bf16.mxu0 0
      %3320 = vmatpush2.bf16.msra.mxu0 0
      %3321 = vmatprep.subr.bf16.mxu0 0
      %3322 = vmatpush2.bf16.msra.mxu0 0
      %3323 = vmatprep.subr.bf16.mxu0 0
      %3324 = vmatpush2.bf16.msra.mxu0 0
      %3325 = vmatprep.mubr.bf16.mxu0 0
      %3326 = vmatmul.mubr.bf16.gmra.mxu0 %v3205
      %v3327 = vpop.f32.mrf.mxu0
      %v3328 = vadd.f32 %v3102, %v3327
      %v3329 = vpop.f32.mrf.mxu0
      %v3330 = vadd.f32 %v3102, %v3329
      %v3331 = vpop.f32.mrf.mxu0
      %v3332 = vadd.f32 %v3107, %v3331
      %v3333 = vpop.f32.mrf.mxu0
      %v3334 = vadd.f32 %v3107, %v3333
      %3335 = vdwg.mxu0
      %v3336 = vmax.f32 %v3242, 0.0
      %v3337 = vmax.f32 %v3244, 0.0
      %v3338 = vmax.f32 %v3285, 0.0
      %v3339 = vmax.f32 %v3287, 0.0
      %v3340 = vmax.f32 %v3328, 0.0
      %v3341 = vmax.f32 %v3330, 0.0
      %v3342 = vmax.f32 %v3246, 0.0
      %v3343 = vmax.f32 %v3248, 0.0
      %v3344 = vmax.f32 %v3289, 0.0
      %v3345 = vmax.f32 %v3291, 0.0
      %v3346 = vmax.f32 %v3332, 0.0
      %v3347 = vmax.f32 %v3334, 0.0
      %v3348 = vld [vmem:[%s1] sm:$0x3f]
      %v3350 = vlaneseq
      %v3351 = vshrl.u32 %v3350, 7
      %v3352 = vsub.s32 0, %v3351
      %v3353 = vrot.slane %v3348, %v3352
      %v3354 = vlaneseq
      %v3355 = vshrl.u32 %v3354, 7
      %v3356 = vsub.s32 1, %v3355
      %v3357 = vrot.slane %v3348, %v3356
      %v3358 = vlaneseq
      %v3359 = vshrl.u32 %v3358, 7
      %v3360 = vsub.s32 2, %v3359
      %v3361 = vrot.slane %v3348, %v3360
      %v3362 = vlaneseq
      %v3363 = vshrl.u32 %v3362, 7
      %v3364 = vsub.s32 3, %v3363
      %v3365 = vrot.slane %v3348, %v3364
      %v3366 = vlaneseq
      %v3367 = vshrl.u32 %v3366, 7
      %v3368 = vsub.s32 4, %v3367
      %v3369 = vrot.slane %v3348, %v3368
      %v3370 = vlaneseq
      %v3371 = vshrl.u32 %v3370, 7
      %v3372 = vsub.s32 5, %v3371
      %v3373 = vrot.slane %v3348, %v3372
      %v3380 = vmul.f32 %v3336, %v3353
      %v3381 = vmul.f32 %v3337, %v3357
      %v3382 = vmul.f32 %v3338, %v3361
      %v3383 = vmul.f32 %v3339, %v3365
      %v3384 = vmul.f32 %v3340, %v3369
      %v3385 = vmul.f32 %v3341, %v3373
      %v3386 = vmul.f32 %v3342, %v3353
      %v3387 = vmul.f32 %v3343, %v3357
      %v3388 = vmul.f32 %v3344, %v3361
      %v3389 = vmul.f32 %v3345, %v3365
      %v3390 = vmul.f32 %v3346, %v3369
      %v3391 = vmul.f32 %v3347, %v3373
      %v3392 = vpack.c.bf16 %v3386, %v3380
      %v3393 = vpack.c.bf16 %v3387, %v3381
      %v3394 = vpack.c.bf16 %v3388, %v3382
      %v3395 = vpack.c.bf16 %v3389, %v3383
      %v3396 = vpack.c.bf16 %v3390, %v3384
      %v3397 = vpack.c.bf16 %v3391, %v3385
      %v3404 = vunpack.c.l.b16 %v3392
      %v3405 = vunpack.c.l.b16 %v3393
      %v3406 = vunpack.c.l.b16 %v3394
      %v3407 = vunpack.c.l.b16 %v3395
      %v3408 = vunpack.c.l.b16 %v3396
      %v3409 = vunpack.c.l.b16 %v3397
      %v3410 = vunpack.c.h.b16 %v3392
      %v3411 = vunpack.c.h.b16 %v3393
      %v3412 = vunpack.c.h.b16 %v3394
      %v3413 = vunpack.c.h.b16 %v3395
      %v3414 = vunpack.c.h.b16 %v3396
      %v3415 = vunpack.c.h.b16 %v3397
      %v3416 = vpack.c.b16 %v3405, %v3404
      %v3417 = vpack.c.b16 %v3407, %v3406
      %v3418 = vpack.c.b16 %v3409, %v3408
      %v3419 = vpack.c.b16 %v3411, %v3410
      %v3420 = vpack.c.b16 %v3413, %v3412
      %v3421 = vpack.c.b16 %v3415, %v3414
      %3428 = vst [vmem:[#allocation3 + $0x8] sm:$0xff] %v3416
      %3429 = vst [vmem:[#allocation3 + $0x10] sm:$0xff] %v3417
      %3430 = vst [vmem:[#allocation3 + $0x18] sm:$0xff] %v3418
      %3431 = vst [vmem:[#allocation3 + $0x30] sm:$0xff] %v3419
      %3432 = vst [vmem:[#allocation3 + $0x38] sm:$0xff] %v3420
      %3433 = vst [vmem:[#allocation3 + $0x40] sm:$0xff] %v3421
      %v3434 = vld [vmem:[%s10] sm:$0xf]
      %v3435 = vld [vmem:[%s11] sm:$0x3]
      %v3436 = vld [vmem:[#allocation3] sm:$0xff]
      %v3437 = vld [vmem:[#allocation3 + $0x8] sm:$0xff]
      %v3438 = vld [vmem:[#allocation3 + $0x10] sm:$0xff]
      %v3439 = vld [vmem:[#allocation3 + $0x18] sm:$0xf]
      %v3440 = vld [vmem:[#allocation3 + $0x28] sm:$0xff]
      %v3441 = vld [vmem:[#allocation3 + $0x30] sm:$0xff]
      %v3442 = vld [vmem:[#allocation3 + $0x38] sm:$0xff]
      %v3443 = vld [vmem:[#allocation3 + $0x40] sm:$0xf]
      %3452 = vrot.lane.b32.xlu0 %v3436, 11
      %v3453 = vpop.permute.xlu0 %3452
      %3454 = vrot.lane.b32.xlu0 %v3437, 11
      %v3455 = vpop.permute.xlu0 %3454
      %3456 = vrot.lane.b32.xlu0 %v3438, 11
      %v3457 = vpop.permute.xlu0 %3456
      %3458 = vrot.lane.b32.xlu0 %v3439, 11
      %v3459 = vpop.permute.xlu0 %3458
      %3460 = vrot.lane.b32.xlu0 %v3440, 11
      %v3461 = vpop.permute.xlu0 %3460
      %3462 = vrot.lane.b32.xlu0 %v3441, 11
      %v3463 = vpop.permute.xlu0 %3462
      %3464 = vrot.lane.b32.xlu0 %v3442, 11
      %v3465 = vpop.permute.xlu0 %3464
      %3466 = vrot.lane.b32.xlu0 %v3443, 11
      %v3467 = vpop.permute.xlu0 %3466
      %v3468 = vrot.slane %v3453, 4
      %v3469 = vrot.slane %v3455, 4
      %v3470 = vrot.slane %v3457, 4
      %v3471 = vrot.slane %v3459, 4
      %v3472 = vrot.slane %v3461, 4
      %v3473 = vrot.slane %v3463, 4
      %v3474 = vrot.slane %v3465, 4
      %v3475 = vrot.slane %v3467, 4
      %v3476 = vsel %vm479, %v3468, %v3469
      %v3477 = vsel %vm481, %v3453, %v3476
      %v3478 = vsel %vm479, %v3469, %v3470
      %v3479 = vsel %vm481, %v3455, %v3478
      %v3480 = vsel %vm479, %v3470, %v3471
      %v3481 = vsel %vm481, %v3457, %v3480
      %v3482 = vsel %vm479, %v3472, %v3473
      %v3483 = vsel %vm481, %v3461, %v3482
      %v3484 = vsel %vm479, %v3473, %v3474
      %v3485 = vsel %vm481, %v3463, %v3484
      %v3486 = vsel %vm479, %v3474, %v3475
      %v3487 = vsel %vm481, %v3465, %v3486
      %3494 = vst [vmem:[#allocation4] sm:$0xff] %v3477
      %3495 = vst [vmem:[#allocation4 + $0x8] sm:$0xff] %v3479
      %3496 = vst [vmem:[#allocation4 + $0x10] sm:$0xff] %v3481
      %3497 = vst [vmem:[#allocation4 + $0x18] sm:$0xff] %v3483
      %3498 = vst [vmem:[#allocation4 + $0x20] sm:$0xff] %v3485
      %3499 = vst [vmem:[#allocation4 + $0x28] sm:$0xff] %v3487
      %v3500 = vld [vmem:[#allocation3] sm:$0xff]
      %v3501 = vld [vmem:[#allocation3 + $0x8] sm:$0xff]
      %v3502 = vld [vmem:[#allocation3 + $0x10] sm:$0xff]
      %v3503 = vld [vmem:[#allocation3 + $0x18] sm:$0xf]
      %v3504 = vld [vmem:[#allocation3 + $0x28] sm:$0xff]
      %v3505 = vld [vmem:[#allocation3 + $0x30] sm:$0xff]
      %v3506 = vld [vmem:[#allocation3 + $0x38] sm:$0xff]
      %v3507 = vld [vmem:[#allocation3 + $0x40] sm:$0xf]
      %3516 = vrot.lane.b32.xlu0 %v3500, 10
      %v3517 = vpop.permute.xlu0 %3516
      %3518 = vrot.lane.b32.xlu0 %v3501, 10
      %v3519 = vpop.permute.xlu0 %3518
      %3520 = vrot.lane.b32.xlu0 %v3502, 10
      %v3521 = vpop.permute.xlu0 %3520
      %3522 = vrot.lane.b32.xlu0 %v3503, 10
      %v3523 = vpop.permute.xlu0 %3522
      %3524 = vrot.lane.b32.xlu0 %v3504, 10
      %v3525 = vpop.permute.xlu0 %3524
      %3526 = vrot.lane.b32.xlu0 %v3505, 10
      %v3527 = vpop.permute.xlu0 %3526
      %3528 = vrot.lane.b32.xlu0 %v3506, 10
      %v3529 = vpop.permute.xlu0 %3528
      %3530 = vrot.lane.b32.xlu0 %v3507, 10
      %v3531 = vpop.permute.xlu0 %3530
      %v3532 = vrot.slane %v3517, 4
      %v3533 = vrot.slane %v3519, 4
      %v3534 = vrot.slane %v3521, 4
      %v3535 = vrot.slane %v3523, 4
      %v3536 = vrot.slane %v3525, 4
      %v3537 = vrot.slane %v3527, 4
      %v3538 = vrot.slane %v3529, 4
      %v3539 = vrot.slane %v3531, 4
      %v3540 = vsel %vm479, %v3532, %v3533
      %v3541 = vsel %vm546, %v3517, %v3540
      %v3542 = vsel %vm479, %v3533, %v3534
      %v3543 = vsel %vm546, %v3519, %v3542
      %v3544 = vsel %vm479, %v3534, %v3535
      %v3545 = vsel %vm546, %v3521, %v3544
      %v3546 = vsel %vm479, %v3536, %v3537
      %v3547 = vsel %vm546, %v3525, %v3546
      %v3548 = vsel %vm479, %v3537, %v3538
      %v3549 = vsel %vm546, %v3527, %v3548
      %v3550 = vsel %vm479, %v3538, %v3539
      %v3551 = vsel %vm546, %v3529, %v3550
      %3558 = vst [vmem:[#allocation4 + $0x30] sm:$0xff] %v3541
      %3559 = vst [vmem:[#allocation4 + $0x38] sm:$0xff] %v3543
      %3560 = vst [vmem:[#allocation4 + $0x40] sm:$0xff] %v3545
      %3561 = vst [vmem:[#allocation4 + $0x48] sm:$0xff] %v3547
      %3562 = vst [vmem:[#allocation4 + $0x50] sm:$0xff] %v3549
      %3563 = vst [vmem:[#allocation4 + $0x58] sm:$0xff] %v3551
      %v3564 = vld [vmem:[#allocation3] sm:$0xff]
      %v3565 = vld [vmem:[#allocation3 + $0x8] sm:$0xff]
      %v3566 = vld [vmem:[#allocation3 + $0x10] sm:$0xff]
      %v3567 = vld [vmem:[#allocation3 + $0x18] sm:$0xf]
      %v3568 = vld [vmem:[#allocation3 + $0x28] sm:$0xff]
      %v3569 = vld [vmem:[#allocation3 + $0x30] sm:$0xff]
      %v3570 = vld [vmem:[#allocation3 + $0x38] sm:$0xff]
      %v3571 = vld [vmem:[#allocation3 + $0x40] sm:$0xf]
      %3580 = vrot.lane.b32.xlu0 %v3564, 9
      %v3581 = vpop.permute.xlu0 %3580
      %3582 = vrot.lane.b32.xlu0 %v3565, 9
      %v3583 = vpop.permute.xlu0 %3582
      %3584 = vrot.lane.b32.xlu0 %v3566, 9
      %v3585 = vpop.permute.xlu0 %3584
      %3586 = vrot.lane.b32.xlu0 %v3567, 9
      %v3587 = vpop.permute.xlu0 %3586
      %3588 = vrot.lane.b32.xlu0 %v3568, 9
      %v3589 = vpop.permute.xlu0 %3588
      %3590 = vrot.lane.b32.xlu0 %v3569, 9
      %v3591 = vpop.permute.xlu0 %3590
      %3592 = vrot.lane.b32.xlu0 %v3570, 9
      %v3593 = vpop.permute.xlu0 %3592
      %3594 = vrot.lane.b32.xlu0 %v3571, 9
      %v3595 = vpop.permute.xlu0 %3594
      %v3596 = vrot.slane %v3581, 4
      %v3597 = vrot.slane %v3583, 4
      %v3598 = vrot.slane %v3585, 4
      %v3599 = vrot.slane %v3587, 4
      %v3600 = vrot.slane %v3589, 4
      %v3601 = vrot.slane %v3591, 4
      %v3602 = vrot.slane %v3593, 4
      %v3603 = vrot.slane %v3595, 4
      %v3604 = vsel %vm479, %v3596, %v3597
      %v3605 = vsel %vm611, %v3581, %v3604
      %v3606 = vsel %vm479, %v3597, %v3598
      %v3607 = vsel %vm611, %v3583, %v3606
      %v3608 = vsel %vm479, %v3598, %v3599
      %v3609 = vsel %vm611, %v3585, %v3608
      %v3610 = vsel %vm479, %v3600, %v3601
      %v3611 = vsel %vm611, %v3589, %v3610
      %v3612 = vsel %vm479, %v3601, %v3602
      %v3613 = vsel %vm611, %v3591, %v3612
      %v3614 = vsel %vm479, %v3602, %v3603
      %v3615 = vsel %vm611, %v3593, %v3614
      %3622 = vst [vmem:[#allocation4 + $0x60] sm:$0xff] %v3605
      %3623 = vst [vmem:[#allocation4 + $0x68] sm:$0xff] %v3607
      %3624 = vst [vmem:[#allocation4 + $0x70] sm:$0xff] %v3609
      %3625 = vst [vmem:[#allocation4 + $0x78] sm:$0xff] %v3611
      %3626 = vst [vmem:[#allocation4 + $0x80] sm:$0xff] %v3613
      %3627 = vst [vmem:[#allocation4 + $0x88] sm:$0xff] %v3615
      %v3628 = vld [vmem:[#allocation3] sm:$0xff]
      %v3629 = vld [vmem:[#allocation3 + $0x8] sm:$0xff]
      %v3630 = vld [vmem:[#allocation3 + $0x10] sm:$0xff]
      %v3631 = vld [vmem:[#allocation3 + $0x18] sm:$0xf]
      %v3632 = vld [vmem:[#allocation3 + $0x28] sm:$0xff]
      %v3633 = vld [vmem:[#allocation3 + $0x30] sm:$0xff]
      %v3634 = vld [vmem:[#allocation3 + $0x38] sm:$0xff]
      %v3635 = vld [vmem:[#allocation3 + $0x40] sm:$0xf]
      %3644 = vrot.lane.b32.xlu0 %v3628, 1
      %v3645 = vpop.permute.xlu0 %3644
      %3646 = vrot.lane.b32.xlu0 %v3629, 1
      %v3647 = vpop.permute.xlu0 %3646
      %3648 = vrot.lane.b32.xlu0 %v3630, 1
      %v3649 = vpop.permute.xlu0 %3648
      %3650 = vrot.lane.b32.xlu0 %v3631, 1
      %v3651 = vpop.permute.xlu0 %3650
      %3652 = vrot.lane.b32.xlu0 %v3632, 1
      %v3653 = vpop.permute.xlu0 %3652
      %3654 = vrot.lane.b32.xlu0 %v3633, 1
      %v3655 = vpop.permute.xlu0 %3654
      %3656 = vrot.lane.b32.xlu0 %v3634, 1
      %v3657 = vpop.permute.xlu0 %3656
      %3658 = vrot.lane.b32.xlu0 %v3635, 1
      %v3659 = vpop.permute.xlu0 %3658
      %v3660 = vrot.slane %v3645, 4
      %v3661 = vrot.slane %v3647, 4
      %v3662 = vrot.slane %v3649, 4
      %v3663 = vrot.slane %v3651, 4
      %v3664 = vrot.slane %v3653, 4
      %v3665 = vrot.slane %v3655, 4
      %v3666 = vrot.slane %v3657, 4
      %v3667 = vrot.slane %v3659, 4
      %v3668 = vsel %vm479, %v3660, %v3661
      %v3669 = vsel %vm676, %v3645, %v3668
      %v3670 = vsel %vm479, %v3661, %v3662
      %v3671 = vsel %vm676, %v3647, %v3670
      %v3672 = vsel %vm479, %v3662, %v3663
      %v3673 = vsel %vm676, %v3649, %v3672
      %v3674 = vsel %vm479, %v3664, %v3665
      %v3675 = vsel %vm676, %v3653, %v3674
      %v3676 = vsel %vm479, %v3665, %v3666
      %v3677 = vsel %vm676, %v3655, %v3676
      %v3678 = vsel %vm479, %v3666, %v3667
      %v3679 = vsel %vm676, %v3657, %v3678
      %3686 = vst [vmem:[#allocation4 + $0x90] sm:$0xff] %v3669
      %3687 = vst [vmem:[#allocation4 + $0x98] sm:$0xff] %v3671
      %3688 = vst [vmem:[#allocation4 + $0xa0] sm:$0xff] %v3673
      %3689 = vst [vmem:[#allocation4 + $0xa8] sm:$0xff] %v3675
      %3690 = vst [vmem:[#allocation4 + $0xb0] sm:$0xff] %v3677
      %3691 = vst [vmem:[#allocation4 + $0xb8] sm:$0xff] %v3679
      %v3692 = vld [vmem:[#allocation3 + $0x4] sm:$0xff]
      %v3693 = vld [vmem:[#allocation3 + $0xc] sm:$0xff]
      %v3694 = vld [vmem:[#allocation3 + $0x14] sm:$0xff]
      %v3695 = vld [vmem:[#allocation3 + $0x2c] sm:$0xff]
      %v3696 = vld [vmem:[#allocation3 + $0x34] sm:$0xff]
      %v3697 = vld [vmem:[#allocation3 + $0x3c] sm:$0xff]
      %3698 = vst [vmem:[#allocation4 + $0xc0] sm:$0xff] %v3692
      %3699 = vst [vmem:[#allocation4 + $0xc8] sm:$0xff] %v3693
      %3700 = vst [vmem:[#allocation4 + $0xd0] sm:$0xff] %v3694
      %3701 = vst [vmem:[#allocation4 + $0xd8] sm:$0xff] %v3695
      %3702 = vst [vmem:[#allocation4 + $0xe0] sm:$0xff] %v3696
      %3703 = vst [vmem:[#allocation4 + $0xe8] sm:$0xff] %v3697
      %v3704 = vld [vmem:[#allocation3 + $0x4] sm:$0xff]
      %v3705 = vld [vmem:[#allocation3 + $0xc] sm:$0xff]
      %v3706 = vld [vmem:[#allocation3 + $0x14] sm:$0xff]
      %v3707 = vld [vmem:[#allocation3 + $0x1c] sm:$0xf]
      %v3708 = vld [vmem:[#allocation3 + $0x2c] sm:$0xff]
      %v3709 = vld [vmem:[#allocation3 + $0x34] sm:$0xff]
      %v3710 = vld [vmem:[#allocation3 + $0x3c] sm:$0xff]
      %v3711 = vld [vmem:[#allocation3 + $0x44] sm:$0xf]
      %3720 = vrot.lane.b32.xlu0 %v3704, 127
      %v3721 = vpop.permute.xlu0 %3720
      %3722 = vrot.lane.b32.xlu0 %v3705, 127
      %v3723 = vpop.permute.xlu0 %3722
      %3724 = vrot.lane.b32.xlu0 %v3706, 127
      %v3725 = vpop.permute.xlu0 %3724
      %3726 = vrot.lane.b32.xlu0 %v3707, 127
      %v3727 = vpop.permute.xlu0 %3726
      %3728 = vrot.lane.b32.xlu0 %v3708, 127
      %v3729 = vpop.permute.xlu0 %3728
      %3730 = vrot.lane.b32.xlu0 %v3709, 127
      %v3731 = vpop.permute.xlu0 %3730
      %3732 = vrot.lane.b32.xlu0 %v3710, 127
      %v3733 = vpop.permute.xlu0 %3732
      %3734 = vrot.lane.b32.xlu0 %v3711, 127
      %v3735 = vpop.permute.xlu0 %3734
      %v3736 = vrot.slane %v3721, 4
      %v3737 = vrot.slane %v3723, 4
      %v3738 = vrot.slane %v3725, 4
      %v3739 = vrot.slane %v3727, 4
      %v3740 = vrot.slane %v3729, 4
      %v3741 = vrot.slane %v3731, 4
      %v3742 = vrot.slane %v3733, 4
      %v3743 = vrot.slane %v3735, 4
      %v3744 = vsel %vm479, %v3736, %v3737
      %v3745 = vsel %vm753, %v3721, %v3744
      %v3746 = vsel %vm479, %v3737, %v3738
      %v3747 = vsel %vm753, %v3723, %v3746
      %v3748 = vsel %vm479, %v3738, %v3739
      %v3749 = vsel %vm753, %v3725, %v3748
      %v3750 = vsel %vm479, %v3740, %v3741
      %v3751 = vsel %vm753, %v3729, %v3750
      %v3752 = vsel %vm479, %v3741, %v3742
      %v3753 = vsel %vm753, %v3731, %v3752
      %v3754 = vsel %vm479, %v3742, %v3743
      %v3755 = vsel %vm753, %v3733, %v3754
      %3762 = vst [vmem:[#allocation4 + $0xf0] sm:$0xff] %v3745
      %3763 = vst [vmem:[#allocation4 + $0xf8] sm:$0xff] %v3747
      %3764 = vst [vmem:[#allocation4 + $0x100] sm:$0xff] %v3749
      %3765 = vst [vmem:[#allocation4 + $0x108] sm:$0xff] %v3751
      %3766 = vst [vmem:[#allocation4 + $0x110] sm:$0xff] %v3753
      %3767 = vst [vmem:[#allocation4 + $0x118] sm:$0xff] %v3755
      %v3768 = vld [vmem:[#allocation3 + $0x4] sm:$0xff]
      %v3769 = vld [vmem:[#allocation3 + $0xc] sm:$0xff]
      %v3770 = vld [vmem:[#allocation3 + $0x14] sm:$0xff]
      %v3771 = vld [vmem:[#allocation3 + $0x1c] sm:$0xf]
      %v3772 = vld [vmem:[#allocation3 + $0x2c] sm:$0xff]
      %v3773 = vld [vmem:[#allocation3 + $0x34] sm:$0xff]
      %v3774 = vld [vmem:[#allocation3 + $0x3c] sm:$0xff]
      %v3775 = vld [vmem:[#allocation3 + $0x44] sm:$0xf]
      %3784 = vrot.lane.b32.xlu0 %v3768, 119
      %v3785 = vpop.permute.xlu0 %3784
      %3786 = vrot.lane.b32.xlu0 %v3769, 119
      %v3787 = vpop.permute.xlu0 %3786
      %3788 = vrot.lane.b32.xlu0 %v3770, 119
      %v3789 = vpop.permute.xlu0 %3788
      %3790 = vrot.lane.b32.xlu0 %v3771, 119
      %v3791 = vpop.permute.xlu0 %3790
      %3792 = vrot.lane.b32.xlu0 %v3772, 119
      %v3793 = vpop.permute.xlu0 %3792
      %3794 = vrot.lane.b32.xlu0 %v3773, 119
      %v3795 = vpop.permute.xlu0 %3794
      %3796 = vrot.lane.b32.xlu0 %v3774, 119
      %v3797 = vpop.permute.xlu0 %3796
      %3798 = vrot.lane.b32.xlu0 %v3775, 119
      %v3799 = vpop.permute.xlu0 %3798
      %v3800 = vrot.slane %v3785, 4
      %v3801 = vrot.slane %v3787, 4
      %v3802 = vrot.slane %v3789, 4
      %v3803 = vrot.slane %v3791, 4
      %v3804 = vrot.slane %v3793, 4
      %v3805 = vrot.slane %v3795, 4
      %v3806 = vrot.slane %v3797, 4
      %v3807 = vrot.slane %v3799, 4
      %v3808 = vsel %vm479, %v3800, %v3801
      %v3809 = vsel %vm818, %v3785, %v3808
      %v3810 = vsel %vm479, %v3801, %v3802
      %v3811 = vsel %vm818, %v3787, %v3810
      %v3812 = vsel %vm479, %v3802, %v3803
      %v3813 = vsel %vm818, %v3789, %v3812
      %v3814 = vsel %vm479, %v3804, %v3805
      %v3815 = vsel %vm818, %v3793, %v3814
      %v3816 = vsel %vm479, %v3805, %v3806
      %v3817 = vsel %vm818, %v3795, %v3816
      %v3818 = vsel %vm479, %v3806, %v3807
      %v3819 = vsel %vm818, %v3797, %v3818
      %3826 = vst [vmem:[#allocation4 + $0x120] sm:$0xff] %v3809
      %3827 = vst [vmem:[#allocation4 + $0x128] sm:$0xff] %v3811
      %3828 = vst [vmem:[#allocation4 + $0x130] sm:$0xff] %v3813
      %3829 = vst [vmem:[#allocation4 + $0x138] sm:$0xff] %v3815
      %3830 = vst [vmem:[#allocation4 + $0x140] sm:$0xff] %v3817
      %3831 = vst [vmem:[#allocation4 + $0x148] sm:$0xff] %v3819
      %v3832 = vld [vmem:[#allocation3 + $0x4] sm:$0xff]
      %v3833 = vld [vmem:[#allocation3 + $0xc] sm:$0xff]
      %v3834 = vld [vmem:[#allocation3 + $0x14] sm:$0xff]
      %v3835 = vld [vmem:[#allocation3 + $0x1c] sm:$0xf]
      %v3836 = vld [vmem:[#allocation3 + $0x2c] sm:$0xff]
      %v3837 = vld [vmem:[#allocation3 + $0x34] sm:$0xff]
      %v3838 = vld [vmem:[#allocation3 + $0x3c] sm:$0xff]
      %v3839 = vld [vmem:[#allocation3 + $0x44] sm:$0xf]
      %3848 = vrot.lane.b32.xlu0 %v3832, 118
      %v3849 = vpop.permute.xlu0 %3848
      %3850 = vrot.lane.b32.xlu0 %v3833, 118
      %v3851 = vpop.permute.xlu0 %3850
      %3852 = vrot.lane.b32.xlu0 %v3834, 118
      %v3853 = vpop.permute.xlu0 %3852
      %3854 = vrot.lane.b32.xlu0 %v3835, 118
      %v3855 = vpop.permute.xlu0 %3854
      %3856 = vrot.lane.b32.xlu0 %v3836, 118
      %v3857 = vpop.permute.xlu0 %3856
      %3858 = vrot.lane.b32.xlu0 %v3837, 118
      %v3859 = vpop.permute.xlu0 %3858
      %3860 = vrot.lane.b32.xlu0 %v3838, 118
      %v3861 = vpop.permute.xlu0 %3860
      %3862 = vrot.lane.b32.xlu0 %v3839, 118
      %v3863 = vpop.permute.xlu0 %3862
      %v3864 = vrot.slane %v3849, 4
      %v3865 = vrot.slane %v3851, 4
      %v3866 = vrot.slane %v3853, 4
      %v3867 = vrot.slane %v3855, 4
      %v3868 = vrot.slane %v3857, 4
      %v3869 = vrot.slane %v3859, 4
      %v3870 = vrot.slane %v3861, 4
      %v3871 = vrot.slane %v3863, 4
      %v3872 = vsel %vm479, %v3864, %v3865
      %v3873 = vsel %vm883, %v3849, %v3872
      %v3874 = vsel %vm479, %v3865, %v3866
      %v3875 = vsel %vm883, %v3851, %v3874
      %v3876 = vsel %vm479, %v3866, %v3867
      %v3877 = vsel %vm883, %v3853, %v3876
      %v3878 = vsel %vm479, %v3868, %v3869
      %v3879 = vsel %vm883, %v3857, %v3878
      %v3880 = vsel %vm479, %v3869, %v3870
      %v3881 = vsel %vm883, %v3859, %v3880
      %v3882 = vsel %vm479, %v3870, %v3871
      %v3883 = vsel %vm883, %v3861, %v3882
      %3890 = vst [vmem:[#allocation4 + $0x150] sm:$0xff] %v3873
      %3891 = vst [vmem:[#allocation4 + $0x158] sm:$0xff] %v3875
      %3892 = vst [vmem:[#allocation4 + $0x160] sm:$0xff] %v3877
      %3893 = vst [vmem:[#allocation4 + $0x168] sm:$0xff] %v3879
      %3894 = vst [vmem:[#allocation4 + $0x170] sm:$0xff] %v3881
      %3895 = vst [vmem:[#allocation4 + $0x178] sm:$0xff] %v3883
      %v3896 = vld [vmem:[#allocation3 + $0x4] sm:$0xff]
      %v3897 = vld [vmem:[#allocation3 + $0xc] sm:$0xff]
      %v3898 = vld [vmem:[#allocation3 + $0x14] sm:$0xff]
      %v3899 = vld [vmem:[#allocation3 + $0x1c] sm:$0xf]
      %v3900 = vld [vmem:[#allocation3 + $0x2c] sm:$0xff]
      %v3901 = vld [vmem:[#allocation3 + $0x34] sm:$0xff]
      %v3902 = vld [vmem:[#allocation3 + $0x3c] sm:$0xff]
      %v3903 = vld [vmem:[#allocation3 + $0x44] sm:$0xf]
      %3912 = vrot.lane.b32.xlu0 %v3896, 117
      %v3913 = vpop.permute.xlu0 %3912
      %3914 = vrot.lane.b32.xlu0 %v3897, 117
      %v3915 = vpop.permute.xlu0 %3914
      %3916 = vrot.lane.b32.xlu0 %v3898, 117
      %v3917 = vpop.permute.xlu0 %3916
      %3918 = vrot.lane.b32.xlu0 %v3899, 117
      %v3919 = vpop.permute.xlu0 %3918
      %3920 = vrot.lane.b32.xlu0 %v3900, 117
      %v3921 = vpop.permute.xlu0 %3920
      %3922 = vrot.lane.b32.xlu0 %v3901, 117
      %v3923 = vpop.permute.xlu0 %3922
      %3924 = vrot.lane.b32.xlu0 %v3902, 117
      %v3925 = vpop.permute.xlu0 %3924
      %3926 = vrot.lane.b32.xlu0 %v3903, 117
      %v3927 = vpop.permute.xlu0 %3926
      %v3928 = vrot.slane %v3913, 4
      %v3929 = vrot.slane %v3915, 4
      %v3930 = vrot.slane %v3917, 4
      %v3931 = vrot.slane %v3919, 4
      %v3932 = vrot.slane %v3921, 4
      %v3933 = vrot.slane %v3923, 4
      %v3934 = vrot.slane %v3925, 4
      %v3935 = vrot.slane %v3927, 4
      %v3936 = vsel %vm479, %v3928, %v3929
      %v3937 = vsel %vm948, %v3913, %v3936
      %v3938 = vsel %vm479, %v3929, %v3930
      %v3939 = vsel %vm948, %v3915, %v3938
      %v3940 = vsel %vm479, %v3930, %v3931
      %v3941 = vsel %vm948, %v3917, %v3940
      %v3942 = vsel %vm479, %v3932, %v3933
      %v3943 = vsel %vm948, %v3921, %v3942
      %v3944 = vsel %vm479, %v3933, %v3934
      %v3945 = vsel %vm948, %v3923, %v3944
      %v3946 = vsel %vm479, %v3934, %v3935
      %v3947 = vsel %vm948, %v3925, %v3946
      %3954 = vst [vmem:[#allocation4 + $0x180] sm:$0xff] %v3937
      %3955 = vst [vmem:[#allocation4 + $0x188] sm:$0xff] %v3939
      %3956 = vst [vmem:[#allocation4 + $0x190] sm:$0xff] %v3941
      %3957 = vst [vmem:[#allocation4 + $0x198] sm:$0xff] %v3943
      %3958 = vst [vmem:[#allocation4 + $0x1a0] sm:$0xff] %v3945
      %3959 = vst [vmem:[#allocation4 + $0x1a8] sm:$0xff] %v3947
      %v3960 = vld [vmem:[#allocation3 + $0x4] sm:$0xff]
      %v3961 = vld [vmem:[#allocation3 + $0xc] sm:$0xff]
      %v3962 = vld [vmem:[#allocation3 + $0x14] sm:$0xff]
      %v3963 = vld [vmem:[#allocation3 + $0x1c] sm:$0xf]
      %v3964 = vld [vmem:[#allocation3 + $0x2c] sm:$0xff]
      %v3965 = vld [vmem:[#allocation3 + $0x34] sm:$0xff]
      %v3966 = vld [vmem:[#allocation3 + $0x3c] sm:$0xff]
      %v3967 = vld [vmem:[#allocation3 + $0x44] sm:$0xf]
      %3976 = vrot.lane.b32.xlu0 %v3960, 11
      %v3977 = vpop.permute.xlu0 %3976
      %3978 = vrot.lane.b32.xlu0 %v3961, 11
      %v3979 = vpop.permute.xlu0 %3978
      %3980 = vrot.lane.b32.xlu0 %v3962, 11
      %v3981 = vpop.permute.xlu0 %3980
      %3982 = vrot.lane.b32.xlu0 %v3963, 11
      %v3983 = vpop.permute.xlu0 %3982
      %3984 = vrot.lane.b32.xlu0 %v3964, 11
      %v3985 = vpop.permute.xlu0 %3984
      %3986 = vrot.lane.b32.xlu0 %v3965, 11
      %v3987 = vpop.permute.xlu0 %3986
      %3988 = vrot.lane.b32.xlu0 %v3966, 11
      %v3989 = vpop.permute.xlu0 %3988
      %3990 = vrot.lane.b32.xlu0 %v3967, 11
      %v3991 = vpop.permute.xlu0 %3990
      %v3992 = vrot.slane %v3977, 4
      %v3993 = vrot.slane %v3979, 4
      %v3994 = vrot.slane %v3981, 4
      %v3995 = vrot.slane %v3983, 4
      %v3996 = vrot.slane %v3985, 4
      %v3997 = vrot.slane %v3987, 4
      %v3998 = vrot.slane %v3989, 4
      %v3999 = vrot.slane %v3991, 4
      %v4000 = vsel %vm479, %v3992, %v3993
      %v4001 = vsel %vm481, %v3977, %v4000
      %v4002 = vsel %vm479, %v3993, %v3994
      %v4003 = vsel %vm481, %v3979, %v4002
      %v4004 = vsel %vm479, %v3994, %v3995
      %v4005 = vsel %vm481, %v3981, %v4004
      %v4006 = vsel %vm479, %v3996, %v3997
      %v4007 = vsel %vm481, %v3985, %v4006
      %v4008 = vsel %vm479, %v3997, %v3998
      %v4009 = vsel %vm481, %v3987, %v4008
      %v4010 = vsel %vm479, %v3998, %v3999
      %v4011 = vsel %vm481, %v3989, %v4010
      %4018 = vst [vmem:[#allocation4 + $0x1b0] sm:$0xff] %v4001
      %4019 = vst [vmem:[#allocation4 + $0x1b8] sm:$0xff] %v4003
      %4020 = vst [vmem:[#allocation4 + $0x1c0] sm:$0xff] %v4005
      %4021 = vst [vmem:[#allocation4 + $0x1c8] sm:$0xff] %v4007
      %4022 = vst [vmem:[#allocation4 + $0x1d0] sm:$0xff] %v4009
      %4023 = vst [vmem:[#allocation4 + $0x1d8] sm:$0xff] %v4011
      %v4024 = vld [vmem:[#allocation3 + $0x4] sm:$0xff]
      %v4025 = vld [vmem:[#allocation3 + $0xc] sm:$0xff]
      %v4026 = vld [vmem:[#allocation3 + $0x14] sm:$0xff]
      %v4027 = vld [vmem:[#allocation3 + $0x1c] sm:$0xf]
      %v4028 = vld [vmem:[#allocation3 + $0x2c] sm:$0xff]
      %v4029 = vld [vmem:[#allocation3 + $0x34] sm:$0xff]
      %v4030 = vld [vmem:[#allocation3 + $0x3c] sm:$0xff]
      %v4031 = vld [vmem:[#allocation3 + $0x44] sm:$0xf]
      %4040 = vrot.lane.b32.xlu0 %v4024, 10
      %v4041 = vpop.permute.xlu0 %4040
      %4042 = vrot.lane.b32.xlu0 %v4025, 10
      %v4043 = vpop.permute.xlu0 %4042
      %4044 = vrot.lane.b32.xlu0 %v4026, 10
      %v4045 = vpop.permute.xlu0 %4044
      %4046 = vrot.lane.b32.xlu0 %v4027, 10
      %v4047 = vpop.permute.xlu0 %4046
      %4048 = vrot.lane.b32.xlu0 %v4028, 10
      %v4049 = vpop.permute.xlu0 %4048
      %4050 = vrot.lane.b32.xlu0 %v4029, 10
      %v4051 = vpop.permute.xlu0 %4050
      %4052 = vrot.lane.b32.xlu0 %v4030, 10
      %v4053 = vpop.permute.xlu0 %4052
      %4054 = vrot.lane.b32.xlu0 %v4031, 10
      %v4055 = vpop.permute.xlu0 %4054
      %v4056 = vrot.slane %v4041, 4
      %v4057 = vrot.slane %v4043, 4
      %v4058 = vrot.slane %v4045, 4
      %v4059 = vrot.slane %v4047, 4
      %v4060 = vrot.slane %v4049, 4
      %v4061 = vrot.slane %v4051, 4
      %v4062 = vrot.slane %v4053, 4
      %v4063 = vrot.slane %v4055, 4
      %v4064 = vsel %vm479, %v4056, %v4057
      %v4065 = vsel %vm546, %v4041, %v4064
      %v4066 = vsel %vm479, %v4057, %v4058
      %v4067 = vsel %vm546, %v4043, %v4066
      %v4068 = vsel %vm479, %v4058, %v4059
      %v4069 = vsel %vm546, %v4045, %v4068
      %v4070 = vsel %vm479, %v4060, %v4061
      %v4071 = vsel %vm546, %v4049, %v4070
      %v4072 = vsel %vm479, %v4061, %v4062
      %v4073 = vsel %vm546, %v4051, %v4072
      %v4074 = vsel %vm479, %v4062, %v4063
      %v4075 = vsel %vm546, %v4053, %v4074
      %4082 = vst [vmem:[#allocation4 + $0x1e0] sm:$0xff] %v4065
      %4083 = vst [vmem:[#allocation4 + $0x1e8] sm:$0xff] %v4067
      %4084 = vst [vmem:[#allocation4 + $0x1f0] sm:$0xff] %v4069
      %4085 = vst [vmem:[#allocation4 + $0x1f8] sm:$0xff] %v4071
      %4086 = vst [vmem:[#allocation4 + $0x200] sm:$0xff] %v4073
      %4087 = vst [vmem:[#allocation4 + $0x208] sm:$0xff] %v4075
      %v4088 = vld [vmem:[#allocation3 + $0x4] sm:$0xff]
      %v4089 = vld [vmem:[#allocation3 + $0xc] sm:$0xff]
      %v4090 = vld [vmem:[#allocation3 + $0x14] sm:$0xff]
      %v4091 = vld [vmem:[#allocation3 + $0x1c] sm:$0xf]
      %v4092 = vld [vmem:[#allocation3 + $0x2c] sm:$0xff]
      %v4093 = vld [vmem:[#allocation3 + $0x34] sm:$0xff]
      %v4094 = vld [vmem:[#allocation3 + $0x3c] sm:$0xff]
      %v4095 = vld [vmem:[#allocation3 + $0x44] sm:$0xf]
      %4104 = vrot.lane.b32.xlu0 %v4088, 9
      %v4105 = vpop.permute.xlu0 %4104
      %4106 = vrot.lane.b32.xlu0 %v4089, 9
      %v4107 = vpop.permute.xlu0 %4106
      %4108 = vrot.lane.b32.xlu0 %v4090, 9
      %v4109 = vpop.permute.xlu0 %4108
      %4110 = vrot.lane.b32.xlu0 %v4091, 9
      %v4111 = vpop.permute.xlu0 %4110
      %4112 = vrot.lane.b32.xlu0 %v4092, 9
      %v4113 = vpop.permute.xlu0 %4112
      %4114 = vrot.lane.b32.xlu0 %v4093, 9
      %v4115 = vpop.permute.xlu0 %4114
      %4116 = vrot.lane.b32.xlu0 %v4094, 9
      %v4117 = vpop.permute.xlu0 %4116
      %4118 = vrot.lane.b32.xlu0 %v4095, 9
      %v4119 = vpop.permute.xlu0 %4118
      %v4120 = vrot.slane %v4105, 4
      %v4121 = vrot.slane %v4107, 4
      %v4122 = vrot.slane %v4109, 4
      %v4123 = vrot.slane %v4111, 4
      %v4124 = vrot.slane %v4113, 4
      %v4125 = vrot.slane %v4115, 4
      %v4126 = vrot.slane %v4117, 4
      %v4127 = vrot.slane %v4119, 4
      %v4128 = vsel %vm479, %v4120, %v4121
      %v4129 = vsel %vm611, %v4105, %v4128
      %v4130 = vsel %vm479, %v4121, %v4122
      %v4131 = vsel %vm611, %v4107, %v4130
      %v4132 = vsel %vm479, %v4122, %v4123
      %v4133 = vsel %vm611, %v4109, %v4132
      %v4134 = vsel %vm479, %v4124, %v4125
      %v4135 = vsel %vm611, %v4113, %v4134
      %v4136 = vsel %vm479, %v4125, %v4126
      %v4137 = vsel %vm611, %v4115, %v4136
      %v4138 = vsel %vm479, %v4126, %v4127
      %v4139 = vsel %vm611, %v4117, %v4138
      %4146 = vst [vmem:[#allocation4 + $0x210] sm:$0xff] %v4129
      %4147 = vst [vmem:[#allocation4 + $0x218] sm:$0xff] %v4131
      %4148 = vst [vmem:[#allocation4 + $0x220] sm:$0xff] %v4133
      %4149 = vst [vmem:[#allocation4 + $0x228] sm:$0xff] %v4135
      %4150 = vst [vmem:[#allocation4 + $0x230] sm:$0xff] %v4137
      %4151 = vst [vmem:[#allocation4 + $0x238] sm:$0xff] %v4139
      %v4152 = vld [vmem:[#allocation3 + $0x4] sm:$0xff]
      %v4153 = vld [vmem:[#allocation3 + $0xc] sm:$0xff]
      %v4154 = vld [vmem:[#allocation3 + $0x14] sm:$0xff]
      %v4155 = vld [vmem:[#allocation3 + $0x1c] sm:$0xf]
      %v4156 = vld [vmem:[#allocation3 + $0x2c] sm:$0xff]
      %v4157 = vld [vmem:[#allocation3 + $0x34] sm:$0xff]
      %v4158 = vld [vmem:[#allocation3 + $0x3c] sm:$0xff]
      %v4159 = vld [vmem:[#allocation3 + $0x44] sm:$0xf]
      %4168 = vrot.lane.b32.xlu0 %v4152, 1
      %v4169 = vpop.permute.xlu0 %4168
      %4170 = vrot.lane.b32.xlu0 %v4153, 1
      %v4171 = vpop.permute.xlu0 %4170
      %4172 = vrot.lane.b32.xlu0 %v4154, 1
      %v4173 = vpop.permute.xlu0 %4172
      %4174 = vrot.lane.b32.xlu0 %v4155, 1
      %v4175 = vpop.permute.xlu0 %4174
      %4176 = vrot.lane.b32.xlu0 %v4156, 1
      %v4177 = vpop.permute.xlu0 %4176
      %4178 = vrot.lane.b32.xlu0 %v4157, 1
      %v4179 = vpop.permute.xlu0 %4178
      %4180 = vrot.lane.b32.xlu0 %v4158, 1
      %v4181 = vpop.permute.xlu0 %4180
      %4182 = vrot.lane.b32.xlu0 %v4159, 1
      %v4183 = vpop.permute.xlu0 %4182
      %v4184 = vrot.slane %v4169, 4
      %v4185 = vrot.slane %v4171, 4
      %v4186 = vrot.slane %v4173, 4
      %v4187 = vrot.slane %v4175, 4
      %v4188 = vrot.slane %v4177, 4
      %v4189 = vrot.slane %v4179, 4
      %v4190 = vrot.slane %v4181, 4
      %v4191 = vrot.slane %v4183, 4
      %v4192 = vsel %vm479, %v4184, %v4185
      %v4193 = vsel %vm676, %v4169, %v4192
      %v4194 = vsel %vm479, %v4185, %v4186
      %v4195 = vsel %vm676, %v4171, %v4194
      %v4196 = vsel %vm479, %v4186, %v4187
      %v4197 = vsel %vm676, %v4173, %v4196
      %v4198 = vsel %vm479, %v4188, %v4189
      %v4199 = vsel %vm676, %v4177, %v4198
      %v4200 = vsel %vm479, %v4189, %v4190
      %v4201 = vsel %vm676, %v4179, %v4200
      %v4202 = vsel %vm479, %v4190, %v4191
      %v4203 = vsel %vm676, %v4181, %v4202
      %4210 = vst [vmem:[#allocation4 + $0x240] sm:$0xff] %v4193
      %4211 = vst [vmem:[#allocation4 + $0x248] sm:$0xff] %v4195
      %4212 = vst [vmem:[#allocation4 + $0x250] sm:$0xff] %v4197
      %4213 = vst [vmem:[#allocation4 + $0x258] sm:$0xff] %v4199
      %4214 = vst [vmem:[#allocation4 + $0x260] sm:$0xff] %v4201
      %4215 = vst [vmem:[#allocation4 + $0x268] sm:$0xff] %v4203
      %v4216 = vld [vmem:[#allocation3 + $0x8] sm:$0xff]
      %v4217 = vld [vmem:[#allocation3 + $0x10] sm:$0xff]
      %v4218 = vld [vmem:[#allocation3 + $0x18] sm:$0xff]
      %v4219 = vld [vmem:[#allocation3 + $0x30] sm:$0xff]
      %v4220 = vld [vmem:[#allocation3 + $0x38] sm:$0xff]
      %v4221 = vld [vmem:[#allocation3 + $0x40] sm:$0xff]
      %4222 = vst [vmem:[#allocation4 + $0x270] sm:$0xff] %v4216
      %4223 = vst [vmem:[#allocation4 + $0x278] sm:$0xff] %v4217
      %4224 = vst [vmem:[#allocation4 + $0x280] sm:$0xff] %v4218
      %4225 = vst [vmem:[#allocation4 + $0x288] sm:$0xff] %v4219
      %4226 = vst [vmem:[#allocation4 + $0x290] sm:$0xff] %v4220
      %4227 = vst [vmem:[#allocation4 + $0x298] sm:$0xff] %v4221
      %v4228 = vld [vmem:[#allocation3 + $0x8] sm:$0xff]
      %v4229 = vld [vmem:[#allocation3 + $0x10] sm:$0xff]
      %v4230 = vld [vmem:[#allocation3 + $0x18] sm:$0xff]
      %v4231 = vld [vmem:[#allocation3 + $0x20] sm:$0xf]
      %v4232 = vld [vmem:[#allocation3 + $0x30] sm:$0xff]
      %v4233 = vld [vmem:[#allocation3 + $0x38] sm:$0xff]
      %v4234 = vld [vmem:[#allocation3 + $0x40] sm:$0xff]
      %v4235 = vld [vmem:[#allocation3 + $0x48] sm:$0xf]
      %4244 = vrot.lane.b32.xlu0 %v4228, 127
      %v4245 = vpop.permute.xlu0 %4244
      %4246 = vrot.lane.b32.xlu0 %v4229, 127
      %v4247 = vpop.permute.xlu0 %4246
      %4248 = vrot.lane.b32.xlu0 %v4230, 127
      %v4249 = vpop.permute.xlu0 %4248
      %4250 = vrot.lane.b32.xlu0 %v4231, 127
      %v4251 = vpop.permute.xlu0 %4250
      %4252 = vrot.lane.b32.xlu0 %v4232, 127
      %v4253 = vpop.permute.xlu0 %4252
      %4254 = vrot.lane.b32.xlu0 %v4233, 127
      %v4255 = vpop.permute.xlu0 %4254
      %4256 = vrot.lane.b32.xlu0 %v4234, 127
      %v4257 = vpop.permute.xlu0 %4256
      %4258 = vrot.lane.b32.xlu0 %v4235, 127
      %v4259 = vpop.permute.xlu0 %4258
      %v4260 = vrot.slane %v4245, 4
      %v4261 = vrot.slane %v4247, 4
      %v4262 = vrot.slane %v4249, 4
      %v4263 = vrot.slane %v4251, 4
      %v4264 = vrot.slane %v4253, 4
      %v4265 = vrot.slane %v4255, 4
      %v4266 = vrot.slane %v4257, 4
      %v4267 = vrot.slane %v4259, 4
      %v4268 = vsel %vm479, %v4260, %v4261
      %v4269 = vsel %vm753, %v4245, %v4268
      %v4270 = vsel %vm479, %v4261, %v4262
      %v4271 = vsel %vm753, %v4247, %v4270
      %v4272 = vsel %vm479, %v4262, %v4263
      %v4273 = vsel %vm753, %v4249, %v4272
      %v4274 = vsel %vm479, %v4264, %v4265
      %v4275 = vsel %vm753, %v4253, %v4274
      %v4276 = vsel %vm479, %v4265, %v4266
      %v4277 = vsel %vm753, %v4255, %v4276
      %v4278 = vsel %vm479, %v4266, %v4267
      %v4279 = vsel %vm753, %v4257, %v4278
      %4286 = vst [vmem:[#allocation4 + $0x2a0] sm:$0xff] %v4269
      %4287 = vst [vmem:[#allocation4 + $0x2a8] sm:$0xff] %v4271
      %4288 = vst [vmem:[#allocation4 + $0x2b0] sm:$0xff] %v4273
      %4289 = vst [vmem:[#allocation4 + $0x2b8] sm:$0xff] %v4275
      %4290 = vst [vmem:[#allocation4 + $0x2c0] sm:$0xff] %v4277
      %4291 = vst [vmem:[#allocation4 + $0x2c8] sm:$0xff] %v4279
      %v4292 = vld [vmem:[#allocation3 + $0x8] sm:$0xff]
      %v4293 = vld [vmem:[#allocation3 + $0x10] sm:$0xff]
      %v4294 = vld [vmem:[#allocation3 + $0x18] sm:$0xff]
      %v4295 = vld [vmem:[#allocation3 + $0x20] sm:$0xf]
      %v4296 = vld [vmem:[#allocation3 + $0x30] sm:$0xff]
      %v4297 = vld [vmem:[#allocation3 + $0x38] sm:$0xff]
      %v4298 = vld [vmem:[#allocation3 + $0x40] sm:$0xff]
      %v4299 = vld [vmem:[#allocation3 + $0x48] sm:$0xf]
      %4308 = vrot.lane.b32.xlu0 %v4292, 119
      %v4309 = vpop.permute.xlu0 %4308
      %4310 = vrot.lane.b32.xlu0 %v4293, 119
      %v4311 = vpop.permute.xlu0 %4310
      %4312 = vrot.lane.b32.xlu0 %v4294, 119
      %v4313 = vpop.permute.xlu0 %4312
      %4314 = vrot.lane.b32.xlu0 %v4295, 119
      %v4315 = vpop.permute.xlu0 %4314
      %4316 = vrot.lane.b32.xlu0 %v4296, 119
      %v4317 = vpop.permute.xlu0 %4316
      %4318 = vrot.lane.b32.xlu0 %v4297, 119
      %v4319 = vpop.permute.xlu0 %4318
      %4320 = vrot.lane.b32.xlu0 %v4298, 119
      %v4321 = vpop.permute.xlu0 %4320
      %4322 = vrot.lane.b32.xlu0 %v4299, 119
      %v4323 = vpop.permute.xlu0 %4322
      %v4324 = vrot.slane %v4309, 4
      %v4325 = vrot.slane %v4311, 4
      %v4326 = vrot.slane %v4313, 4
      %v4327 = vrot.slane %v4315, 4
      %v4328 = vrot.slane %v4317, 4
      %v4329 = vrot.slane %v4319, 4
      %v4330 = vrot.slane %v4321, 4
      %v4331 = vrot.slane %v4323, 4
      %v4332 = vsel %vm479, %v4324, %v4325
      %v4333 = vsel %vm818, %v4309, %v4332
      %v4334 = vsel %vm479, %v4325, %v4326
      %v4335 = vsel %vm818, %v4311, %v4334
      %v4336 = vsel %vm479, %v4326, %v4327
      %v4337 = vsel %vm818, %v4313, %v4336
      %v4338 = vsel %vm479, %v4328, %v4329
      %v4339 = vsel %vm818, %v4317, %v4338
      %v4340 = vsel %vm479, %v4329, %v4330
      %v4341 = vsel %vm818, %v4319, %v4340
      %v4342 = vsel %vm479, %v4330, %v4331
      %v4343 = vsel %vm818, %v4321, %v4342
      %4350 = vst [vmem:[#allocation4 + $0x2d0] sm:$0xff] %v4333
      %4351 = vst [vmem:[#allocation4 + $0x2d8] sm:$0xff] %v4335
      %4352 = vst [vmem:[#allocation4 + $0x2e0] sm:$0xff] %v4337
      %4353 = vst [vmem:[#allocation4 + $0x2e8] sm:$0xff] %v4339
      %4354 = vst [vmem:[#allocation4 + $0x2f0] sm:$0xff] %v4341
      %4355 = vst [vmem:[#allocation4 + $0x2f8] sm:$0xff] %v4343
      %v4356 = vld [vmem:[#allocation3 + $0x8] sm:$0xff]
      %v4357 = vld [vmem:[#allocation3 + $0x10] sm:$0xff]
      %v4358 = vld [vmem:[#allocation3 + $0x18] sm:$0xff]
      %v4359 = vld [vmem:[#allocation3 + $0x20] sm:$0xf]
      %v4360 = vld [vmem:[#allocation3 + $0x30] sm:$0xff]
      %v4361 = vld [vmem:[#allocation3 + $0x38] sm:$0xff]
      %v4362 = vld [vmem:[#allocation3 + $0x40] sm:$0xff]
      %v4363 = vld [vmem:[#allocation3 + $0x48] sm:$0xf]
      %4372 = vrot.lane.b32.xlu0 %v4356, 118
      %v4373 = vpop.permute.xlu0 %4372
      %4374 = vrot.lane.b32.xlu0 %v4357, 118
      %v4375 = vpop.permute.xlu0 %4374
      %4376 = vrot.lane.b32.xlu0 %v4358, 118
      %v4377 = vpop.permute.xlu0 %4376
      %4378 = vrot.lane.b32.xlu0 %v4359, 118
      %v4379 = vpop.permute.xlu0 %4378
      %4380 = vrot.lane.b32.xlu0 %v4360, 118
      %v4381 = vpop.permute.xlu0 %4380
      %4382 = vrot.lane.b32.xlu0 %v4361, 118
      %v4383 = vpop.permute.xlu0 %4382
      %4384 = vrot.lane.b32.xlu0 %v4362, 118
      %v4385 = vpop.permute.xlu0 %4384
      %4386 = vrot.lane.b32.xlu0 %v4363, 118
      %v4387 = vpop.permute.xlu0 %4386
      %v4388 = vrot.slane %v4373, 4
      %v4389 = vrot.slane %v4375, 4
      %v4390 = vrot.slane %v4377, 4
      %v4391 = vrot.slane %v4379, 4
      %v4392 = vrot.slane %v4381, 4
      %v4393 = vrot.slane %v4383, 4
      %v4394 = vrot.slane %v4385, 4
      %v4395 = vrot.slane %v4387, 4
      %v4396 = vsel %vm479, %v4388, %v4389
      %v4397 = vsel %vm883, %v4373, %v4396
      %v4398 = vsel %vm479, %v4389, %v4390
      %v4399 = vsel %vm883, %v4375, %v4398
      %v4400 = vsel %vm479, %v4390, %v4391
      %v4401 = vsel %vm883, %v4377, %v4400
      %v4402 = vsel %vm479, %v4392, %v4393
      %v4403 = vsel %vm883, %v4381, %v4402
      %v4404 = vsel %vm479, %v4393, %v4394
      %v4405 = vsel %vm883, %v4383, %v4404
      %v4406 = vsel %vm479, %v4394, %v4395
      %v4407 = vsel %vm883, %v4385, %v4406
      %4414 = vst [vmem:[#allocation4 + $0x300] sm:$0xff] %v4397
      %4415 = vst [vmem:[#allocation4 + $0x308] sm:$0xff] %v4399
      %4416 = vst [vmem:[#allocation4 + $0x310] sm:$0xff] %v4401
      %4417 = vst [vmem:[#allocation4 + $0x318] sm:$0xff] %v4403
      %4418 = vst [vmem:[#allocation4 + $0x320] sm:$0xff] %v4405
      %4419 = vst [vmem:[#allocation4 + $0x328] sm:$0xff] %v4407
      %v4420 = vld [vmem:[#allocation3 + $0x8] sm:$0xff]
      %v4421 = vld [vmem:[#allocation3 + $0x10] sm:$0xff]
      %v4422 = vld [vmem:[#allocation3 + $0x18] sm:$0xff]
      %v4423 = vld [vmem:[#allocation3 + $0x20] sm:$0xf]
      %v4424 = vld [vmem:[#allocation3 + $0x30] sm:$0xff]
      %v4425 = vld [vmem:[#allocation3 + $0x38] sm:$0xff]
      %v4426 = vld [vmem:[#allocation3 + $0x40] sm:$0xff]
      %v4427 = vld [vmem:[#allocation3 + $0x48] sm:$0xf]
      %4436 = vrot.lane.b32.xlu0 %v4420, 117
      %v4437 = vpop.permute.xlu0 %4436
      %4438 = vrot.lane.b32.xlu0 %v4421, 117
      %v4439 = vpop.permute.xlu0 %4438
      %4440 = vrot.lane.b32.xlu0 %v4422, 117
      %v4441 = vpop.permute.xlu0 %4440
      %4442 = vrot.lane.b32.xlu0 %v4423, 117
      %v4443 = vpop.permute.xlu0 %4442
      %4444 = vrot.lane.b32.xlu0 %v4424, 117
      %v4445 = vpop.permute.xlu0 %4444
      %4446 = vrot.lane.b32.xlu0 %v4425, 117
      %v4447 = vpop.permute.xlu0 %4446
      %4448 = vrot.lane.b32.xlu0 %v4426, 117
      %v4449 = vpop.permute.xlu0 %4448
      %4450 = vrot.lane.b32.xlu0 %v4427, 117
      %v4451 = vpop.permute.xlu0 %4450
      %v4452 = vrot.slane %v4437, 4
      %v4453 = vrot.slane %v4439, 4
      %v4454 = vrot.slane %v4441, 4
      %v4455 = vrot.slane %v4443, 4
      %v4456 = vrot.slane %v4445, 4
      %v4457 = vrot.slane %v4447, 4
      %v4458 = vrot.slane %v4449, 4
      %v4459 = vrot.slane %v4451, 4
      %v4460 = vsel %vm479, %v4452, %v4453
      %v4461 = vsel %vm948, %v4437, %v4460
      %v4462 = vsel %vm479, %v4453, %v4454
      %v4463 = vsel %vm948, %v4439, %v4462
      %v4464 = vsel %vm479, %v4454, %v4455
      %v4465 = vsel %vm948, %v4441, %v4464
      %v4466 = vsel %vm479, %v4456, %v4457
      %v4467 = vsel %vm948, %v4445, %v4466
      %v4468 = vsel %vm479, %v4457, %v4458
      %v4469 = vsel %vm948, %v4447, %v4468
      %v4470 = vsel %vm479, %v4458, %v4459
      %v4471 = vsel %vm948, %v4449, %v4470
      %4478 = vst [vmem:[#allocation4 + $0x330] sm:$0xff] %v4461
      %4479 = vst [vmem:[#allocation4 + $0x338] sm:$0xff] %v4463
      %4480 = vst [vmem:[#allocation4 + $0x340] sm:$0xff] %v4465
      %4481 = vst [vmem:[#allocation4 + $0x348] sm:$0xff] %v4467
      %4482 = vst [vmem:[#allocation4 + $0x350] sm:$0xff] %v4469
      %4483 = vst [vmem:[#allocation4 + $0x358] sm:$0xff] %v4471
      %v4484 = vld [vmem:[#allocation3 + $0x8] sm:$0xff]
      %v4485 = vld [vmem:[#allocation3 + $0x10] sm:$0xff]
      %v4486 = vld [vmem:[#allocation3 + $0x18] sm:$0xff]
      %v4487 = vld [vmem:[#allocation3 + $0x20] sm:$0xf]
      %v4488 = vld [vmem:[#allocation3 + $0x30] sm:$0xff]
      %v4489 = vld [vmem:[#allocation3 + $0x38] sm:$0xff]
      %v4490 = vld [vmem:[#allocation3 + $0x40] sm:$0xff]
      %v4491 = vld [vmem:[#allocation3 + $0x48] sm:$0xf]
      %4500 = vrot.lane.b32.xlu0 %v4484, 11
      %v4501 = vpop.permute.xlu0 %4500
      %4502 = vrot.lane.b32.xlu0 %v4485, 11
      %v4503 = vpop.permute.xlu0 %4502
      %4504 = vrot.lane.b32.xlu0 %v4486, 11
      %v4505 = vpop.permute.xlu0 %4504
      %4506 = vrot.lane.b32.xlu0 %v4487, 11
      %v4507 = vpop.permute.xlu0 %4506
      %4508 = vrot.lane.b32.xlu0 %v4488, 11
      %v4509 = vpop.permute.xlu0 %4508
      %4510 = vrot.lane.b32.xlu0 %v4489, 11
      %v4511 = vpop.permute.xlu0 %4510
      %4512 = vrot.lane.b32.xlu0 %v4490, 11
      %v4513 = vpop.permute.xlu0 %4512
      %4514 = vrot.lane.b32.xlu0 %v4491, 11
      %v4515 = vpop.permute.xlu0 %4514
      %v4516 = vrot.slane %v4501, 4
      %v4517 = vrot.slane %v4503, 4
      %v4518 = vrot.slane %v4505, 4
      %v4519 = vrot.slane %v4507, 4
      %v4520 = vrot.slane %v4509, 4
      %v4521 = vrot.slane %v4511, 4
      %v4522 = vrot.slane %v4513, 4
      %v4523 = vrot.slane %v4515, 4
      %v4524 = vsel %vm479, %v4516, %v4517
      %v4525 = vsel %vm481, %v4501, %v4524
      %v4526 = vsel %vm479, %v4517, %v4518
      %v4527 = vsel %vm481, %v4503, %v4526
      %v4528 = vsel %vm479, %v4518, %v4519
      %v4529 = vsel %vm481, %v4505, %v4528
      %v4530 = vsel %vm479, %v4520, %v4521
      %v4531 = vsel %vm481, %v4509, %v4530
      %v4532 = vsel %vm479, %v4521, %v4522
      %v4533 = vsel %vm481, %v4511, %v4532
      %v4534 = vsel %vm479, %v4522, %v4523
      %v4535 = vsel %vm481, %v4513, %v4534
      %4542 = vst [vmem:[#allocation4 + $0x360] sm:$0xff] %v4525
      %4543 = vst [vmem:[#allocation4 + $0x368] sm:$0xff] %v4527
      %4544 = vst [vmem:[#allocation4 + $0x370] sm:$0xff] %v4529
      %4545 = vst [vmem:[#allocation4 + $0x378] sm:$0xff] %v4531
      %4546 = vst [vmem:[#allocation4 + $0x380] sm:$0xff] %v4533
      %4547 = vst [vmem:[#allocation4 + $0x388] sm:$0xff] %v4535
      %v4548 = vld [vmem:[#allocation3 + $0x8] sm:$0xff]
      %v4549 = vld [vmem:[#allocation3 + $0x10] sm:$0xff]
      %v4550 = vld [vmem:[#allocation3 + $0x18] sm:$0xff]
      %v4551 = vld [vmem:[#allocation3 + $0x20] sm:$0xf]
      %v4552 = vld [vmem:[#allocation3 + $0x30] sm:$0xff]
      %v4553 = vld [vmem:[#allocation3 + $0x38] sm:$0xff]
      %v4554 = vld [vmem:[#allocation3 + $0x40] sm:$0xff]
      %v4555 = vld [vmem:[#allocation3 + $0x48] sm:$0xf]
      %4564 = vrot.lane.b32.xlu0 %v4548, 10
      %v4565 = vpop.permute.xlu0 %4564
      %4566 = vrot.lane.b32.xlu0 %v4549, 10
      %v4567 = vpop.permute.xlu0 %4566
      %4568 = vrot.lane.b32.xlu0 %v4550, 10
      %v4569 = vpop.permute.xlu0 %4568
      %4570 = vrot.lane.b32.xlu0 %v4551, 10
      %v4571 = vpop.permute.xlu0 %4570
      %4572 = vrot.lane.b32.xlu0 %v4552, 10
      %v4573 = vpop.permute.xlu0 %4572
      %4574 = vrot.lane.b32.xlu0 %v4553, 10
      %v4575 = vpop.permute.xlu0 %4574
      %4576 = vrot.lane.b32.xlu0 %v4554, 10
      %v4577 = vpop.permute.xlu0 %4576
      %4578 = vrot.lane.b32.xlu0 %v4555, 10
      %v4579 = vpop.permute.xlu0 %4578
      %v4580 = vrot.slane %v4565, 4
      %v4581 = vrot.slane %v4567, 4
      %v4582 = vrot.slane %v4569, 4
      %v4583 = vrot.slane %v4571, 4
      %v4584 = vrot.slane %v4573, 4
      %v4585 = vrot.slane %v4575, 4
      %v4586 = vrot.slane %v4577, 4
      %v4587 = vrot.slane %v4579, 4
      %v4588 = vsel %vm479, %v4580, %v4581
      %v4589 = vsel %vm546, %v4565, %v4588
      %v4590 = vsel %vm479, %v4581, %v4582
      %v4591 = vsel %vm546, %v4567, %v4590
      %v4592 = vsel %vm479, %v4582, %v4583
      %v4593 = vsel %vm546, %v4569, %v4592
      %v4594 = vsel %vm479, %v4584, %v4585
      %v4595 = vsel %vm546, %v4573, %v4594
      %v4596 = vsel %vm479, %v4585, %v4586
      %v4597 = vsel %vm546, %v4575, %v4596
      %v4598 = vsel %vm479, %v4586, %v4587
      %v4599 = vsel %vm546, %v4577, %v4598
      %4606 = vst [vmem:[#allocation4 + $0x390] sm:$0xff] %v4589
      %4607 = vst [vmem:[#allocation4 + $0x398] sm:$0xff] %v4591
      %4608 = vst [vmem:[#allocation4 + $0x3a0] sm:$0xff] %v4593
      %4609 = vst [vmem:[#allocation4 + $0x3a8] sm:$0xff] %v4595
      %4610 = vst [vmem:[#allocation4 + $0x3b0] sm:$0xff] %v4597
      %4611 = vst [vmem:[#allocation4 + $0x3b8] sm:$0xff] %v4599
      %v4612 = vld [vmem:[#allocation3 + $0x8] sm:$0xff]
      %v4613 = vld [vmem:[#allocation3 + $0x10] sm:$0xff]
      %v4614 = vld [vmem:[#allocation3 + $0x18] sm:$0xff]
      %v4615 = vld [vmem:[#allocation3 + $0x20] sm:$0xf]
      %v4616 = vld [vmem:[#allocation3 + $0x30] sm:$0xff]
      %v4617 = vld [vmem:[#allocation3 + $0x38] sm:$0xff]
      %v4618 = vld [vmem:[#allocation3 + $0x40] sm:$0xff]
      %v4619 = vld [vmem:[#allocation3 + $0x48] sm:$0xf]
      %4628 = vrot.lane.b32.xlu0 %v4612, 9
      %v4629 = vpop.permute.xlu0 %4628
      %4630 = vrot.lane.b32.xlu0 %v4613, 9
      %v4631 = vpop.permute.xlu0 %4630
      %4632 = vrot.lane.b32.xlu0 %v4614, 9
      %v4633 = vpop.permute.xlu0 %4632
      %4634 = vrot.lane.b32.xlu0 %v4615, 9
      %v4635 = vpop.permute.xlu0 %4634
      %4636 = vrot.lane.b32.xlu0 %v4616, 9
      %v4637 = vpop.permute.xlu0 %4636
      %4638 = vrot.lane.b32.xlu0 %v4617, 9
      %v4639 = vpop.permute.xlu0 %4638
      %4640 = vrot.lane.b32.xlu0 %v4618, 9
      %v4641 = vpop.permute.xlu0 %4640
      %4642 = vrot.lane.b32.xlu0 %v4619, 9
      %v4643 = vpop.permute.xlu0 %4642
      %v4644 = vrot.slane %v4629, 4
      %v4645 = vrot.slane %v4631, 4
      %v4646 = vrot.slane %v4633, 4
      %v4647 = vrot.slane %v4635, 4
      %v4648 = vrot.slane %v4637, 4
      %v4649 = vrot.slane %v4639, 4
      %v4650 = vrot.slane %v4641, 4
      %v4651 = vrot.slane %v4643, 4
      %v4652 = vsel %vm479, %v4644, %v4645
      %v4653 = vsel %vm611, %v4629, %v4652
      %v4654 = vsel %vm479, %v4645, %v4646
      %v4655 = vsel %vm611, %v4631, %v4654
      %v4656 = vsel %vm479, %v4646, %v4647
      %v4657 = vsel %vm611, %v4633, %v4656
      %v4658 = vsel %vm479, %v4648, %v4649
      %v4659 = vsel %vm611, %v4637, %v4658
      %v4660 = vsel %vm479, %v4649, %v4650
      %v4661 = vsel %vm611, %v4639, %v4660
      %v4662 = vsel %vm479, %v4650, %v4651
      %v4663 = vsel %vm611, %v4641, %v4662
      %4670 = vst [vmem:[#allocation4 + $0x3c0] sm:$0xff] %v4653
      %4671 = vst [vmem:[#allocation4 + $0x3c8] sm:$0xff] %v4655
      %4672 = vst [vmem:[#allocation4 + $0x3d0] sm:$0xff] %v4657
      %4673 = vst [vmem:[#allocation4 + $0x3d8] sm:$0xff] %v4659
      %4674 = vst [vmem:[#allocation4 + $0x3e0] sm:$0xff] %v4661
      %4675 = vst [vmem:[#allocation4 + $0x3e8] sm:$0xff] %v4663
      %v4676 = vld [vmem:[#allocation3 + $0x8] sm:$0xff]
      %v4677 = vld [vmem:[#allocation3 + $0x10] sm:$0xff]
      %v4678 = vld [vmem:[#allocation3 + $0x18] sm:$0xff]
      %v4679 = vld [vmem:[#allocation3 + $0x20] sm:$0xf]
      %v4680 = vld [vmem:[#allocation3 + $0x30] sm:$0xff]
      %v4681 = vld [vmem:[#allocation3 + $0x38] sm:$0xff]
      %v4682 = vld [vmem:[#allocation3 + $0x40] sm:$0xff]
      %v4683 = vld [vmem:[#allocation3 + $0x48] sm:$0xf]
      %4692 = vrot.lane.b32.xlu0 %v4676, 1
      %v4693 = vpop.permute.xlu0 %4692
      %4694 = vrot.lane.b32.xlu0 %v4677, 1
      %v4695 = vpop.permute.xlu0 %4694
      %4696 = vrot.lane.b32.xlu0 %v4678, 1
      %v4697 = vpop.permute.xlu0 %4696
      %4698 = vrot.lane.b32.xlu0 %v4679, 1
      %v4699 = vpop.permute.xlu0 %4698
      %4700 = vrot.lane.b32.xlu0 %v4680, 1
      %v4701 = vpop.permute.xlu0 %4700
      %4702 = vrot.lane.b32.xlu0 %v4681, 1
      %v4703 = vpop.permute.xlu0 %4702
      %4704 = vrot.lane.b32.xlu0 %v4682, 1
      %v4705 = vpop.permute.xlu0 %4704
      %4706 = vrot.lane.b32.xlu0 %v4683, 1
      %v4707 = vpop.permute.xlu0 %4706
      %v4708 = vrot.slane %v4693, 4
      %v4709 = vrot.slane %v4695, 4
      %v4710 = vrot.slane %v4697, 4
      %v4711 = vrot.slane %v4699, 4
      %v4712 = vrot.slane %v4701, 4
      %v4713 = vrot.slane %v4703, 4
      %v4714 = vrot.slane %v4705, 4
      %v4715 = vrot.slane %v4707, 4
      %v4716 = vsel %vm479, %v4708, %v4709
      %v4717 = vsel %vm676, %v4693, %v4716
      %v4718 = vsel %vm479, %v4709, %v4710
      %v4719 = vsel %vm676, %v4695, %v4718
      %v4720 = vsel %vm479, %v4710, %v4711
      %v4721 = vsel %vm676, %v4697, %v4720
      %v4722 = vsel %vm479, %v4712, %v4713
      %v4723 = vsel %vm676, %v4701, %v4722
      %v4724 = vsel %vm479, %v4713, %v4714
      %v4725 = vsel %vm676, %v4703, %v4724
      %v4726 = vsel %vm479, %v4714, %v4715
      %v4727 = vsel %vm676, %v4705, %v4726
      %4734 = vst [vmem:[#allocation4 + $0x3f0] sm:$0xff] %v4717
      %4735 = vst [vmem:[#allocation4 + $0x3f8] sm:$0xff] %v4719
      %4736 = vst [vmem:[#allocation4 + $0x400] sm:$0xff] %v4721
      %4737 = vst [vmem:[#allocation4 + $0x408] sm:$0xff] %v4723
      %4738 = vst [vmem:[#allocation4 + $0x410] sm:$0xff] %v4725
      %4739 = vst [vmem:[#allocation4 + $0x418] sm:$0xff] %v4727
      %v4740 = vld [vmem:[#allocation3 + $0xc] sm:$0xff]
      %v4741 = vld [vmem:[#allocation3 + $0x14] sm:$0xff]
      %v4742 = vld [vmem:[#allocation3 + $0x1c] sm:$0xff]
      %v4743 = vld [vmem:[#allocation3 + $0x34] sm:$0xff]
      %v4744 = vld [vmem:[#allocation3 + $0x3c] sm:$0xff]
      %v4745 = vld [vmem:[#allocation3 + $0x44] sm:$0xff]
      %4746 = vst [vmem:[#allocation4 + $0x420] sm:$0xff] %v4740
      %4747 = vst [vmem:[#allocation4 + $0x428] sm:$0xff] %v4741
      %4748 = vst [vmem:[#allocation4 + $0x430] sm:$0xff] %v4742
      %4749 = vst [vmem:[#allocation4 + $0x438] sm:$0xff] %v4743
      %4750 = vst [vmem:[#allocation4 + $0x440] sm:$0xff] %v4744
      %4751 = vst [vmem:[#allocation4 + $0x448] sm:$0xff] %v4745
      %v4752 = vld [vmem:[#allocation3 + $0xc] sm:$0xff]
      %v4753 = vld [vmem:[#allocation3 + $0x14] sm:$0xff]
      %v4754 = vld [vmem:[#allocation3 + $0x1c] sm:$0xff]
      %v4755 = vld [vmem:[#allocation3 + $0x24] sm:$0xf]
      %v4756 = vld [vmem:[#allocation3 + $0x34] sm:$0xff]
      %v4757 = vld [vmem:[#allocation3 + $0x3c] sm:$0xff]
      %v4758 = vld [vmem:[#allocation3 + $0x44] sm:$0xff]
      %v4759 = vld [vmem:[#allocation3 + $0x4c] sm:$0xf]
      %4768 = vrot.lane.b32.xlu0 %v4752, 127
      %v4769 = vpop.permute.xlu0 %4768
      %4770 = vrot.lane.b32.xlu0 %v4753, 127
      %v4771 = vpop.permute.xlu0 %4770
      %4772 = vrot.lane.b32.xlu0 %v4754, 127
      %v4773 = vpop.permute.xlu0 %4772
      %4774 = vrot.lane.b32.xlu0 %v4755, 127
      %v4775 = vpop.permute.xlu0 %4774
      %4776 = vrot.lane.b32.xlu0 %v4756, 127
      %v4777 = vpop.permute.xlu0 %4776
      %4778 = vrot.lane.b32.xlu0 %v4757, 127
      %v4779 = vpop.permute.xlu0 %4778
      %4780 = vrot.lane.b32.xlu0 %v4758, 127
      %v4781 = vpop.permute.xlu0 %4780
      %4782 = vrot.lane.b32.xlu0 %v4759, 127
      %v4783 = vpop.permute.xlu0 %4782
      %v4784 = vrot.slane %v4769, 4
      %v4785 = vrot.slane %v4771, 4
      %v4786 = vrot.slane %v4773, 4
      %v4787 = vrot.slane %v4775, 4
      %v4788 = vrot.slane %v4777, 4
      %v4789 = vrot.slane %v4779, 4
      %v4790 = vrot.slane %v4781, 4
      %v4791 = vrot.slane %v4783, 4
      %v4792 = vsel %vm479, %v4784, %v4785
      %v4793 = vsel %vm753, %v4769, %v4792
      %v4794 = vsel %vm479, %v4785, %v4786
      %v4795 = vsel %vm753, %v4771, %v4794
      %v4796 = vsel %vm479, %v4786, %v4787
      %v4797 = vsel %vm753, %v4773, %v4796
      %v4798 = vsel %vm479, %v4788, %v4789
      %v4799 = vsel %vm753, %v4777, %v4798
      %v4800 = vsel %vm479, %v4789, %v4790
      %v4801 = vsel %vm753, %v4779, %v4800
      %v4802 = vsel %vm479, %v4790, %v4791
      %v4803 = vsel %vm753, %v4781, %v4802
      %4810 = vst [vmem:[#allocation4 + $0x450] sm:$0xff] %v4793
      %4811 = vst [vmem:[#allocation4 + $0x458] sm:$0xff] %v4795
      %4812 = vst [vmem:[#allocation4 + $0x460] sm:$0xff] %v4797
      %4813 = vst [vmem:[#allocation4 + $0x468] sm:$0xff] %v4799
      %4814 = vst [vmem:[#allocation4 + $0x470] sm:$0xff] %v4801
      %4815 = vst [vmem:[#allocation4 + $0x478] sm:$0xff] %v4803
      %v4816 = vld [vmem:[#allocation3 + $0xc] sm:$0xff]
      %v4817 = vld [vmem:[#allocation3 + $0x14] sm:$0xff]
      %v4818 = vld [vmem:[#allocation3 + $0x1c] sm:$0xff]
      %v4819 = vld [vmem:[#allocation3 + $0x24] sm:$0xf]
      %v4820 = vld [vmem:[#allocation3 + $0x34] sm:$0xff]
      %v4821 = vld [vmem:[#allocation3 + $0x3c] sm:$0xff]
      %v4822 = vld [vmem:[#allocation3 + $0x44] sm:$0xff]
      %v4823 = vld [vmem:[#allocation3 + $0x4c] sm:$0xf]
      %4832 = vrot.lane.b32.xlu0 %v4816, 119
      %v4833 = vpop.permute.xlu0 %4832
      %4834 = vrot.lane.b32.xlu0 %v4817, 119
      %v4835 = vpop.permute.xlu0 %4834
      %4836 = vrot.lane.b32.xlu0 %v4818, 119
      %v4837 = vpop.permute.xlu0 %4836
      %4838 = vrot.lane.b32.xlu0 %v4819, 119
      %v4839 = vpop.permute.xlu0 %4838
      %4840 = vrot.lane.b32.xlu0 %v4820, 119
      %v4841 = vpop.permute.xlu0 %4840
      %4842 = vrot.lane.b32.xlu0 %v4821, 119
      %v4843 = vpop.permute.xlu0 %4842
      %4844 = vrot.lane.b32.xlu0 %v4822, 119
      %v4845 = vpop.permute.xlu0 %4844
      %4846 = vrot.lane.b32.xlu0 %v4823, 119
      %v4847 = vpop.permute.xlu0 %4846
      %v4848 = vrot.slane %v4833, 4
      %v4849 = vrot.slane %v4835, 4
      %v4850 = vrot.slane %v4837, 4
      %v4851 = vrot.slane %v4839, 4
      %v4852 = vrot.slane %v4841, 4
      %v4853 = vrot.slane %v4843, 4
      %v4854 = vrot.slane %v4845, 4
      %v4855 = vrot.slane %v4847, 4
      %v4856 = vsel %vm479, %v4848, %v4849
      %v4857 = vsel %vm818, %v4833, %v4856
      %v4858 = vsel %vm479, %v4849, %v4850
      %v4859 = vsel %vm818, %v4835, %v4858
      %v4860 = vsel %vm479, %v4850, %v4851
      %v4861 = vsel %vm818, %v4837, %v4860
      %v4862 = vsel %vm479, %v4852, %v4853
      %v4863 = vsel %vm818, %v4841, %v4862
      %v4864 = vsel %vm479, %v4853, %v4854
      %v4865 = vsel %vm818, %v4843, %v4864
      %v4866 = vsel %vm479, %v4854, %v4855
      %v4867 = vsel %vm818, %v4845, %v4866
      %4874 = vst [vmem:[#allocation4 + $0x480] sm:$0xff] %v4857
      %4875 = vst [vmem:[#allocation4 + $0x488] sm:$0xff] %v4859
      %4876 = vst [vmem:[#allocation4 + $0x490] sm:$0xff] %v4861
      %4877 = vst [vmem:[#allocation4 + $0x498] sm:$0xff] %v4863
      %4878 = vst [vmem:[#allocation4 + $0x4a0] sm:$0xff] %v4865
      %4879 = vst [vmem:[#allocation4 + $0x4a8] sm:$0xff] %v4867
      %v4880 = vld [vmem:[#allocation3 + $0xc] sm:$0xff]
      %v4881 = vld [vmem:[#allocation3 + $0x14] sm:$0xff]
      %v4882 = vld [vmem:[#allocation3 + $0x1c] sm:$0xff]
      %v4883 = vld [vmem:[#allocation3 + $0x24] sm:$0xf]
      %v4884 = vld [vmem:[#allocation3 + $0x34] sm:$0xff]
      %v4885 = vld [vmem:[#allocation3 + $0x3c] sm:$0xff]
      %v4886 = vld [vmem:[#allocation3 + $0x44] sm:$0xff]
      %v4887 = vld [vmem:[#allocation3 + $0x4c] sm:$0xf]
      %4896 = vrot.lane.b32.xlu0 %v4880, 118
      %v4897 = vpop.permute.xlu0 %4896
      %4898 = vrot.lane.b32.xlu0 %v4881, 118
      %v4899 = vpop.permute.xlu0 %4898
      %4900 = vrot.lane.b32.xlu0 %v4882, 118
      %v4901 = vpop.permute.xlu0 %4900
      %4902 = vrot.lane.b32.xlu0 %v4883, 118
      %v4903 = vpop.permute.xlu0 %4902
      %4904 = vrot.lane.b32.xlu0 %v4884, 118
      %v4905 = vpop.permute.xlu0 %4904
      %4906 = vrot.lane.b32.xlu0 %v4885, 118
      %v4907 = vpop.permute.xlu0 %4906
      %4908 = vrot.lane.b32.xlu0 %v4886, 118
      %v4909 = vpop.permute.xlu0 %4908
      %4910 = vrot.lane.b32.xlu0 %v4887, 118
      %v4911 = vpop.permute.xlu0 %4910
      %v4912 = vrot.slane %v4897, 4
      %v4913 = vrot.slane %v4899, 4
      %v4914 = vrot.slane %v4901, 4
      %v4915 = vrot.slane %v4903, 4
      %v4916 = vrot.slane %v4905, 4
      %v4917 = vrot.slane %v4907, 4
      %v4918 = vrot.slane %v4909, 4
      %v4919 = vrot.slane %v4911, 4
      %v4920 = vsel %vm479, %v4912, %v4913
      %v4921 = vsel %vm883, %v4897, %v4920
      %v4922 = vsel %vm479, %v4913, %v4914
      %v4923 = vsel %vm883, %v4899, %v4922
      %v4924 = vsel %vm479, %v4914, %v4915
      %v4925 = vsel %vm883, %v4901, %v4924
      %v4926 = vsel %vm479, %v4916, %v4917
      %v4927 = vsel %vm883, %v4905, %v4926
      %v4928 = vsel %vm479, %v4917, %v4918
      %v4929 = vsel %vm883, %v4907, %v4928
      %v4930 = vsel %vm479, %v4918, %v4919
      %v4931 = vsel %vm883, %v4909, %v4930
      %4938 = vst [vmem:[#allocation4 + $0x4b0] sm:$0xff] %v4921
      %4939 = vst [vmem:[#allocation4 + $0x4b8] sm:$0xff] %v4923
      %4940 = vst [vmem:[#allocation4 + $0x4c0] sm:$0xff] %v4925
      %4941 = vst [vmem:[#allocation4 + $0x4c8] sm:$0xff] %v4927
      %4942 = vst [vmem:[#allocation4 + $0x4d0] sm:$0xff] %v4929
      %4943 = vst [vmem:[#allocation4 + $0x4d8] sm:$0xff] %v4931
      %v4944 = vld [vmem:[#allocation3 + $0xc] sm:$0xff]
      %v4945 = vld [vmem:[#allocation3 + $0x14] sm:$0xff]
      %v4946 = vld [vmem:[#allocation3 + $0x1c] sm:$0xff]
      %v4947 = vld [vmem:[#allocation3 + $0x24] sm:$0xf]
      %v4948 = vld [vmem:[#allocation3 + $0x34] sm:$0xff]
      %v4949 = vld [vmem:[#allocation3 + $0x3c] sm:$0xff]
      %v4950 = vld [vmem:[#allocation3 + $0x44] sm:$0xff]
      %v4951 = vld [vmem:[#allocation3 + $0x4c] sm:$0xf]
      %4960 = vrot.lane.b32.xlu0 %v4944, 117
      %v4961 = vpop.permute.xlu0 %4960
      %4962 = vrot.lane.b32.xlu0 %v4945, 117
      %v4963 = vpop.permute.xlu0 %4962
      %4964 = vrot.lane.b32.xlu0 %v4946, 117
      %v4965 = vpop.permute.xlu0 %4964
      %4966 = vrot.lane.b32.xlu0 %v4947, 117
      %v4967 = vpop.permute.xlu0 %4966
      %4968 = vrot.lane.b32.xlu0 %v4948, 117
      %v4969 = vpop.permute.xlu0 %4968
      %4970 = vrot.lane.b32.xlu0 %v4949, 117
      %v4971 = vpop.permute.xlu0 %4970
      %4972 = vrot.lane.b32.xlu0 %v4950, 117
      %v4973 = vpop.permute.xlu0 %4972
      %4974 = vrot.lane.b32.xlu0 %v4951, 117
      %v4975 = vpop.permute.xlu0 %4974
      %v4976 = vrot.slane %v4961, 4
      %v4977 = vrot.slane %v4963, 4
      %v4978 = vrot.slane %v4965, 4
      %v4979 = vrot.slane %v4967, 4
      %v4980 = vrot.slane %v4969, 4
      %v4981 = vrot.slane %v4971, 4
      %v4982 = vrot.slane %v4973, 4
      %v4983 = vrot.slane %v4975, 4
      %v4984 = vsel %vm479, %v4976, %v4977
      %v4985 = vsel %vm948, %v4961, %v4984
      %v4986 = vsel %vm479, %v4977, %v4978
      %v4987 = vsel %vm948, %v4963, %v4986
      %v4988 = vsel %vm479, %v4978, %v4979
      %v4989 = vsel %vm948, %v4965, %v4988
      %v4990 = vsel %vm479, %v4980, %v4981
      %v4991 = vsel %vm948, %v4969, %v4990
      %v4992 = vsel %vm479, %v4981, %v4982
      %v4993 = vsel %vm948, %v4971, %v4992
      %v4994 = vsel %vm479, %v4982, %v4983
      %v4995 = vsel %vm948, %v4973, %v4994
      %5002 = vst [vmem:[#allocation4 + $0x4e0] sm:$0xff] %v4985
      %5003 = vst [vmem:[#allocation4 + $0x4e8] sm:$0xff] %v4987
      %5004 = vst [vmem:[#allocation4 + $0x4f0] sm:$0xff] %v4989
      %5005 = vst [vmem:[#allocation4 + $0x4f8] sm:$0xff] %v4991
      %5006 = vst [vmem:[#allocation4 + $0x500] sm:$0xff] %v4993
      %5007 = vst [vmem:[#allocation4 + $0x508] sm:$0xff] %v4995
      %v5008 = vld [vmem:[#allocation4] sm:$0xff]
      %v5009 = vld [vmem:[#allocation4 + $0x8] sm:$0xff]
      %v5010 = vld [vmem:[#allocation4 + $0x10] sm:$0xff]
      %v5011 = vld [vmem:[#allocation4 + $0x18] sm:$0xff]
      %v5012 = vld [vmem:[#allocation4 + $0x20] sm:$0xff]
      %v5013 = vld [vmem:[#allocation4 + $0x28] sm:$0xff]
      %v5014 = vld [vmem:[#allocation4 + $0x30] sm:$0xff]
      %v5015 = vld [vmem:[#allocation4 + $0x38] sm:$0xff]
      %v5016 = vld [vmem:[#allocation4 + $0x40] sm:$0xff]
      %v5017 = vld [vmem:[#allocation4 + $0x48] sm:$0xff]
      %v5018 = vld [vmem:[#allocation4 + $0x50] sm:$0xff]
      %v5019 = vld [vmem:[#allocation4 + $0x58] sm:$0xff]
      %v5020 = vld [vmem:[#allocation4 + $0x60] sm:$0xff]
      %v5021 = vld [vmem:[#allocation4 + $0x68] sm:$0xff]
      %v5022 = vld [vmem:[#allocation4 + $0x70] sm:$0xff]
      %v5023 = vld [vmem:[#allocation4 + $0x78] sm:$0xff]
      %v5024 = vld [vmem:[#allocation4 + $0x80] sm:$0xff]
      %v5025 = vld [vmem:[#allocation4 + $0x88] sm:$0xff]
      %v5026 = vld [vmem:[#allocation4 + $0x90] sm:$0xff]
      %v5027 = vld [vmem:[#allocation4 + $0x98] sm:$0xff]
      %v5028 = vld [vmem:[#allocation4 + $0xa0] sm:$0xff]
      %v5029 = vld [vmem:[#allocation4 + $0xa8] sm:$0xff]
      %v5030 = vld [vmem:[#allocation4 + $0xb0] sm:$0xff]
      %v5031 = vld [vmem:[#allocation4 + $0xb8] sm:$0xff]
      %v5032 = vld [vmem:[#allocation4 + $0xc0] sm:$0xff]
      %v5033 = vld [vmem:[#allocation4 + $0xc8] sm:$0xff]
      %v5034 = vld [vmem:[#allocation4 + $0xd0] sm:$0xff]
      %v5035 = vld [vmem:[#allocation4 + $0xd8] sm:$0xff]
      %v5036 = vld [vmem:[#allocation4 + $0xe0] sm:$0xff]
      %v5037 = vld [vmem:[#allocation4 + $0xe8] sm:$0xff]
      %v5038 = vld [vmem:[#allocation4 + $0xf0] sm:$0xff]
      %v5039 = vld [vmem:[#allocation4 + $0xf8] sm:$0xff]
      %v5040 = vld [vmem:[#allocation4 + $0x100] sm:$0xff]
      %v5041 = vld [vmem:[#allocation4 + $0x108] sm:$0xff]
      %v5042 = vld [vmem:[#allocation4 + $0x110] sm:$0xff]
      %v5043 = vld [vmem:[#allocation4 + $0x118] sm:$0xff]
      %v5044 = vld [vmem:[#allocation4 + $0x120] sm:$0xff]
      %v5045 = vld [vmem:[#allocation4 + $0x128] sm:$0xff]
      %v5046 = vld [vmem:[#allocation4 + $0x130] sm:$0xff]
      %v5047 = vld [vmem:[#allocation4 + $0x138] sm:$0xff]
      %v5048 = vld [vmem:[#allocation4 + $0x140] sm:$0xff]
      %v5049 = vld [vmem:[#allocation4 + $0x148] sm:$0xff]
      %v5050 = vld [vmem:[#allocation4 + $0x150] sm:$0xff]
      %v5051 = vld [vmem:[#allocation4 + $0x158] sm:$0xff]
      %v5052 = vld [vmem:[#allocation4 + $0x160] sm:$0xff]
      %v5053 = vld [vmem:[#allocation4 + $0x168] sm:$0xff]
      %v5054 = vld [vmem:[#allocation4 + $0x170] sm:$0xff]
      %v5055 = vld [vmem:[#allocation4 + $0x178] sm:$0xff]
      %v5056 = vld [vmem:[#allocation4 + $0x180] sm:$0xff]
      %v5057 = vld [vmem:[#allocation4 + $0x188] sm:$0xff]
      %v5058 = vld [vmem:[#allocation4 + $0x190] sm:$0xff]
      %v5059 = vld [vmem:[#allocation4 + $0x198] sm:$0xff]
      %v5060 = vld [vmem:[#allocation4 + $0x1a0] sm:$0xff]
      %v5061 = vld [vmem:[#allocation4 + $0x1a8] sm:$0xff]
      %v5062 = vld [vmem:[#allocation4 + $0x1b0] sm:$0xff]
      %v5063 = vld [vmem:[#allocation4 + $0x1b8] sm:$0xff]
      %v5064 = vld [vmem:[#allocation4 + $0x1c0] sm:$0xff]
      %v5065 = vld [vmem:[#allocation4 + $0x1c8] sm:$0xff]
      %v5066 = vld [vmem:[#allocation4 + $0x1d0] sm:$0xff]
      %v5067 = vld [vmem:[#allocation4 + $0x1d8] sm:$0xff]
      %v5068 = vld [vmem:[#allocation4 + $0x1e0] sm:$0xff]
      %v5069 = vld [vmem:[#allocation4 + $0x1e8] sm:$0xff]
      %v5070 = vld [vmem:[#allocation4 + $0x1f0] sm:$0xff]
      %v5071 = vld [vmem:[#allocation4 + $0x1f8] sm:$0xff]
      %v5072 = vld [vmem:[#allocation4 + $0x200] sm:$0xff]
      %v5073 = vld [vmem:[#allocation4 + $0x208] sm:$0xff]
      %v5074 = vld [vmem:[#allocation4 + $0x210] sm:$0xff]
      %v5075 = vld [vmem:[#allocation4 + $0x218] sm:$0xff]
      %v5076 = vld [vmem:[#allocation4 + $0x220] sm:$0xff]
      %v5077 = vld [vmem:[#allocation4 + $0x228] sm:$0xff]
      %v5078 = vld [vmem:[#allocation4 + $0x230] sm:$0xff]
      %v5079 = vld [vmem:[#allocation4 + $0x238] sm:$0xff]
      %v5080 = vld [vmem:[#allocation4 + $0x240] sm:$0xff]
      %v5081 = vld [vmem:[#allocation4 + $0x248] sm:$0xff]
      %v5082 = vld [vmem:[#allocation4 + $0x250] sm:$0xff]
      %v5083 = vld [vmem:[#allocation4 + $0x258] sm:$0xff]
      %v5084 = vld [vmem:[#allocation4 + $0x260] sm:$0xff]
      %v5085 = vld [vmem:[#allocation4 + $0x268] sm:$0xff]
      %v5086 = vld [vmem:[#allocation4 + $0x270] sm:$0xff]
      %v5087 = vld [vmem:[#allocation4 + $0x278] sm:$0xff]
      %v5088 = vld [vmem:[#allocation4 + $0x280] sm:$0xff]
      %v5089 = vld [vmem:[#allocation4 + $0x288] sm:$0xff]
      %v5090 = vld [vmem:[#allocation4 + $0x290] sm:$0xff]
      %v5091 = vld [vmem:[#allocation4 + $0x298] sm:$0xff]
      %v5092 = vld [vmem:[#allocation4 + $0x2a0] sm:$0xff]
      %v5093 = vld [vmem:[#allocation4 + $0x2a8] sm:$0xff]
      %v5094 = vld [vmem:[#allocation4 + $0x2b0] sm:$0xff]
      %v5095 = vld [vmem:[#allocation4 + $0x2b8] sm:$0xff]
      %v5096 = vld [vmem:[#allocation4 + $0x2c0] sm:$0xff]
      %v5097 = vld [vmem:[#allocation4 + $0x2c8] sm:$0xff]
      %v5098 = vld [vmem:[#allocation4 + $0x2d0] sm:$0xff]
      %v5099 = vld [vmem:[#allocation4 + $0x2d8] sm:$0xff]
      %v5100 = vld [vmem:[#allocation4 + $0x2e0] sm:$0xff]
      %v5101 = vld [vmem:[#allocation4 + $0x2e8] sm:$0xff]
      %v5102 = vld [vmem:[#allocation4 + $0x2f0] sm:$0xff]
      %v5103 = vld [vmem:[#allocation4 + $0x2f8] sm:$0xff]
      %v5104 = vld [vmem:[#allocation4 + $0x300] sm:$0xff]
      %v5105 = vld [vmem:[#allocation4 + $0x308] sm:$0xff]
      %v5106 = vld [vmem:[#allocation4 + $0x310] sm:$0xff]
      %v5107 = vld [vmem:[#allocation4 + $0x318] sm:$0xff]
      %v5108 = vld [vmem:[#allocation4 + $0x320] sm:$0xff]
      %v5109 = vld [vmem:[#allocation4 + $0x328] sm:$0xff]
      %v5110 = vld [vmem:[#allocation4 + $0x330] sm:$0xff]
      %v5111 = vld [vmem:[#allocation4 + $0x338] sm:$0xff]
      %v5112 = vld [vmem:[#allocation4 + $0x340] sm:$0xff]
      %v5113 = vld [vmem:[#allocation4 + $0x348] sm:$0xff]
      %v5114 = vld [vmem:[#allocation4 + $0x350] sm:$0xff]
      %v5115 = vld [vmem:[#allocation4 + $0x358] sm:$0xff]
      %v5116 = vld [vmem:[#allocation4 + $0x360] sm:$0xff]
      %v5117 = vld [vmem:[#allocation4 + $0x368] sm:$0xff]
      %v5118 = vld [vmem:[#allocation4 + $0x370] sm:$0xff]
      %v5119 = vld [vmem:[#allocation4 + $0x378] sm:$0xff]
      %v5120 = vld [vmem:[#allocation4 + $0x380] sm:$0xff]
      %v5121 = vld [vmem:[#allocation4 + $0x388] sm:$0xff]
      %v5122 = vld [vmem:[#allocation4 + $0x390] sm:$0xff]
      %v5123 = vld [vmem:[#allocation4 + $0x398] sm:$0xff]
      %v5124 = vld [vmem:[#allocation4 + $0x3a0] sm:$0xff]
      %v5125 = vld [vmem:[#allocation4 + $0x3a8] sm:$0xff]
      %v5126 = vld [vmem:[#allocation4 + $0x3b0] sm:$0xff]
      %v5127 = vld [vmem:[#allocation4 + $0x3b8] sm:$0xff]
      %v5128 = vld [vmem:[#allocation4 + $0x3c0] sm:$0xff]
      %v5129 = vld [vmem:[#allocation4 + $0x3c8] sm:$0xff]
      %v5130 = vld [vmem:[#allocation4 + $0x3d0] sm:$0xff]
      %v5131 = vld [vmem:[#allocation4 + $0x3d8] sm:$0xff]
      %v5132 = vld [vmem:[#allocation4 + $0x3e0] sm:$0xff]
      %v5133 = vld [vmem:[#allocation4 + $0x3e8] sm:$0xff]
      %v5134 = vld [vmem:[#allocation4 + $0x3f0] sm:$0xff]
      %v5135 = vld [vmem:[#allocation4 + $0x3f8] sm:$0xff]
      %v5136 = vld [vmem:[#allocation4 + $0x400] sm:$0xff]
      %v5137 = vld [vmem:[#allocation4 + $0x408] sm:$0xff]
      %v5138 = vld [vmem:[#allocation4 + $0x410] sm:$0xff]
      %v5139 = vld [vmem:[#allocation4 + $0x418] sm:$0xff]
      %v5140 = vld [vmem:[#allocation4 + $0x420] sm:$0xff]
      %v5141 = vld [vmem:[#allocation4 + $0x428] sm:$0xff]
      %v5142 = vld [vmem:[#allocation4 + $0x430] sm:$0xff]
      %v5143 = vld [vmem:[#allocation4 + $0x438] sm:$0xff]
      %v5144 = vld [vmem:[#allocation4 + $0x440] sm:$0xff]
      %v5145 = vld [vmem:[#allocation4 + $0x448] sm:$0xff]
      %v5146 = vld [vmem:[#allocation4 + $0x450] sm:$0xff]
      %v5147 = vld [vmem:[#allocation4 + $0x458] sm:$0xff]
      %v5148 = vld [vmem:[#allocation4 + $0x460] sm:$0xff]
      %v5149 = vld [vmem:[#allocation4 + $0x468] sm:$0xff]
      %v5150 = vld [vmem:[#allocation4 + $0x470] sm:$0xff]
      %v5151 = vld [vmem:[#allocation4 + $0x478] sm:$0xff]
      %v5152 = vld [vmem:[#allocation4 + $0x480] sm:$0xff]
      %v5153 = vld [vmem:[#allocation4 + $0x488] sm:$0xff]
      %v5154 = vld [vmem:[#allocation4 + $0x490] sm:$0xff]
      %v5155 = vld [vmem:[#allocation4 + $0x498] sm:$0xff]
      %v5156 = vld [vmem:[#allocation4 + $0x4a0] sm:$0xff]
      %v5157 = vld [vmem:[#allocation4 + $0x4a8] sm:$0xff]
      %v5158 = vld [vmem:[#allocation4 + $0x4b0] sm:$0xff]
      %v5159 = vld [vmem:[#allocation4 + $0x4b8] sm:$0xff]
      %v5160 = vld [vmem:[#allocation4 + $0x4c0] sm:$0xff]
      %v5161 = vld [vmem:[#allocation4 + $0x4c8] sm:$0xff]
      %v5162 = vld [vmem:[#allocation4 + $0x4d0] sm:$0xff]
      %v5163 = vld [vmem:[#allocation4 + $0x4d8] sm:$0xff]
      %v5164 = vld [vmem:[#allocation4 + $0x4e0] sm:$0xff]
      %v5165 = vld [vmem:[#allocation4 + $0x4e8] sm:$0xff]
      %v5166 = vld [vmem:[#allocation4 + $0x4f0] sm:$0xff]
      %v5167 = vld [vmem:[#allocation4 + $0x4f8] sm:$0xff]
      %v5168 = vld [vmem:[#allocation4 + $0x500] sm:$0xff]
      %v5169 = vld [vmem:[#allocation4 + $0x508] sm:$0xff]
      %5171 = vset.pattern.permute.xlu0 0
      %5172 = vperm.xlu0 %5171, %v3435
      %v5173 = vpop.permute.xlu0 %5172
      %v5177 = vunpack.c.l.s4 1966171168
      %v5178 = vunpack.c.0.s8 %v5177
      %v5179 = vlaneseq
      %v5180 = vshrl.u32 %v5179, 7
      %v5181 = vsub.s32 %v5178, %v5180
      %v5182 = vrot.slane %v3434, %v5181
      %v5183 = vcombine.high %v5182, %v5182
      %v5185 = vunpack.c.l.s4 1966171168
      %v5186 = vunpack.c.0.s8 %v5185
      %v5187 = vlaneseq
      %v5188 = vshrl.u32 %v5187, 7
      %v5189 = vsub.s32 %v5186, %v5188
      %v5190 = vrot.slane %v5182, %v5189
      %v5192 = vunpack.c.l.s4 1966171168
      %v5193 = vunpack.c.0.s8 %v5192
      %v5194 = vlaneseq
      %v5195 = vshrl.u32 %v5194, 7
      %v5196 = vsub.s32 %v5193, %v5195
      %v5197 = vrot.slane %v5183, %v5196
      %v5198 = vcombine.high %v5190, %v5190
      %v5199 = vcombine.high %v5197, %v5197
      %v5365 = vunpack.c.l.b16 %v5008
      %v5366 = vunpack.c.h.b16 %v5008
      %v5367 = vunpack.c.l.b16 %v5009
      %v5368 = vunpack.c.h.b16 %v5009
      %v5369 = vunpack.c.l.b16 %v5010
      %v5370 = vunpack.c.h.b16 %v5010
      %v5371 = vunpack.c.l.b16 %v5011
      %v5372 = vunpack.c.h.b16 %v5011
      %v5373 = vunpack.c.l.b16 %v5012
      %v5374 = vunpack.c.h.b16 %v5012
      %v5375 = vunpack.c.l.b16 %v5013
      %v5376 = vunpack.c.h.b16 %v5013
      %v5377 = vunpack.c.l.b16 %v5014
      %v5378 = vunpack.c.h.b16 %v5014
      %v5379 = vunpack.c.l.b16 %v5015
      %v5380 = vunpack.c.h.b16 %v5015
      %v5381 = vunpack.c.l.b16 %v5016
      %v5382 = vunpack.c.h.b16 %v5016
      %v5383 = vunpack.c.l.b16 %v5017
      %v5384 = vunpack.c.h.b16 %v5017
      %v5385 = vunpack.c.l.b16 %v5018
      %v5386 = vunpack.c.h.b16 %v5018
      %v5387 = vunpack.c.l.b16 %v5019
      %v5388 = vunpack.c.h.b16 %v5019
      %v5389 = vunpack.c.l.b16 %v5020
      %v5390 = vunpack.c.h.b16 %v5020
      %v5391 = vunpack.c.l.b16 %v5021
      %v5392 = vunpack.c.h.b16 %v5021
      %v5393 = vunpack.c.l.b16 %v5022
      %v5394 = vunpack.c.h.b16 %v5022
      %v5395 = vunpack.c.l.b16 %v5023
      %v5396 = vunpack.c.h.b16 %v5023
      %v5397 = vunpack.c.l.b16 %v5024
      %v5398 = vunpack.c.h.b16 %v5024
      %v5399 = vunpack.c.l.b16 %v5025
      %v5400 = vunpack.c.h.b16 %v5025
      %v5401 = vunpack.c.l.b16 %v5026
      %v5402 = vunpack.c.h.b16 %v5026
      %v5403 = vunpack.c.l.b16 %v5027
      %v5404 = vunpack.c.h.b16 %v5027
      %v5405 = vunpack.c.l.b16 %v5028
      %v5406 = vunpack.c.h.b16 %v5028
      %v5407 = vunpack.c.l.b16 %v5029
      %v5408 = vunpack.c.h.b16 %v5029
      %v5409 = vunpack.c.l.b16 %v5030
      %v5410 = vunpack.c.h.b16 %v5030
      %v5411 = vunpack.c.l.b16 %v5031
      %v5412 = vunpack.c.h.b16 %v5031
      %v5413 = vunpack.c.l.b16 %v5032
      %v5414 = vunpack.c.h.b16 %v5032
      %v5415 = vunpack.c.l.b16 %v5033
      %v5416 = vunpack.c.h.b16 %v5033
      %v5417 = vunpack.c.l.b16 %v5034
      %v5418 = vunpack.c.h.b16 %v5034
      %v5419 = vunpack.c.l.b16 %v5035
      %v5420 = vunpack.c.h.b16 %v5035
      %v5421 = vunpack.c.l.b16 %v5036
      %v5422 = vunpack.c.h.b16 %v5036
      %v5423 = vunpack.c.l.b16 %v5037
      %v5424 = vunpack.c.h.b16 %v5037
      %v5425 = vunpack.c.l.b16 %v5038
      %v5426 = vunpack.c.h.b16 %v5038
      %v5427 = vunpack.c.l.b16 %v5039
      %v5428 = vunpack.c.h.b16 %v5039
      %v5429 = vunpack.c.l.b16 %v5040
      %v5430 = vunpack.c.h.b16 %v5040
      %v5431 = vunpack.c.l.b16 %v5041
      %v5432 = vunpack.c.h.b16 %v5041
      %v5433 = vunpack.c.l.b16 %v5042
      %v5434 = vunpack.c.h.b16 %v5042
      %v5435 = vunpack.c.l.b16 %v5043
      %v5436 = vunpack.c.h.b16 %v5043
      %v5437 = vunpack.c.l.b16 %v5044
      %v5438 = vunpack.c.h.b16 %v5044
      %v5439 = vunpack.c.l.b16 %v5045
      %v5440 = vunpack.c.h.b16 %v5045
      %v5441 = vunpack.c.l.b16 %v5046
      %v5442 = vunpack.c.h.b16 %v5046
      %v5443 = vunpack.c.l.b16 %v5047
      %v5444 = vunpack.c.h.b16 %v5047
      %v5445 = vunpack.c.l.b16 %v5048
      %v5446 = vunpack.c.h.b16 %v5048
      %v5447 = vunpack.c.l.b16 %v5049
      %v5448 = vunpack.c.h.b16 %v5049
      %v5449 = vunpack.c.l.b16 %v5050
      %v5450 = vunpack.c.h.b16 %v5050
      %v5451 = vunpack.c.l.b16 %v5051
      %v5452 = vunpack.c.h.b16 %v5051
      %v5453 = vunpack.c.l.b16 %v5052
      %v5454 = vunpack.c.h.b16 %v5052
      %v5455 = vunpack.c.l.b16 %v5053
      %v5456 = vunpack.c.h.b16 %v5053
      %v5457 = vunpack.c.l.b16 %v5054
      %v5458 = vunpack.c.h.b16 %v5054
      %v5459 = vunpack.c.l.b16 %v5055
      %v5460 = vunpack.c.h.b16 %v5055
      %v5461 = vunpack.c.l.b16 %v5056
      %v5462 = vunpack.c.h.b16 %v5056
      %v5463 = vunpack.c.l.b16 %v5057
      %v5464 = vunpack.c.h.b16 %v5057
      %v5465 = vunpack.c.l.b16 %v5058
      %v5466 = vunpack.c.h.b16 %v5058
      %v5467 = vunpack.c.l.b16 %v5059
      %v5468 = vunpack.c.h.b16 %v5059
      %v5469 = vunpack.c.l.b16 %v5060
      %v5470 = vunpack.c.h.b16 %v5060
      %v5471 = vunpack.c.l.b16 %v5061
      %v5472 = vunpack.c.h.b16 %v5061
      %v5473 = vunpack.c.l.b16 %v5062
      %v5474 = vunpack.c.h.b16 %v5062
      %v5475 = vunpack.c.l.b16 %v5063
      %v5476 = vunpack.c.h.b16 %v5063
      %v5477 = vunpack.c.l.b16 %v5064
      %v5478 = vunpack.c.h.b16 %v5064
      %v5479 = vunpack.c.l.b16 %v5065
      %v5480 = vunpack.c.h.b16 %v5065
      %v5481 = vunpack.c.l.b16 %v5066
      %v5482 = vunpack.c.h.b16 %v5066
      %v5483 = vunpack.c.l.b16 %v5067
      %v5484 = vunpack.c.h.b16 %v5067
      %v5485 = vunpack.c.l.b16 %v5068
      %v5486 = vunpack.c.h.b16 %v5068
      %v5487 = vunpack.c.l.b16 %v5069
      %v5488 = vunpack.c.h.b16 %v5069
      %v5489 = vunpack.c.l.b16 %v5070
      %v5490 = vunpack.c.h.b16 %v5070
      %v5491 = vunpack.c.l.b16 %v5071
      %v5492 = vunpack.c.h.b16 %v5071
      %v5493 = vunpack.c.l.b16 %v5072
      %v5494 = vunpack.c.h.b16 %v5072
      %v5495 = vunpack.c.l.b16 %v5073
      %v5496 = vunpack.c.h.b16 %v5073
      %v5497 = vunpack.c.l.b16 %v5074
      %v5498 = vunpack.c.h.b16 %v5074
      %v5499 = vunpack.c.l.b16 %v5075
      %v5500 = vunpack.c.h.b16 %v5075
      %v5501 = vunpack.c.l.b16 %v5076
      %v5502 = vunpack.c.h.b16 %v5076
      %v5503 = vunpack.c.l.b16 %v5077
      %v5504 = vunpack.c.h.b16 %v5077
      %v5505 = vunpack.c.l.b16 %v5078
      %v5506 = vunpack.c.h.b16 %v5078
      %v5507 = vunpack.c.l.b16 %v5079
      %v5508 = vunpack.c.h.b16 %v5079
      %v5509 = vunpack.c.l.b16 %v5080
      %v5510 = vunpack.c.h.b16 %v5080
      %v5511 = vunpack.c.l.b16 %v5081
      %v5512 = vunpack.c.h.b16 %v5081
      %v5513 = vunpack.c.l.b16 %v5082
      %v5514 = vunpack.c.h.b16 %v5082
      %v5515 = vunpack.c.l.b16 %v5083
      %v5516 = vunpack.c.h.b16 %v5083
      %v5517 = vunpack.c.l.b16 %v5084
      %v5518 = vunpack.c.h.b16 %v5084
      %v5519 = vunpack.c.l.b16 %v5085
      %v5520 = vunpack.c.h.b16 %v5085
      %v5521 = vunpack.c.l.b16 %v5086
      %v5522 = vunpack.c.h.b16 %v5086
      %v5523 = vunpack.c.l.b16 %v5087
      %v5524 = vunpack.c.h.b16 %v5087
      %v5525 = vunpack.c.l.b16 %v5088
      %v5526 = vunpack.c.h.b16 %v5088
      %v5527 = vunpack.c.l.b16 %v5089
      %v5528 = vunpack.c.h.b16 %v5089
      %v5529 = vunpack.c.l.b16 %v5090
      %v5530 = vunpack.c.h.b16 %v5090
      %v5531 = vunpack.c.l.b16 %v5091
      %v5532 = vunpack.c.h.b16 %v5091
      %v5533 = vunpack.c.l.b16 %v5092
      %v5534 = vunpack.c.h.b16 %v5092
      %v5535 = vunpack.c.l.b16 %v5093
      %v5536 = vunpack.c.h.b16 %v5093
      %v5537 = vunpack.c.l.b16 %v5094
      %v5538 = vunpack.c.h.b16 %v5094
      %v5539 = vunpack.c.l.b16 %v5095
      %v5540 = vunpack.c.h.b16 %v5095
      %v5541 = vunpack.c.l.b16 %v5096
      %v5542 = vunpack.c.h.b16 %v5096
      %v5543 = vunpack.c.l.b16 %v5097
      %v5544 = vunpack.c.h.b16 %v5097
      %v5545 = vunpack.c.l.b16 %v5098
      %v5546 = vunpack.c.h.b16 %v5098
      %v5547 = vunpack.c.l.b16 %v5099
      %v5548 = vunpack.c.h.b16 %v5099
      %v5549 = vunpack.c.l.b16 %v5100
      %v5550 = vunpack.c.h.b16 %v5100
      %v5551 = vunpack.c.l.b16 %v5101
      %v5552 = vunpack.c.h.b16 %v5101
      %v5553 = vunpack.c.l.b16 %v5102
      %v5554 = vunpack.c.h.b16 %v5102
      %v5555 = vunpack.c.l.b16 %v5103
      %v5556 = vunpack.c.h.b16 %v5103
      %v5557 = vunpack.c.l.b16 %v5104
      %v5558 = vunpack.c.h.b16 %v5104
      %v5559 = vunpack.c.l.b16 %v5105
      %v5560 = vunpack.c.h.b16 %v5105
      %v5561 = vunpack.c.l.b16 %v5106
      %v5562 = vunpack.c.h.b16 %v5106
      %v5563 = vunpack.c.l.b16 %v5107
      %v5564 = vunpack.c.h.b16 %v5107
      %v5565 = vunpack.c.l.b16 %v5108
      %v5566 = vunpack.c.h.b16 %v5108
      %v5567 = vunpack.c.l.b16 %v5109
      %v5568 = vunpack.c.h.b16 %v5109
      %v5569 = vunpack.c.l.b16 %v5110
      %v5570 = vunpack.c.h.b16 %v5110
      %v5571 = vunpack.c.l.b16 %v5111
      %v5572 = vunpack.c.h.b16 %v5111
      %v5573 = vunpack.c.l.b16 %v5112
      %v5574 = vunpack.c.h.b16 %v5112
      %v5575 = vunpack.c.l.b16 %v5113
      %v5576 = vunpack.c.h.b16 %v5113
      %v5577 = vunpack.c.l.b16 %v5114
      %v5578 = vunpack.c.h.b16 %v5114
      %v5579 = vunpack.c.l.b16 %v5115
      %v5580 = vunpack.c.h.b16 %v5115
      %v5581 = vunpack.c.l.b16 %v5116
      %v5582 = vunpack.c.h.b16 %v5116
      %v5583 = vunpack.c.l.b16 %v5117
      %v5584 = vunpack.c.h.b16 %v5117
      %v5585 = vunpack.c.l.b16 %v5118
      %v5586 = vunpack.c.h.b16 %v5118
      %v5587 = vunpack.c.l.b16 %v5119
      %v5588 = vunpack.c.h.b16 %v5119
      %v5589 = vunpack.c.l.b16 %v5120
      %v5590 = vunpack.c.h.b16 %v5120
      %v5591 = vunpack.c.l.b16 %v5121
      %v5592 = vunpack.c.h.b16 %v5121
      %v5593 = vunpack.c.l.b16 %v5122
      %v5594 = vunpack.c.h.b16 %v5122
      %v5595 = vunpack.c.l.b16 %v5123
      %v5596 = vunpack.c.h.b16 %v5123
      %v5597 = vunpack.c.l.b16 %v5124
      %v5598 = vunpack.c.h.b16 %v5124
      %v5599 = vunpack.c.l.b16 %v5125
      %v5600 = vunpack.c.h.b16 %v5125
      %v5601 = vunpack.c.l.b16 %v5126
      %v5602 = vunpack.c.h.b16 %v5126
      %v5603 = vunpack.c.l.b16 %v5127
      %v5604 = vunpack.c.h.b16 %v5127
      %v5605 = vunpack.c.l.b16 %v5128
      %v5606 = vunpack.c.h.b16 %v5128
      %v5607 = vunpack.c.l.b16 %v5129
      %v5608 = vunpack.c.h.b16 %v5129
      %v5609 = vunpack.c.l.b16 %v5130
      %v5610 = vunpack.c.h.b16 %v5130
      %v5611 = vunpack.c.l.b16 %v5131
      %v5612 = vunpack.c.h.b16 %v5131
      %v5613 = vunpack.c.l.b16 %v5132
      %v5614 = vunpack.c.h.b16 %v5132
      %v5615 = vunpack.c.l.b16 %v5133
      %v5616 = vunpack.c.h.b16 %v5133
      %v5617 = vunpack.c.l.b16 %v5134
      %v5618 = vunpack.c.h.b16 %v5134
      %v5619 = vunpack.c.l.b16 %v5135
      %v5620 = vunpack.c.h.b16 %v5135
      %v5621 = vunpack.c.l.b16 %v5136
      %v5622 = vunpack.c.h.b16 %v5136
      %v5623 = vunpack.c.l.b16 %v5137
      %v5624 = vunpack.c.h.b16 %v5137
      %v5625 = vunpack.c.l.b16 %v5138
      %v5626 = vunpack.c.h.b16 %v5138
      %v5627 = vunpack.c.l.b16 %v5139
      %v5628 = vunpack.c.h.b16 %v5139
      %v5629 = vunpack.c.l.b16 %v5140
      %v5630 = vunpack.c.h.b16 %v5140
      %v5631 = vunpack.c.l.b16 %v5141
      %v5632 = vunpack.c.h.b16 %v5141
      %v5633 = vunpack.c.l.b16 %v5142
      %v5634 = vunpack.c.h.b16 %v5142
      %v5635 = vunpack.c.l.b16 %v5143
      %v5636 = vunpack.c.h.b16 %v5143
      %v5637 = vunpack.c.l.b16 %v5144
      %v5638 = vunpack.c.h.b16 %v5144
      %v5639 = vunpack.c.l.b16 %v5145
      %v5640 = vunpack.c.h.b16 %v5145
      %v5641 = vunpack.c.l.b16 %v5146
      %v5642 = vunpack.c.h.b16 %v5146
      %v5643 = vunpack.c.l.b16 %v5147
      %v5644 = vunpack.c.h.b16 %v5147
      %v5645 = vunpack.c.l.b16 %v5148
      %v5646 = vunpack.c.h.b16 %v5148
      %v5647 = vunpack.c.l.b16 %v5149
      %v5648 = vunpack.c.h.b16 %v5149
      %v5649 = vunpack.c.l.b16 %v5150
      %v5650 = vunpack.c.h.b16 %v5150
      %v5651 = vunpack.c.l.b16 %v5151
      %v5652 = vunpack.c.h.b16 %v5151
      %v5653 = vunpack.c.l.b16 %v5152
      %v5654 = vunpack.c.h.b16 %v5152
      %v5655 = vunpack.c.l.b16 %v5153
      %v5656 = vunpack.c.h.b16 %v5153
      %v5657 = vunpack.c.l.b16 %v5154
      %v5658 = vunpack.c.h.b16 %v5154
      %v5659 = vunpack.c.l.b16 %v5155
      %v5660 = vunpack.c.h.b16 %v5155
      %v5661 = vunpack.c.l.b16 %v5156
      %v5662 = vunpack.c.h.b16 %v5156
      %v5663 = vunpack.c.l.b16 %v5157
      %v5664 = vunpack.c.h.b16 %v5157
      %v5665 = vunpack.c.l.b16 %v5158
      %v5666 = vunpack.c.h.b16 %v5158
      %v5667 = vunpack.c.l.b16 %v5159
      %v5668 = vunpack.c.h.b16 %v5159
      %v5669 = vunpack.c.l.b16 %v5160
      %v5670 = vunpack.c.h.b16 %v5160
      %v5671 = vunpack.c.l.b16 %v5161
      %v5672 = vunpack.c.h.b16 %v5161
      %v5673 = vunpack.c.l.b16 %v5162
      %v5674 = vunpack.c.h.b16 %v5162
      %v5675 = vunpack.c.l.b16 %v5163
      %v5676 = vunpack.c.h.b16 %v5163
      %v5677 = vunpack.c.l.b16 %v5164
      %v5678 = vunpack.c.h.b16 %v5164
      %v5679 = vunpack.c.l.b16 %v5165
      %v5680 = vunpack.c.h.b16 %v5165
      %v5681 = vunpack.c.l.b16 %v5166
      %v5682 = vunpack.c.h.b16 %v5166
      %v5683 = vunpack.c.l.b16 %v5167
      %v5684 = vunpack.c.h.b16 %v5167
      %v5685 = vunpack.c.l.b16 %v5168
      %v5686 = vunpack.c.h.b16 %v5168
      %v5687 = vunpack.c.l.b16 %v5169
      %v5688 = vunpack.c.h.b16 %v5169
      %v5689 = vpack.c.b16 %v5371, %v5365
      %v5690 = vpack.c.b16 %v5372, %v5366
      %v5691 = vpack.c.b16 %v5373, %v5367
      %v5692 = vpack.c.b16 %v5374, %v5368
      %v5693 = vpack.c.b16 %v5375, %v5369
      %v5694 = vpack.c.b16 %v5376, %v5370
      %v5695 = vpack.c.b16 %v5383, %v5377
      %v5696 = vpack.c.b16 %v5384, %v5378
      %v5697 = vpack.c.b16 %v5385, %v5379
      %v5698 = vpack.c.b16 %v5386, %v5380
      %v5699 = vpack.c.b16 %v5387, %v5381
      %v5700 = vpack.c.b16 %v5388, %v5382
      %v5701 = vpack.c.b16 %v5395, %v5389
      %v5702 = vpack.c.b16 %v5396, %v5390
      %v5703 = vpack.c.b16 %v5397, %v5391
      %v5704 = vpack.c.b16 %v5398, %v5392
      %v5705 = vpack.c.b16 %v5399, %v5393
      %v5706 = vpack.c.b16 %v5400, %v5394
      %v5707 = vpack.c.b16 %v5407, %v5401
      %v5708 = vpack.c.b16 %v5408, %v5402
      %v5709 = vpack.c.b16 %v5409, %v5403
      %v5710 = vpack.c.b16 %v5410, %v5404
      %v5711 = vpack.c.b16 %v5411, %v5405
      %v5712 = vpack.c.b16 %v5412, %v5406
      %v5713 = vpack.c.b16 %v5419, %v5413
      %v5714 = vpack.c.b16 %v5420, %v5414
      %v5715 = vpack.c.b16 %v5421, %v5415
      %v5716 = vpack.c.b16 %v5422, %v5416
      %v5717 = vpack.c.b16 %v5423, %v5417
      %v5718 = vpack.c.b16 %v5424, %v5418
      %v5719 = vpack.c.b16 %v5431, %v5425
      %v5720 = vpack.c.b16 %v5432, %v5426
      %v5721 = vpack.c.b16 %v5433, %v5427
      %v5722 = vpack.c.b16 %v5434, %v5428
      %v5723 = vpack.c.b16 %v5435, %v5429
      %v5724 = vpack.c.b16 %v5436, %v5430
      %v5725 = vpack.c.b16 %v5443, %v5437
      %v5726 = vpack.c.b16 %v5444, %v5438
      %v5727 = vpack.c.b16 %v5445, %v5439
      %v5728 = vpack.c.b16 %v5446, %v5440
      %v5729 = vpack.c.b16 %v5447, %v5441
      %v5730 = vpack.c.b16 %v5448, %v5442
      %v5731 = vpack.c.b16 %v5455, %v5449
      %v5732 = vpack.c.b16 %v5456, %v5450
      %v5733 = vpack.c.b16 %v5457, %v5451
      %v5734 = vpack.c.b16 %v5458, %v5452
      %v5735 = vpack.c.b16 %v5459, %v5453
      %v5736 = vpack.c.b16 %v5460, %v5454
      %v5737 = vpack.c.b16 %v5467, %v5461
      %v5738 = vpack.c.b16 %v5468, %v5462
      %v5739 = vpack.c.b16 %v5469, %v5463
      %v5740 = vpack.c.b16 %v5470, %v5464
      %v5741 = vpack.c.b16 %v5471, %v5465
      %v5742 = vpack.c.b16 %v5472, %v5466
      %v5743 = vpack.c.b16 %v5479, %v5473
      %v5744 = vpack.c.b16 %v5480, %v5474
      %v5745 = vpack.c.b16 %v5481, %v5475
      %v5746 = vpack.c.b16 %v5482, %v5476
      %v5747 = vpack.c.b16 %v5483, %v5477
      %v5748 = vpack.c.b16 %v5484, %v5478
      %v5749 = vpack.c.b16 %v5491, %v5485
      %v5750 = vpack.c.b16 %v5492, %v5486
      %v5751 = vpack.c.b16 %v5493, %v5487
      %v5752 = vpack.c.b16 %v5494, %v5488
      %v5753 = vpack.c.b16 %v5495, %v5489
      %v5754 = vpack.c.b16 %v5496, %v5490
      %v5755 = vpack.c.b16 %v5503, %v5497
      %v5756 = vpack.c.b16 %v5504, %v5498
      %v5757 = vpack.c.b16 %v5505, %v5499
      %v5758 = vpack.c.b16 %v5506, %v5500
      %v5759 = vpack.c.b16 %v5507, %v5501
      %v5760 = vpack.c.b16 %v5508, %v5502
      %v5761 = vpack.c.b16 %v5515, %v5509
      %v5762 = vpack.c.b16 %v5516, %v5510
      %v5763 = vpack.c.b16 %v5517, %v5511
      %v5764 = vpack.c.b16 %v5518, %v5512
      %v5765 = vpack.c.b16 %v5519, %v5513
      %v5766 = vpack.c.b16 %v5520, %v5514
      %v5767 = vpack.c.b16 %v5527, %v5521
      %v5768 = vpack.c.b16 %v5528, %v5522
      %v5769 = vpack.c.b16 %v5529, %v5523
      %v5770 = vpack.c.b16 %v5530, %v5524
      %v5771 = vpack.c.b16 %v5531, %v5525
      %v5772 = vpack.c.b16 %v5532, %v5526
      %v5773 = vpack.c.b16 %v5539, %v5533
      %v5774 = vpack.c.b16 %v5540, %v5534
      %v5775 = vpack.c.b16 %v5541, %v5535
      %v5776 = vpack.c.b16 %v5542, %v5536
      %v5777 = vpack.c.b16 %v5543, %v5537
      %v5778 = vpack.c.b16 %v5544, %v5538
      %v5779 = vpack.c.b16 %v5551, %v5545
      %v5780 = vpack.c.b16 %v5552, %v5546
      %v5781 = vpack.c.b16 %v5553, %v5547
      %v5782 = vpack.c.b16 %v5554, %v5548
      %v5783 = vpack.c.b16 %v5555, %v5549
      %v5784 = vpack.c.b16 %v5556, %v5550
      %v5785 = vpack.c.b16 %v5563, %v5557
      %v5786 = vpack.c.b16 %v5564, %v5558
      %v5787 = vpack.c.b16 %v5565, %v5559
      %v5788 = vpack.c.b16 %v5566, %v5560
      %v5789 = vpack.c.b16 %v5567, %v5561
      %v5790 = vpack.c.b16 %v5568, %v5562
      %v5791 = vpack.c.b16 %v5575, %v5569
      %v5792 = vpack.c.b16 %v5576, %v5570
      %v5793 = vpack.c.b16 %v5577, %v5571
      %v5794 = vpack.c.b16 %v5578, %v5572
      %v5795 = vpack.c.b16 %v5579, %v5573
      %v5796 = vpack.c.b16 %v5580, %v5574
      %v5797 = vpack.c.b16 %v5587, %v5581
      %v5798 = vpack.c.b16 %v5588, %v5582
      %v5799 = vpack.c.b16 %v5589, %v5583
      %v5800 = vpack.c.b16 %v5590, %v5584
      %v5801 = vpack.c.b16 %v5591, %v5585
      %v5802 = vpack.c.b16 %v5592, %v5586
      %v5803 = vpack.c.b16 %v5599, %v5593
      %v5804 = vpack.c.b16 %v5600, %v5594
      %v5805 = vpack.c.b16 %v5601, %v5595
      %v5806 = vpack.c.b16 %v5602, %v5596
      %v5807 = vpack.c.b16 %v5603, %v5597
      %v5808 = vpack.c.b16 %v5604, %v5598
      %v5809 = vpack.c.b16 %v5611, %v5605
      %v5810 = vpack.c.b16 %v5612, %v5606
      %v5811 = vpack.c.b16 %v5613, %v5607
      %v5812 = vpack.c.b16 %v5614, %v5608
      %v5813 = vpack.c.b16 %v5615, %v5609
      %v5814 = vpack.c.b16 %v5616, %v5610
      %v5815 = vpack.c.b16 %v5623, %v5617
      %v5816 = vpack.c.b16 %v5624, %v5618
      %v5817 = vpack.c.b16 %v5625, %v5619
      %v5818 = vpack.c.b16 %v5626, %v5620
      %v5819 = vpack.c.b16 %v5627, %v5621
      %v5820 = vpack.c.b16 %v5628, %v5622
      %v5821 = vpack.c.b16 %v5635, %v5629
      %v5822 = vpack.c.b16 %v5636, %v5630
      %v5823 = vpack.c.b16 %v5637, %v5631
      %v5824 = vpack.c.b16 %v5638, %v5632
      %v5825 = vpack.c.b16 %v5639, %v5633
      %v5826 = vpack.c.b16 %v5640, %v5634
      %v5827 = vpack.c.b16 %v5647, %v5641
      %v5828 = vpack.c.b16 %v5648, %v5642
      %v5829 = vpack.c.b16 %v5649, %v5643
      %v5830 = vpack.c.b16 %v5650, %v5644
      %v5831 = vpack.c.b16 %v5651, %v5645
      %v5832 = vpack.c.b16 %v5652, %v5646
      %v5833 = vpack.c.b16 %v5659, %v5653
      %v5834 = vpack.c.b16 %v5660, %v5654
      %v5835 = vpack.c.b16 %v5661, %v5655
      %v5836 = vpack.c.b16 %v5662, %v5656
      %v5837 = vpack.c.b16 %v5663, %v5657
      %v5838 = vpack.c.b16 %v5664, %v5658
      %v5839 = vpack.c.b16 %v5671, %v5665
      %v5840 = vpack.c.b16 %v5672, %v5666
      %v5841 = vpack.c.b16 %v5673, %v5667
      %v5842 = vpack.c.b16 %v5674, %v5668
      %v5843 = vpack.c.b16 %v5675, %v5669
      %v5844 = vpack.c.b16 %v5676, %v5670
      %v5845 = vpack.c.b16 %v5683, %v5677
      %v5846 = vpack.c.b16 %v5684, %v5678
      %v5847 = vpack.c.b16 %v5685, %v5679
      %v5848 = vpack.c.b16 %v5686, %v5680
      %v5849 = vpack.c.b16 %v5687, %v5681
      %v5850 = vpack.c.b16 %v5688, %v5682
      %v6014 = vsel %vm2810, %v5199, 0
      %6016 = vmatprep.subr.bf16.mxu0 %v5732
      %6017 = vmatpush1.bf16.msra.mxu0 %v5731
      %6018 = vmatprep.subr.bf16.mxu0 %v5726
      %6019 = vmatpush1.bf16.msra.mxu0 %v5725
      %6020 = vmatprep.subr.bf16.mxu0 %v5720
      %6021 = vmatpush1.bf16.msra.mxu0 %v5719
      %6022 = vmatprep.subr.bf16.mxu0 %v5714
      %6023 = vmatpush1.bf16.msra.mxu0 %v5713
      %6024 = vmatprep.subr.bf16.mxu0 %v5708
      %6025 = vmatpush1.bf16.msra.mxu0 %v5707
      %6026 = vmatprep.subr.bf16.mxu0 %v5702
      %6027 = vmatpush1.bf16.msra.mxu0 %v5701
      %6028 = vmatprep.subr.bf16.mxu0 %v5696
      %6029 = vmatpush1.bf16.msra.mxu0 %v5695
      %6030 = vmatprep.subr.bf16.mxu0 %v5690
      %6031 = vmatpush1.bf16.msra.mxu0 %v5689
      %6032 = vmatprep.subr.bf16.mxu0 %v5780
      %6033 = vmatpush2.bf16.msra.mxu0 %v5779
      %6034 = vmatprep.subr.bf16.mxu0 %v5774
      %6035 = vmatpush2.bf16.msra.mxu0 %v5773
      %6036 = vmatprep.subr.bf16.mxu0 %v5768
      %6037 = vmatpush2.bf16.msra.mxu0 %v5767
      %6038 = vmatprep.subr.bf16.mxu0 %v5762
      %6039 = vmatpush2.bf16.msra.mxu0 %v5761
      %6040 = vmatprep.subr.bf16.mxu0 %v5756
      %6041 = vmatpush2.bf16.msra.mxu0 %v5755
      %6042 = vmatprep.subr.bf16.mxu0 %v5750
      %6043 = vmatpush2.bf16.msra.mxu0 %v5749
      %6044 = vmatprep.subr.bf16.mxu0 %v5744
      %6045 = vmatpush2.bf16.msra.mxu0 %v5743
      %6046 = vmatprep.subr.bf16.mxu0 %v5738
      %6047 = vmatpush2.bf16.msra.mxu0 %v5737
      %6048 = vmatprep.mubr.bf16.mxu0 %v5197
      %6049 = vmatmul.mubr.bf16.gmra.mxu0 %v5190
      %v6050 = vpop.f32.mrf.mxu0
      %v6051 = vadd.f32 %v5173, %v6050
      %v6052 = vpop.f32.mrf.mxu0
      %v6053 = vadd.f32 %v5173, %v6052
      %v6054 = vpop.f32.mrf.mxu0
      %v6055 = vpop.f32.mrf.mxu0
      %6056 = vdwg.mxu0
      %6057 = vmatprep.subr.bf16.mxu0 %v5828
      %6058 = vmatpush1.bf16.msra.mxu0 %v5827
      %6059 = vmatprep.subr.bf16.mxu0 %v5822
      %6060 = vmatpush1.bf16.msra.mxu0 %v5821
      %6061 = vmatprep.subr.bf16.mxu0 %v5816
      %6062 = vmatpush1.bf16.msra.mxu0 %v5815
      %6063 = vmatprep.subr.bf16.mxu0 %v5810
      %6064 = vmatpush1.bf16.msra.mxu0 %v5809
      %6065 = vmatprep.subr.bf16.mxu0 %v5804
      %6066 = vmatpush1.bf16.msra.mxu0 %v5803
      %6067 = vmatprep.subr.bf16.mxu0 %v5798
      %6068 = vmatpush1.bf16.msra.mxu0 %v5797
      %6069 = vmatprep.subr.bf16.mxu0 %v5792
      %6070 = vmatpush1.bf16.msra.mxu0 %v5791
      %6071 = vmatprep.subr.bf16.mxu0 %v5786
      %6072 = vmatpush1.bf16.msra.mxu0 %v5785
      %6073 = vmatprep.subr.bf16.mxu0 0
      %6074 = vmatpush2.bf16.msra.mxu0 0
      %6075 = vmatprep.subr.bf16.mxu0 0
      %6076 = vmatpush2.bf16.msra.mxu0 0
      %6077 = vmatprep.subr.bf16.mxu0 0
      %6078 = vmatpush2.bf16.msra.mxu0 0
      %6079 = vmatprep.subr.bf16.mxu0 0
      %6080 = vmatpush2.bf16.msra.mxu0 0
      %6081 = vmatprep.subr.bf16.mxu0 0
      %6082 = vmatpush2.bf16.msra.mxu0 0
      %6083 = vmatprep.subr.bf16.mxu0 %v5846
      %6084 = vmatpush2.bf16.msra.mxu0 %v5845
      %6085 = vmatprep.subr.bf16.mxu0 %v5840
      %6086 = vmatpush2.bf16.msra.mxu0 %v5839
      %6087 = vmatprep.subr.bf16.mxu0 %v5834
      %6088 = vmatpush2.bf16.msra.mxu0 %v5833
      %6089 = vmatprep.mubr.bf16.mxu0 %v6014
      %6090 = vmatmul.mubr.bf16.gmra.mxu0 %v5198
      %v6091 = vpop.f32.mrf.mxu0
      %v6092 = vadd.f32 %v6051, %v6091
      %v6093 = vpop.f32.mrf.mxu0
      %v6094 = vadd.f32 %v6053, %v6093
      %v6095 = vpop.f32.mrf.mxu0
      %v6096 = vpop.f32.mrf.mxu0
      %6097 = vdwg.mxu0
      %6098 = vmatprep.subr.bf16.mxu0 %v5734
      %6099 = vmatpush1.bf16.msra.mxu0 %v5733
      %6100 = vmatprep.subr.bf16.mxu0 %v5728
      %6101 = vmatpush1.bf16.msra.mxu0 %v5727
      %6102 = vmatprep.subr.bf16.mxu0 %v5722
      %6103 = vmatpush1.bf16.msra.mxu0 %v5721
      %6104 = vmatprep.subr.bf16.mxu0 %v5716
      %6105 = vmatpush1.bf16.msra.mxu0 %v5715
      %6106 = vmatprep.subr.bf16.mxu0 %v5710
      %6107 = vmatpush1.bf16.msra.mxu0 %v5709
      %6108 = vmatprep.subr.bf16.mxu0 %v5704
      %6109 = vmatpush1.bf16.msra.mxu0 %v5703
      %6110 = vmatprep.subr.bf16.mxu0 %v5698
      %6111 = vmatpush1.bf16.msra.mxu0 %v5697
      %6112 = vmatprep.subr.bf16.mxu0 %v5692
      %6113 = vmatpush1.bf16.msra.mxu0 %v5691
      %6114 = vmatprep.subr.bf16.mxu0 %v5782
      %6115 = vmatpush2.bf16.msra.mxu0 %v5781
      %6116 = vmatprep.subr.bf16.mxu0 %v5776
      %6117 = vmatpush2.bf16.msra.mxu0 %v5775
      %6118 = vmatprep.subr.bf16.mxu0 %v5770
      %6119 = vmatpush2.bf16.msra.mxu0 %v5769
      %6120 = vmatprep.subr.bf16.mxu0 %v5764
      %6121 = vmatpush2.bf16.msra.mxu0 %v5763
      %6122 = vmatprep.subr.bf16.mxu0 %v5758
      %6123 = vmatpush2.bf16.msra.mxu0 %v5757
      %6124 = vmatprep.subr.bf16.mxu0 %v5752
      %6125 = vmatpush2.bf16.msra.mxu0 %v5751
      %6126 = vmatprep.subr.bf16.mxu0 %v5746
      %6127 = vmatpush2.bf16.msra.mxu0 %v5745
      %6128 = vmatprep.subr.bf16.mxu0 %v5740
      %6129 = vmatpush2.bf16.msra.mxu0 %v5739
      %6130 = vmatprep.mubr.bf16.mxu0 %v5197
      %6131 = vmatmul.mubr.bf16.gmra.mxu0 %v5190
      %v6132 = vpop.f32.mrf.mxu0
      %v6133 = vadd.f32 %v5173, %v6132
      %v6134 = vpop.f32.mrf.mxu0
      %v6135 = vadd.f32 %v5173, %v6134
      %v6136 = vpop.f32.mrf.mxu0
      %v6137 = vpop.f32.mrf.mxu0
      %6138 = vdwg.mxu0
      %6139 = vmatprep.subr.bf16.mxu0 %v5830
      %6140 = vmatpush1.bf16.msra.mxu0 %v5829
      %6141 = vmatprep.subr.bf16.mxu0 %v5824
      %6142 = vmatpush1.bf16.msra.mxu0 %v5823
      %6143 = vmatprep.subr.bf16.mxu0 %v5818
      %6144 = vmatpush1.bf16.msra.mxu0 %v5817
      %6145 = vmatprep.subr.bf16.mxu0 %v5812
      %6146 = vmatpush1.bf16.msra.mxu0 %v5811
      %6147 = vmatprep.subr.bf16.mxu0 %v5806
      %6148 = vmatpush1.bf16.msra.mxu0 %v5805
      %6149 = vmatprep.subr.bf16.mxu0 %v5800
      %6150 = vmatpush1.bf16.msra.mxu0 %v5799
      %6151 = vmatprep.subr.bf16.mxu0 %v5794
      %6152 = vmatpush1.bf16.msra.mxu0 %v5793
      %6153 = vmatprep.subr.bf16.mxu0 %v5788
      %6154 = vmatpush1.bf16.msra.mxu0 %v5787
      %6155 = vmatprep.subr.bf16.mxu0 0
      %6156 = vmatpush2.bf16.msra.mxu0 0
      %6157 = vmatprep.subr.bf16.mxu0 0
      %6158 = vmatpush2.bf16.msra.mxu0 0
      %6159 = vmatprep.subr.bf16.mxu0 0
      %6160 = vmatpush2.bf16.msra.mxu0 0
      %6161 = vmatprep.subr.bf16.mxu0 0
      %6162 = vmatpush2.bf16.msra.mxu0 0
      %6163 = vmatprep.subr.bf16.mxu0 0
      %6164 = vmatpush2.bf16.msra.mxu0 0
      %6165 = vmatprep.subr.bf16.mxu0 %v5848
      %6166 = vmatpush2.bf16.msra.mxu0 %v5847
      %6167 = vmatprep.subr.bf16.mxu0 %v5842
      %6168 = vmatpush2.bf16.msra.mxu0 %v5841
      %6169 = vmatprep.subr.bf16.mxu0 %v5836
      %6170 = vmatpush2.bf16.msra.mxu0 %v5835
      %6171 = vmatprep.mubr.bf16.mxu0 %v6014
      %6172 = vmatmul.mubr.bf16.gmra.mxu0 %v5198
      %v6173 = vpop.f32.mrf.mxu0
      %v6174 = vadd.f32 %v6133, %v6173
      %v6175 = vpop.f32.mrf.mxu0
      %v6176 = vadd.f32 %v6135, %v6175
      %v6177 = vpop.f32.mrf.mxu0
      %v6178 = vpop.f32.mrf.mxu0
      %6179 = vdwg.mxu0
      %6180 = vmatprep.subr.bf16.mxu0 %v5736
      %6181 = vmatpush1.bf16.msra.mxu0 %v5735
      %6182 = vmatprep.subr.bf16.mxu0 %v5730
      %6183 = vmatpush1.bf16.msra.mxu0 %v5729
      %6184 = vmatprep.subr.bf16.mxu0 %v5724
      %6185 = vmatpush1.bf16.msra.mxu0 %v5723
      %6186 = vmatprep.subr.bf16.mxu0 %v5718
      %6187 = vmatpush1.bf16.msra.mxu0 %v5717
      %6188 = vmatprep.subr.bf16.mxu0 %v5712
      %6189 = vmatpush1.bf16.msra.mxu0 %v5711
      %6190 = vmatprep.subr.bf16.mxu0 %v5706
      %6191 = vmatpush1.bf16.msra.mxu0 %v5705
      %6192 = vmatprep.subr.bf16.mxu0 %v5700
      %6193 = vmatpush1.bf16.msra.mxu0 %v5699
      %6194 = vmatprep.subr.bf16.mxu0 %v5694
      %6195 = vmatpush1.bf16.msra.mxu0 %v5693
      %6196 = vmatprep.subr.bf16.mxu0 %v5784
      %6197 = vmatpush2.bf16.msra.mxu0 %v5783
      %6198 = vmatprep.subr.bf16.mxu0 %v5778
      %6199 = vmatpush2.bf16.msra.mxu0 %v5777
      %6200 = vmatprep.subr.bf16.mxu0 %v5772
      %6201 = vmatpush2.bf16.msra.mxu0 %v5771
      %6202 = vmatprep.subr.bf16.mxu0 %v5766
      %6203 = vmatpush2.bf16.msra.mxu0 %v5765
      %6204 = vmatprep.subr.bf16.mxu0 %v5760
      %6205 = vmatpush2.bf16.msra.mxu0 %v5759
      %6206 = vmatprep.subr.bf16.mxu0 %v5754
      %6207 = vmatpush2.bf16.msra.mxu0 %v5753
      %6208 = vmatprep.subr.bf16.mxu0 %v5748
      %6209 = vmatpush2.bf16.msra.mxu0 %v5747
      %6210 = vmatprep.subr.bf16.mxu0 %v5742
      %6211 = vmatpush2.bf16.msra.mxu0 %v5741
      %6212 = vmatprep.mubr.bf16.mxu0 %v5197
      %6213 = vmatmul.mubr.bf16.gmra.mxu0 %v5190
      %v6214 = vpop.f32.mrf.mxu0
      %v6215 = vadd.f32 %v5173, %v6214
      %v6216 = vpop.f32.mrf.mxu0
      %v6217 = vadd.f32 %v5173, %v6216
      %v6218 = vpop.f32.mrf.mxu0
      %v6219 = vpop.f32.mrf.mxu0
      %6220 = vdwg.mxu0
      %6221 = vmatprep.subr.bf16.mxu0 %v5832
      %6222 = vmatpush1.bf16.msra.mxu0 %v5831
      %6223 = vmatprep.subr.bf16.mxu0 %v5826
      %6224 = vmatpush1.bf16.msra.mxu0 %v5825
      %6225 = vmatprep.subr.bf16.mxu0 %v5820
      %6226 = vmatpush1.bf16.msra.mxu0 %v5819
      %6227 = vmatprep.subr.bf16.mxu0 %v5814
      %6228 = vmatpush1.bf16.msra.mxu0 %v5813
      %6229 = vmatprep.subr.bf16.mxu0 %v5808
      %6230 = vmatpush1.bf16.msra.mxu0 %v5807
      %6231 = vmatprep.subr.bf16.mxu0 %v5802
      %6232 = vmatpush1.bf16.msra.mxu0 %v5801
      %6233 = vmatprep.subr.bf16.mxu0 %v5796
      %6234 = vmatpush1.bf16.msra.mxu0 %v5795
      %6235 = vmatprep.subr.bf16.mxu0 %v5790
      %6236 = vmatpush1.bf16.msra.mxu0 %v5789
      %6237 = vmatprep.subr.bf16.mxu0 0
      %6238 = vmatpush2.bf16.msra.mxu0 0
      %6239 = vmatprep.subr.bf16.mxu0 0
      %6240 = vmatpush2.bf16.msra.mxu0 0
      %6241 = vmatprep.subr.bf16.mxu0 0
      %6242 = vmatpush2.bf16.msra.mxu0 0
      %6243 = vmatprep.subr.bf16.mxu0 0
      %6244 = vmatpush2.bf16.msra.mxu0 0
      %6245 = vmatprep.subr.bf16.mxu0 0
      %6246 = vmatpush2.bf16.msra.mxu0 0
      %6247 = vmatprep.subr.bf16.mxu0 %v5850
      %6248 = vmatpush2.bf16.msra.mxu0 %v5849
      %6249 = vmatprep.subr.bf16.mxu0 %v5844
      %6250 = vmatpush2.bf16.msra.mxu0 %v5843
      %6251 = vmatprep.subr.bf16.mxu0 %v5838
      %6252 = vmatpush2.bf16.msra.mxu0 %v5837
      %6253 = vmatprep.mubr.bf16.mxu0 %v6014
      %6254 = vmatmul.mubr.bf16.gmra.mxu0 %v5198
      %v6255 = vpop.f32.mrf.mxu0
      %v6256 = vadd.f32 %v6215, %v6255
      %v6257 = vpop.f32.mrf.mxu0
      %v6258 = vadd.f32 %v6217, %v6257
      %v6259 = vpop.f32.mrf.mxu0
      %v6260 = vpop.f32.mrf.mxu0
      %6261 = vdwg.mxu0
      %v6262 = vld [vmem:[%s1] sm:$0x3f]
      %v6264 = vlaneseq
      %v6265 = vshrl.u32 %v6264, 7
      %v6266 = vsub.s32 0, %v6265
      %v6267 = vrot.slane %v6262, %v6266
      %v6268 = vlaneseq
      %v6269 = vshrl.u32 %v6268, 7
      %v6270 = vsub.s32 1, %v6269
      %v6271 = vrot.slane %v6262, %v6270
      %v6272 = vlaneseq
      %v6273 = vshrl.u32 %v6272, 7
      %v6274 = vsub.s32 2, %v6273
      %v6275 = vrot.slane %v6262, %v6274
      %v6276 = vlaneseq
      %v6277 = vshrl.u32 %v6276, 7
      %v6278 = vsub.s32 3, %v6277
      %v6279 = vrot.slane %v6262, %v6278
      %v6280 = vlaneseq
      %v6281 = vshrl.u32 %v6280, 7
      %v6282 = vsub.s32 4, %v6281
      %v6283 = vrot.slane %v6262, %v6282
      %v6284 = vlaneseq
      %v6285 = vshrl.u32 %v6284, 7
      %v6286 = vsub.s32 5, %v6285
      %v6287 = vrot.slane %v6262, %v6286
      %v6294 = vmul.f32 %v6092, %v6267
      %v6295 = vmul.f32 %v6094, %v6271
      %v6296 = vmul.f32 %v6174, %v6275
      %v6297 = vmul.f32 %v6176, %v6279
      %v6298 = vmul.f32 %v6256, %v6283
      %v6299 = vmul.f32 %v6258, %v6287
      %v6306 = vcombine.low %v6294, %v6295
      %v6307 = vcombine.low %v6296, %v6297
      %v6309 = vunpack.c.l.s4 1983009808
      %v6310 = vunpack.c.0.s8 %v6309
      %v6311 = vlaneseq
      %v6312 = vshrl.u32 %v6311, 7
      %v6313 = vsub.s32 %v6310, %v6312
      %v6314 = vrot.slane %v6306, %v6313
      %v6316 = vunpack.c.l.s4 1983009808
      %v6317 = vunpack.c.0.s8 %v6316
      %v6318 = vlaneseq
      %v6319 = vshrl.u32 %v6318, 7
      %v6320 = vsub.s32 %v6317, %v6319
      %v6321 = vrot.slane %v6307, %v6320
      %v6322 = vcombine.low %v6314, %v6321
      %v6323 = vcombine.low %v6298, %v6299
      %v6325 = vunpack.c.l.s4 1983009808
      %v6326 = vunpack.c.0.s8 %v6325
      %v6327 = vlaneseq
      %v6328 = vshrl.u32 %v6327, 7
      %v6329 = vsub.s32 %v6326, %v6328
      %v6330 = vrot.slane %v6323, %v6329
      %6333 = vst [vmem:[%s413] sm:$0xff] %v6322
      %6334 = vst [vmem:[%s413 + $0x8] sm:$0xf] %v6330
      %p6335 = scmp.lt.s32.totalorder %s23, 1
      %s6336 = scalar_select %p6335, %s23, 1
      %s6337 = smul.addr %s6336, 6
      %s6338 = smul.addr %s6337, 2
      %s6339 = scalar_lea.vmem %s12, %s6338
      // Predicated region
      $region69: #{_lambda_.1} parent=67 // pred_check
        %p6340 = pneg %p298
      $region70: #{_lambda_.1} parent=67 // pred_check_branch
        %6342 = sbr.rel (%p6340) target = $region72
      $region71: #{_lambda_.1} parent=67 // pred_region
        _
      $region72: #{_lambda_.1} parent=67 // pred_fallthru
        _
    $region68: #{_lambda_.1} parent=5 // pred_fallthru
      _
    %p6343 = scmp.le.s32.totalorder 2, %s18
    // Predicated region
    $region73: #{_lambda_.1} parent=5 // pred_check
      %p6344 = pneg %p6343
    $region74: #{_lambda_.1} parent=5 // pred_check_branch
      %6346 = sbr.rel (%p6344) target = $region76
    $region75: #{_lambda_.1} parent=5 // pred_region
      %s6347 = ssub.s32 %s18, 2
      // Predicated region
      $region77: #{_lambda_.1} parent=75 // pred_check
        %p6348 = pneg %p304
      $region78: #{_lambda_.1} parent=75 // pred_check_branch
        %6350 = sbr.rel (%p6348) target = $region80
      $region79: #{_lambda_.1} parent=75 // pred_region
        %p6351 = scmp.lt.s32.totalorder %s24, 1
        %s6352 = scalar_select %p6351, %s24, 1
        %s6353 = smul.addr %s6352, 6
        %s6354 = smul.addr %s6353, 2
        %s6355 = scalar_lea.vmem %s12, %s6354
      $region80: #{_lambda_.1} parent=75 // pred_fallthru
        _
    $region76: #{_lambda_.1} parent=5 // pred_fallthru
      _
  $region6: #{_lambda_.1} parent=0 // loop_footer
    %s22 = sadd.s32 1, %s18
  $region7: #{_lambda_.1} parent=0 // loop_footer_branch
    %17 = sbr.rel target = $region3
  $region8: #{_lambda_.1} parent=0 // loop_exit
    _

</llo_original>
